<compile_context>
chip_gen: v6e
topology: v6e:2x2x1
jax: 0.10.0
libtpu: 0.0.40
codegen_flags: <defaults>
</compile_context>

<pallas_src>
import math

import jax
import jax.numpy as jnp
from jax.experimental import pallas as pl
from jax.experimental.pallas import tpu as pltpu

D_MODEL = 128              # last dim == 128 lanes -> lane-dense loads/stores
N_HEADS = 4
D_HEAD = D_MODEL // N_HEADS
D_FF = 256
LN_EPS = 1e-5              # nn.LayerNorm default
_NEG_INF = -1e9            # matches masked_fill(mask == 0, -1e9)
_ATTN_SCALE = 1.0 / math.sqrt(D_HEAD)
MAX_ROWS_PER_STEP = 512    # rows (batch_block * seq) processed per grid step


def _pick_batch_block(batch, seq):
    """Largest divisor of `batch` keeping rows-per-step <= MAX_ROWS_PER_STEP,
    preferring >= 2 grid steps so v7x's second TensorCore gets work."""
    divisors = [d for d in range(1, batch + 1)
                if batch % d == 0 and d * seq <= MAX_ROWS_PER_STEP]
    if not divisors:
        return 1
    two_step = [d for d in divisors if batch // d >= 2]
    return max(two_step) if two_step else max(divisors)


def _layer_norm(x, gamma, beta):
    mean = jnp.mean(x, axis=-1, keepdims=True)
    xc = x - mean
    var = jnp.mean(xc * xc, axis=-1, keepdims=True)
    return xc * jax.lax.rsqrt(var + LN_EPS) * gamma + beta


def _attention_heads(q, k, v, mask_add, wo_bf):
    """Multi-head attention for one sequence.
    q: (Sq, D) bf16, pre-scaled by 1/sqrt(d_k).  k, v: (Skv, D) bf16.
    mask_add: (Sq, Skv) f32 additive mask.  wo_bf: (D, D) bf16.
    Returns (Sq, D) f32."""
    ctx_parts = []
    for h in range(N_HEADS):                       # small static head loop
        sl = slice(h * D_HEAD, (h + 1) * D_HEAD)
        qh, kh, vh = q[:, sl], k[:, sl], v[:, sl]
        # q @ k^T without materializing a transpose (NT matmul on the MXU)
        s = jax.lax.dot_general(qh, kh, (((1,), (1,)), ((), ())),
                                preferred_element_type=jnp.float32)
        s = s + mask_add                           # additive mask (where hoisted)
        s = s - jnp.max(s, axis=-1, keepdims=True)  # stable softmax
        p = jnp.exp(s)
        denom = jnp.sum(p, axis=-1, keepdims=True)
        ctx = jnp.dot(p.astype(jnp.bfloat16), vh,
                      preferred_element_type=jnp.float32)      # (Sq, d_k)
        # deferred normalization: scale (Sq, d_k) ctx instead of (Sq, Skv) p
        ctx_parts.append(ctx * pl.reciprocal(denom, approx=True))
        # TODO(synk): attention-prob dropout is identity (eval-mode forward)
    ctx_full = jnp.concatenate(ctx_parts, axis=-1)              # (Sq, D)
    # single K=128 output projection instead of 4x K=32 matmuls + accumulates
    return jnp.dot(ctx_full.astype(jnp.bfloat16), wo_bf,
                   preferred_element_type=jnp.float32)


# ---------------- fused decoder-block kernel (per batch block) ----------------
def _decoder_block_kernel(x_ref, enc_ref, mask_ref,
                          wqkv_s_ref, wo_s_ref,
                          wq_c_ref, wkv_c_ref, wo_c_ref,
                          g0_ref, b0_ref, g1_ref, b1_ref, g2_ref, b2_ref,
                          w1_ref, bb1_ref, w2_ref, bb2_ref,
                          o_ref):
    f32, bf16 = jnp.float32, jnp.bfloat16
    b_blk, s_q, d = x_ref.shape
    s_kv = enc_ref.shape[1]
    rows = b_blk * s_q

    x = x_ref[...].astype(f32).reshape(rows, d)        # activation, f32 resident
    mask_add = mask_ref[...]                           # (Sq, Skv) additive, f32

    # ---- stage 1: self-attention + residual ---------------------------------
    ln = _layer_norm(x, g0_ref[...], b0_ref[...])
    qkv = jnp.dot(ln.astype(bf16), wqkv_s_ref[...],    # fused QKV, (rows, 3D)
                  preferred_element_type=f32)
    q = (qkv[:, :d] * _ATTN_SCALE).astype(bf16)        # scale q once
    k = qkv[:, d:2 * d].astype(bf16)
    v = qkv[:, 2 * d:].astype(bf16)
    attn = [_attention_heads(q[b * s_q:(b + 1) * s_q],
                             k[b * s_q:(b + 1) * s_q],
                             v[b * s_q:(b + 1) * s_q],
                             mask_add, wo_s_ref[...])
            for b in range(b_blk)]                     # static batch-block loop
    x = x + jnp.concatenate(attn, axis=0)              # residual (dropout = id)

    # ---- stage 2: cross-attention + residual --------------------------------
    ln = _layer_norm(x, g1_ref[...], b1_ref[...])
    q = (jnp.dot(ln.astype(bf16), wq_c_ref[...],
                 preferred_element_type=f32) * _ATTN_SCALE).astype(bf16)
    enc = enc_ref[...].astype(bf16).reshape(b_blk * s_kv, d)   # no LN on enc
    kv = jnp.dot(enc, wkv_c_ref[...], preferred_element_type=f32)  # fused K|V
    k = kv[:, :d].astype(bf16)
    v = kv[:, d:].astype(bf16)
    attn = [_attention_heads(q[b * s_q:(b + 1) * s_q],
                             k[b * s_kv:(b + 1) * s_kv],
                             v[b * s_kv:(b + 1) * s_kv],
                             mask_add, wo_c_ref[...])
            for b in range(b_blk)]
    x = x + jnp.concatenate(attn, axis=0)              # residual (dropout = id)

    # ---- stage 3: feed-forward + residual ------------------------------------
    ln = _layer_norm(x, g2_ref[...], b2_ref[...])
    h = jnp.dot(ln.astype(bf16), w1_ref[...],
                preferred_element_type=f32) + bb1_ref[...]
    h = jnp.maximum(h, 0.0)                            # ReLU; dropout = identity
    y = jnp.dot(h.astype(bf16), w2_ref[...],
                preferred_element_type=f32) + bb2_ref[...]
    o_ref[...] = (x + y).reshape(b_blk, s_q, d).astype(o_ref.dtype)


def _bf16(w):
    return w.astype(jnp.bfloat16)


# ---------------- DecoderBlock forward ----------------------------------------
@jax.jit
def decoder_block(x, encoder_output, src_mask, tgt_mask, params):
    # The reference DecoderBlock.forward passes src_mask to BOTH attention
    # blocks; tgt_mask is accepted but unused there.  We mirror that exactly.
    del tgt_mask
    p = params
    B, S_q, D = x.shape
    S_kv = encoder_output.shape[1]
    assert D == D_MODEL
    # One (S_q, S_kv) mask reused for both attention stages, as in the reference.
    assert src_mask.shape == (S_q, S_kv) and S_q == S_kv, \
        "reference semantics: the same src_mask feeds self- and cross-attention"

    d_ff = p["w1"].shape[1]
    b_blk = _pick_batch_block(B, max(S_q, S_kv))
    grid = (B // b_blk,)

    # Precomputed once per call in the wrapper (tiny, weight-sized work):
    mask_add = jnp.where(src_mask == 0, _NEG_INF, 0.0).astype(jnp.float32)
    wqkv_s = _bf16(jnp.concatenate([p["wq_s"], p["wk_s"], p["wv_s"]], axis=1))
    wkv_c = _bf16(jnp.concatenate([p["wk_c"], p["wv_c"]], axis=1))

    def fixed(shape):
        return pl.BlockSpec(shape, lambda i: (0,) * len(shape))

    in_specs = [
        pl.BlockSpec((b_blk, S_q, D), lambda i: (i, 0, 0)),    # x
        pl.BlockSpec((b_blk, S_kv, D), lambda i: (i, 0, 0)),   # encoder output
        fixed((S_q, S_kv)),                                    # additive mask
        fixed((D, 3 * D)),                                     # wq|wk|wv (self)
        fixed((D, D)),                                         # wo (self)
        fixed((D, D)),                                         # wq (cross)
        fixed((D, 2 * D)),                                     # wk|wv (cross)
        fixed((D, D)),                                         # wo (cross)
        fixed((1, D)), fixed((1, D)),                          # g0, b0
        fixed((1, D)), fixed((1, D)),                          # g1, b1
        fixed((1, D)), fixed((1, D)),                          # g2, b2
        fixed((D, d_ff)), fixed((1, d_ff)),                    # w1, b1
        fixed((d_ff, D)), fixed((1, D)),                       # w2, b2
    ]

    return pl.pallas_call(
        _decoder_block_kernel,
        out_shape=jax.ShapeDtypeStruct((B, S_q, D), x.dtype),
        grid=grid,
        in_specs=in_specs,
        out_specs=pl.BlockSpec((b_blk, S_q, D), lambda i: (i, 0, 0)),
        compiler_params=pltpu.CompilerParams(
            dimension_semantics=("parallel",),
            vmem_limit_bytes=32 * 1024 * 1024),
    )(x, encoder_output, mask_add,
      wqkv_s, _bf16(p["wo_s"]),
      _bf16(p["wq_c"]), wkv_c, _bf16(p["wo_c"]),
      p["g0"].reshape(1, D), p["b0"].reshape(1, D),
      p["g1"].reshape(1, D), p["b1"].reshape(1, D),
      p["g2"].reshape(1, D), p["b2"].reshape(1, D),
      _bf16(p["w1"]), p["bb1"].reshape(1, d_ff),
      _bf16(p["w2"]), p["bb2"].reshape(1, D))


# ---------------- pure-JAX reference (eval-mode forward, f32) -----------------
def _reference(x, enc, mask, p):
    def ln(z, g, b):
        m = jnp.mean(z, -1, keepdims=True)
        v = jnp.mean((z - m) ** 2, -1, keepdims=True)
        return (z - m) * jax.lax.rsqrt(v + LN_EPS) * g + b

    def mha(q_in, kv_in, m, wq, wk, wv, wo):
        B, Sq, D = q_in.shape
        Skv = kv_in.shape[1]
        q = (q_in @ wq).reshape(B, Sq, N_HEADS, D_HEAD).transpose(0, 2, 1, 3)
        k = (kv_in @ wk).reshape(B, Skv, N_HEADS, D_HEAD).transpose(0, 2, 1, 3)
        v = (kv_in @ wv).reshape(B, Skv, N_HEADS, D_HEAD).transpose(0, 2, 1, 3)
        s = (q @ k.transpose(0, 1, 3, 2)) / math.sqrt(D_HEAD)
        s = jnp.where(m[None, None] == 0, -1e9, s)
        a = jax.nn.softmax(s, axis=-1)
        o = (a @ v).transpose(0, 2, 1, 3).reshape(B, Sq, D)
        return o @ wo

    h = x + mha(ln(x, p["g0"], p["b0"]), ln(x, p["g0"], p["b0"]), mask,
                p["wq_s"], p["wk_s"], p["wv_s"], p["wo_s"])
    h = h + mha(ln(h, p["g1"], p["b1"]), enc, mask,
                p["wq_c"], p["wk_c"], p["wv_c"], p["wo_c"])
    z = ln(h, p["g2"], p["b2"])
    ff = jnp.maximum(z @ p["w1"] + p["bb1"], 0.0) @ p["w2"] + p["bb2"]
    return h + ff


if __name__ == "__main__":
    key = jax.random.PRNGKey(0)
    ks = jax.random.split(key, 20)
    B, S = 2, 8

    x = jax.random.normal(ks[0], (B, S, D_MODEL), dtype=jnp.float32)
    enc = jax.random.normal(ks[1], (B, S, D_MODEL), dtype=jnp.float32)

    def w(k, shape, fan_in):
        return jax.random.normal(k, shape, dtype=jnp.float32) / jnp.sqrt(fan_in)

    params = dict(
        wq_s=w(ks[2], (D_MODEL, D_MODEL), D_MODEL),
        wk_s=w(ks[3], (D_MODEL, D_MODEL), D_MODEL),
        wv_s=w(ks[4], (D_MODEL, D_MODEL), D_MODEL),
        wo_s=w(ks[5], (D_MODEL, D_MODEL), D_MODEL),
        wq_c=w(ks[6], (D_MODEL, D_MODEL), D_MODEL),
        wk_c=w(ks[7], (D_MODEL, D_MODEL), D_MODEL),
        wv_c=w(ks[8], (D_MODEL, D_MODEL), D_MODEL),
        wo_c=w(ks[9], (D_MODEL, D_MODEL), D_MODEL),
        w1=w(ks[10], (D_MODEL, D_FF), D_MODEL),
        bb1=0.01 * jax.random.normal(ks[11], (D_FF,), dtype=jnp.float32),
        w2=w(ks[12], (D_FF, D_MODEL), D_FF),
        bb2=0.01 * jax.random.normal(ks[13], (D_MODEL,), dtype=jnp.float32),
        g0=1.0 + 0.05 * jax.random.normal(ks[14], (D_MODEL,), dtype=jnp.float32),
        b0=0.05 * jax.random.normal(ks[15], (D_MODEL,), dtype=jnp.float32),
        g1=1.0 + 0.05 * jax.random.normal(ks[16], (D_MODEL,), dtype=jnp.float32),
        b1=0.05 * jax.random.normal(ks[17], (D_MODEL,), dtype=jnp.float32),
        g2=1.0 + 0.05 * jax.random.normal(ks[18], (D_MODEL,), dtype=jnp.float32),
        b2=0.05 * jax.random.normal(ks[19], (D_MODEL,), dtype=jnp.float32),
    )

    # causal mask exercises the masked_fill path; tgt_mask unused by the spec
    src_mask = jnp.tril(jnp.ones((S, S), dtype=jnp.int32))
    tgt_mask = jnp.ones((S, S), dtype=jnp.int32)

    out = decoder_block(x, enc, src_mask, tgt_mask, params)
    jax.block_until_ready(out)
    assert out.shape == (B, S, D_MODEL) and out.dtype == jnp.float32

    ref = _reference(x, enc, src_mask, params)
    rel_err = float(jnp.max(jnp.abs(out - ref)) / (jnp.max(jnp.abs(ref)) + 1e-6))
    assert rel_err < 2e-2, f"mismatch vs reference: rel_err={rel_err}"
    print("KERNEL_OK")
</pallas_src>

<mosaic_0001>
module attributes {stable_mosaic.version = 11 : i64} {
  func.func @_decoder_block_kernel(%arg0: i32, %arg1: memref<1x8x128xf32, #tpu.memory_space<vmem>>, %arg2: memref<1x8x128xf32, #tpu.memory_space<vmem>>, %arg3: memref<8x8xf32, #tpu.memory_space<vmem>>, %arg4: memref<128x384xbf16, #tpu.memory_space<vmem>>, %arg5: memref<128x128xbf16, #tpu.memory_space<vmem>>, %arg6: memref<128x128xbf16, #tpu.memory_space<vmem>>, %arg7: memref<128x256xbf16, #tpu.memory_space<vmem>>, %arg8: memref<128x128xbf16, #tpu.memory_space<vmem>>, %arg9: memref<1x128xf32, #tpu.memory_space<vmem>>, %arg10: memref<1x128xf32, #tpu.memory_space<vmem>>, %arg11: memref<1x128xf32, #tpu.memory_space<vmem>>, %arg12: memref<1x128xf32, #tpu.memory_space<vmem>>, %arg13: memref<1x128xf32, #tpu.memory_space<vmem>>, %arg14: memref<1x128xf32, #tpu.memory_space<vmem>>, %arg15: memref<128x256xbf16, #tpu.memory_space<vmem>>, %arg16: memref<1x256xf32, #tpu.memory_space<vmem>>, %arg17: memref<256x128xbf16, #tpu.memory_space<vmem>>, %arg18: memref<1x128xf32, #tpu.memory_space<vmem>>, %arg19: memref<1x8x128xf32, #tpu.memory_space<vmem>>) attributes {dimension_semantics = [#tpu.dimension_semantics<parallel>], iteration_bounds = array<i64: 2>, scalar_prefetch = 0 : i64, scratch_operands = 0 : i64, tpu.core_type = #tpu.core_type<tc>, window_params = [{transform_indices = @transform_0, window_bounds = array<i64: 1, 8, 128>}, {transform_indices = @transform_1, window_bounds = array<i64: 1, 8, 128>}, {pipeline_mode = #tpu.pipeline_mode<synchronous>, transform_indices = @transform_2, window_bounds = array<i64: 8, 8>}, {pipeline_mode = #tpu.pipeline_mode<synchronous>, transform_indices = @transform_3, window_bounds = array<i64: 128, 384>}, {pipeline_mode = #tpu.pipeline_mode<synchronous>, transform_indices = @transform_4, window_bounds = array<i64: 128, 128>}, {pipeline_mode = #tpu.pipeline_mode<synchronous>, transform_indices = @transform_5, window_bounds = array<i64: 128, 128>}, {pipeline_mode = #tpu.pipeline_mode<synchronous>, transform_indices = @transform_6, window_bounds = array<i64: 128, 256>}, {pipeline_mode = #tpu.pipeline_mode<synchronous>, transform_indices = @transform_7, window_bounds = array<i64: 128, 128>}, {pipeline_mode = #tpu.pipeline_mode<synchronous>, transform_indices = @transform_8, window_bounds = array<i64: 1, 128>}, {pipeline_mode = #tpu.pipeline_mode<synchronous>, transform_indices = @transform_9, window_bounds = array<i64: 1, 128>}, {pipeline_mode = #tpu.pipeline_mode<synchronous>, transform_indices = @transform_10, window_bounds = array<i64: 1, 128>}, {pipeline_mode = #tpu.pipeline_mode<synchronous>, transform_indices = @transform_11, window_bounds = array<i64: 1, 128>}, {pipeline_mode = #tpu.pipeline_mode<synchronous>, transform_indices = @transform_12, window_bounds = array<i64: 1, 128>}, {pipeline_mode = #tpu.pipeline_mode<synchronous>, transform_indices = @transform_13, window_bounds = array<i64: 1, 128>}, {pipeline_mode = #tpu.pipeline_mode<synchronous>, transform_indices = @transform_14, window_bounds = array<i64: 128, 256>}, {pipeline_mode = #tpu.pipeline_mode<synchronous>, transform_indices = @transform_15, window_bounds = array<i64: 1, 256>}, {pipeline_mode = #tpu.pipeline_mode<synchronous>, transform_indices = @transform_16, window_bounds = array<i64: 256, 128>}, {pipeline_mode = #tpu.pipeline_mode<synchronous>, transform_indices = @transform_17, window_bounds = array<i64: 1, 128>}, {transform_indices = @transform_18, window_bounds = array<i64: 1, 8, 128>}]} {
    %c0 = arith.constant 0 : index
    %c0_0 = arith.constant 0 : index
    %c0_1 = arith.constant 0 : index
    %0 = vector.load %arg1[%c0, %c0_0, %c0_1] : memref<1x8x128xf32, #tpu.memory_space<vmem>>, vector<1x8x128xf32>
    %1 = vector.shape_cast %0 : vector<1x8x128xf32> to vector<8x128xf32>
    %c0_2 = arith.constant 0 : index
    %c0_3 = arith.constant 0 : index
    %2 = vector.load %arg3[%c0_2, %c0_3] : memref<8x8xf32, #tpu.memory_space<vmem>>, vector<8x8xf32>
    %c0_4 = arith.constant 0 : index
    %c0_5 = arith.constant 0 : index
    %3 = vector.load %arg9[%c0_4, %c0_5] : memref<1x128xf32, #tpu.memory_space<vmem>>, vector<1x128xf32>
    %c0_6 = arith.constant 0 : index
    %c0_7 = arith.constant 0 : index
    %4 = vector.load %arg10[%c0_6, %c0_7] : memref<1x128xf32, #tpu.memory_space<vmem>>, vector<1x128xf32>
    %cst = arith.constant dense<0.000000e+00> : vector<8xf32>
    %5 = vector.multi_reduction <add>, %1, %cst [1] : vector<8x128xf32> to vector<8xf32>
    %6 = vector.shape_cast %5 : vector<8xf32> to vector<8x1xf32>
    %cst_8 = arith.constant 1.280000e+02 : f32
    %7 = vector.broadcast %cst_8 : f32 to vector<8x1xf32>
    %8 = arith.divf %6, %7 : vector<8x1xf32>
    %9 = vector.broadcast %8 : vector<8x1xf32> to vector<8x128xf32>
    %10 = arith.subf %1, %9 : vector<8x128xf32>
    %11 = arith.mulf %10, %10 : vector<8x128xf32>
    %cst_9 = arith.constant dense<0.000000e+00> : vector<8xf32>
    %12 = vector.multi_reduction <add>, %11, %cst_9 [1] : vector<8x128xf32> to vector<8xf32>
    %13 = vector.shape_cast %12 : vector<8xf32> to vector<8x1xf32>
    %cst_10 = arith.constant 1.280000e+02 : f32
    %14 = vector.broadcast %cst_10 : f32 to vector<8x1xf32>
    %15 = arith.divf %13, %14 : vector<8x1xf32>
    %cst_11 = arith.constant 9.99999974E-6 : f32
    %16 = vector.broadcast %cst_11 : f32 to vector<8x1xf32>
    %17 = arith.addf %15, %16 : vector<8x1xf32>
    %18 = math.rsqrt %17 : vector<8x1xf32>
    %19 = vector.broadcast %18 : vector<8x1xf32> to vector<8x128xf32>
    %20 = arith.mulf %10, %19 : vector<8x128xf32>
    %21 = vector.broadcast %3 : vector<1x128xf32> to vector<8x128xf32>
    %22 = arith.mulf %20, %21 : vector<8x128xf32>
    %23 = vector.broadcast %4 : vector<1x128xf32> to vector<8x128xf32>
    %24 = arith.addf %22, %23 : vector<8x128xf32>
    %25 = arith.truncf %24 : vector<8x128xf32> to vector<8x128xbf16>
    %c0_12 = arith.constant 0 : index
    %c0_13 = arith.constant 0 : index
    %26 = vector.load %arg4[%c0_12, %c0_13] : memref<128x384xbf16, #tpu.memory_space<vmem>>, vector<128x384xbf16>
    %cst_14 = arith.constant dense<0.000000e+00> : vector<8x384xf32>
    %27 = tpu.matmul %25, %26, %cst_14 {dimension_numbers = #tpu.dot_dimension_numbers<[1], [0], [0], [1], [0, 0, 1, 1], [], []>} : vector<8x128xbf16>, vector<128x384xbf16>, vector<8x384xf32> -> vector<8x384xf32>
    %28 = vector.extract_strided_slice %27 {offsets = [0, 0], sizes = [8, 128], strides = [1, 1]} : vector<8x384xf32> to vector<8x128xf32>
    %cst_15 = arith.constant 0.176776692 : f32
    %29 = vector.broadcast %cst_15 : f32 to vector<8x128xf32>
    %30 = arith.mulf %28, %29 : vector<8x128xf32>
    %31 = arith.truncf %30 : vector<8x128xf32> to vector<8x128xbf16>
    %32 = vector.extract_strided_slice %27 {offsets = [0, 128], sizes = [8, 128], strides = [1, 1]} : vector<8x384xf32> to vector<8x128xf32>
    %33 = arith.truncf %32 : vector<8x128xf32> to vector<8x128xbf16>
    %34 = vector.extract_strided_slice %27 {offsets = [0, 256], sizes = [8, 128], strides = [1, 1]} : vector<8x384xf32> to vector<8x128xf32>
    %35 = arith.truncf %34 : vector<8x128xf32> to vector<8x128xbf16>
    %c0_16 = arith.constant 0 : index
    %c0_17 = arith.constant 0 : index
    %36 = vector.load %arg5[%c0_16, %c0_17] : memref<128x128xbf16, #tpu.memory_space<vmem>>, vector<128x128xbf16>
    %37 = vector.extract_strided_slice %31 {offsets = [0, 0], sizes = [8, 32], strides = [1, 1]} : vector<8x128xbf16> to vector<8x32xbf16>
    %38 = vector.extract_strided_slice %33 {offsets = [0, 0], sizes = [8, 32], strides = [1, 1]} : vector<8x128xbf16> to vector<8x32xbf16>
    %39 = vector.extract_strided_slice %35 {offsets = [0, 0], sizes = [8, 32], strides = [1, 1]} : vector<8x128xbf16> to vector<8x32xbf16>
    %cst_18 = arith.constant dense<0.000000e+00> : vector<8x8xf32>
    %40 = tpu.matmul %37, %38, %cst_18 {dimension_numbers = #tpu.dot_dimension_numbers<[1], [1], [0], [0], [0, 0, 1, 0], [], []>} : vector<8x32xbf16>, vector<8x32xbf16>, vector<8x8xf32> -> vector<8x8xf32>
    %41 = arith.addf %40, %2 : vector<8x8xf32>
    %cst_19 = arith.constant dense<0xFF800000> : vector<8xf32>
    %42 = vector.multi_reduction <maximumf>, %41, %cst_19 [1] : vector<8x8xf32> to vector<8xf32>
    %43 = vector.shape_cast %42 : vector<8xf32> to vector<8x1xf32>
    %44 = vector.broadcast %43 : vector<8x1xf32> to vector<8x8xf32>
    %45 = arith.subf %41, %44 : vector<8x8xf32>
    %46 = math.exp %45 : vector<8x8xf32>
    %cst_20 = arith.constant dense<0.000000e+00> : vector<8xf32>
    %47 = vector.multi_reduction <add>, %46, %cst_20 [1] : vector<8x8xf32> to vector<8xf32>
    %48 = vector.shape_cast %47 : vector<8xf32> to vector<8x1xf32>
    %49 = arith.truncf %46 : vector<8x8xf32> to vector<8x8xbf16>
    %cst_21 = arith.constant dense<0.000000e+00> : vector<8x32xf32>
    %50 = tpu.matmul %49, %39, %cst_21 {dimension_numbers = #tpu.dot_dimension_numbers<[1], [0], [0], [1], [0, 0, 1, 1], [], []>} : vector<8x8xbf16>, vector<8x32xbf16>, vector<8x32xf32> -> vector<8x32xf32>
    %51 = tpu.reciprocal %48 {approx = true} : vector<8x1xf32> -> vector<8x1xf32>
    %52 = vector.broadcast %51 : vector<8x1xf32> to vector<8x32xf32>
    %53 = arith.mulf %50, %52 : vector<8x32xf32>
    %54 = vector.extract_strided_slice %31 {offsets = [0, 32], sizes = [8, 32], strides = [1, 1]} : vector<8x128xbf16> to vector<8x32xbf16>
    %55 = vector.extract_strided_slice %33 {offsets = [0, 32], sizes = [8, 32], strides = [1, 1]} : vector<8x128xbf16> to vector<8x32xbf16>
    %56 = vector.extract_strided_slice %35 {offsets = [0, 32], sizes = [8, 32], strides = [1, 1]} : vector<8x128xbf16> to vector<8x32xbf16>
    %cst_22 = arith.constant dense<0.000000e+00> : vector<8x8xf32>
    %57 = tpu.matmul %54, %55, %cst_22 {dimension_numbers = #tpu.dot_dimension_numbers<[1], [1], [0], [0], [0, 0, 1, 0], [], []>} : vector<8x32xbf16>, vector<8x32xbf16>, vector<8x8xf32> -> vector<8x8xf32>
    %58 = arith.addf %57, %2 : vector<8x8xf32>
    %cst_23 = arith.constant dense<0xFF800000> : vector<8xf32>
    %59 = vector.multi_reduction <maximumf>, %58, %cst_23 [1] : vector<8x8xf32> to vector<8xf32>
    %60 = vector.shape_cast %59 : vector<8xf32> to vector<8x1xf32>
    %61 = vector.broadcast %60 : vector<8x1xf32> to vector<8x8xf32>
    %62 = arith.subf %58, %61 : vector<8x8xf32>
    %63 = math.exp %62 : vector<8x8xf32>
    %cst_24 = arith.constant dense<0.000000e+00> : vector<8xf32>
    %64 = vector.multi_reduction <add>, %63, %cst_24 [1] : vector<8x8xf32> to vector<8xf32>
    %65 = vector.shape_cast %64 : vector<8xf32> to vector<8x1xf32>
    %66 = arith.truncf %63 : vector<8x8xf32> to vector<8x8xbf16>
    %cst_25 = arith.constant dense<0.000000e+00> : vector<8x32xf32>
    %67 = tpu.matmul %66, %56, %cst_25 {dimension_numbers = #tpu.dot_dimension_numbers<[1], [0], [0], [1], [0, 0, 1, 1], [], []>} : vector<8x8xbf16>, vector<8x32xbf16>, vector<8x32xf32> -> vector<8x32xf32>
    %68 = tpu.reciprocal %65 {approx = true} : vector<8x1xf32> -> vector<8x1xf32>
    %69 = vector.broadcast %68 : vector<8x1xf32> to vector<8x32xf32>
    %70 = arith.mulf %67, %69 : vector<8x32xf32>
    %71 = vector.extract_strided_slice %31 {offsets = [0, 64], sizes = [8, 32], strides = [1, 1]} : vector<8x128xbf16> to vector<8x32xbf16>
    %72 = vector.extract_strided_slice %33 {offsets = [0, 64], sizes = [8, 32], strides = [1, 1]} : vector<8x128xbf16> to vector<8x32xbf16>
    %73 = vector.extract_strided_slice %35 {offsets = [0, 64], sizes = [8, 32], strides = [1, 1]} : vector<8x128xbf16> to vector<8x32xbf16>
    %cst_26 = arith.constant dense<0.000000e+00> : vector<8x8xf32>
    %74 = tpu.matmul %71, %72, %cst_26 {dimension_numbers = #tpu.dot_dimension_numbers<[1], [1], [0], [0], [0, 0, 1, 0], [], []>} : vector<8x32xbf16>, vector<8x32xbf16>, vector<8x8xf32> -> vector<8x8xf32>
    %75 = arith.addf %74, %2 : vector<8x8xf32>
    %cst_27 = arith.constant dense<0xFF800000> : vector<8xf32>
    %76 = vector.multi_reduction <maximumf>, %75, %cst_27 [1] : vector<8x8xf32> to vector<8xf32>
    %77 = vector.shape_cast %76 : vector<8xf32> to vector<8x1xf32>
    %78 = vector.broadcast %77 : vector<8x1xf32> to vector<8x8xf32>
    %79 = arith.subf %75, %78 : vector<8x8xf32>
    %80 = math.exp %79 : vector<8x8xf32>
    %cst_28 = arith.constant dense<0.000000e+00> : vector<8xf32>
    %81 = vector.multi_reduction <add>, %80, %cst_28 [1] : vector<8x8xf32> to vector<8xf32>
    %82 = vector.shape_cast %81 : vector<8xf32> to vector<8x1xf32>
    %83 = arith.truncf %80 : vector<8x8xf32> to vector<8x8xbf16>
    %cst_29 = arith.constant dense<0.000000e+00> : vector<8x32xf32>
    %84 = tpu.matmul %83, %73, %cst_29 {dimension_numbers = #tpu.dot_dimension_numbers<[1], [0], [0], [1], [0, 0, 1, 1], [], []>} : vector<8x8xbf16>, vector<8x32xbf16>, vector<8x32xf32> -> vector<8x32xf32>
    %85 = tpu.reciprocal %82 {approx = true} : vector<8x1xf32> -> vector<8x1xf32>
    %86 = vector.broadcast %85 : vector<8x1xf32> to vector<8x32xf32>
    %87 = arith.mulf %84, %86 : vector<8x32xf32>
    %88 = vector.extract_strided_slice %31 {offsets = [0, 96], sizes = [8, 32], strides = [1, 1]} : vector<8x128xbf16> to vector<8x32xbf16>
    %89 = vector.extract_strided_slice %33 {offsets = [0, 96], sizes = [8, 32], strides = [1, 1]} : vector<8x128xbf16> to vector<8x32xbf16>
    %90 = vector.extract_strided_slice %35 {offsets = [0, 96], sizes = [8, 32], strides = [1, 1]} : vector<8x128xbf16> to vector<8x32xbf16>
    %cst_30 = arith.constant dense<0.000000e+00> : vector<8x8xf32>
    %91 = tpu.matmul %88, %89, %cst_30 {dimension_numbers = #tpu.dot_dimension_numbers<[1], [1], [0], [0], [0, 0, 1, 0], [], []>} : vector<8x32xbf16>, vector<8x32xbf16>, vector<8x8xf32> -> vector<8x8xf32>
    %92 = arith.addf %91, %2 : vector<8x8xf32>
    %cst_31 = arith.constant dense<0xFF800000> : vector<8xf32>
    %93 = vector.multi_reduction <maximumf>, %92, %cst_31 [1] : vector<8x8xf32> to vector<8xf32>
    %94 = vector.shape_cast %93 : vector<8xf32> to vector<8x1xf32>
    %95 = vector.broadcast %94 : vector<8x1xf32> to vector<8x8xf32>
    %96 = arith.subf %92, %95 : vector<8x8xf32>
    %97 = math.exp %96 : vector<8x8xf32>
    %cst_32 = arith.constant dense<0.000000e+00> : vector<8xf32>
    %98 = vector.multi_reduction <add>, %97, %cst_32 [1] : vector<8x8xf32> to vector<8xf32>
    %99 = vector.shape_cast %98 : vector<8xf32> to vector<8x1xf32>
    %100 = arith.truncf %97 : vector<8x8xf32> to vector<8x8xbf16>
    %cst_33 = arith.constant dense<0.000000e+00> : vector<8x32xf32>
    %101 = tpu.matmul %100, %90, %cst_33 {dimension_numbers = #tpu.dot_dimension_numbers<[1], [0], [0], [1], [0, 0, 1, 1], [], []>} : vector<8x8xbf16>, vector<8x32xbf16>, vector<8x32xf32> -> vector<8x32xf32>
    %102 = tpu.reciprocal %99 {approx = true} : vector<8x1xf32> -> vector<8x1xf32>
    %103 = vector.broadcast %102 : vector<8x1xf32> to vector<8x32xf32>
    %104 = arith.mulf %101, %103 : vector<8x32xf32>
    %105 = tpu.concatenate %53, %70, %87, %104 in 1 : vector<8x32xf32>, vector<8x32xf32>, vector<8x32xf32>, vector<8x32xf32> -> vector<8x128xf32>
    %106 = arith.truncf %105 : vector<8x128xf32> to vector<8x128xbf16>
    %cst_34 = arith.constant dense<0.000000e+00> : vector<8x128xf32>
    %107 = tpu.matmul %106, %36, %cst_34 {dimension_numbers = #tpu.dot_dimension_numbers<[1], [0], [0], [1], [0, 0, 1, 1], [], []>} : vector<8x128xbf16>, vector<128x128xbf16>, vector<8x128xf32> -> vector<8x128xf32>
    %108 = arith.addf %1, %107 : vector<8x128xf32>
    %c0_35 = arith.constant 0 : index
    %c0_36 = arith.constant 0 : index
    %109 = vector.load %arg11[%c0_35, %c0_36] : memref<1x128xf32, #tpu.memory_space<vmem>>, vector<1x128xf32>
    %c0_37 = arith.constant 0 : index
    %c0_38 = arith.constant 0 : index
    %110 = vector.load %arg12[%c0_37, %c0_38] : memref<1x128xf32, #tpu.memory_space<vmem>>, vector<1x128xf32>
    %cst_39 = arith.constant dense<0.000000e+00> : vector<8xf32>
    %111 = vector.multi_reduction <add>, %108, %cst_39 [1] : vector<8x128xf32> to vector<8xf32>
    %112 = vector.shape_cast %111 : vector<8xf32> to vector<8x1xf32>
    %cst_40 = arith.constant 1.280000e+02 : f32
    %113 = vector.broadcast %cst_40 : f32 to vector<8x1xf32>
    %114 = arith.divf %112, %113 : vector<8x1xf32>
    %115 = vector.broadcast %114 : vector<8x1xf32> to vector<8x128xf32>
    %116 = arith.subf %108, %115 : vector<8x128xf32>
    %117 = arith.mulf %116, %116 : vector<8x128xf32>
    %cst_41 = arith.constant dense<0.000000e+00> : vector<8xf32>
    %118 = vector.multi_reduction <add>, %117, %cst_41 [1] : vector<8x128xf32> to vector<8xf32>
    %119 = vector.shape_cast %118 : vector<8xf32> to vector<8x1xf32>
    %cst_42 = arith.constant 1.280000e+02 : f32
    %120 = vector.broadcast %cst_42 : f32 to vector<8x1xf32>
    %121 = arith.divf %119, %120 : vector<8x1xf32>
    %cst_43 = arith.constant 9.99999974E-6 : f32
    %122 = vector.broadcast %cst_43 : f32 to vector<8x1xf32>
    %123 = arith.addf %121, %122 : vector<8x1xf32>
    %124 = math.rsqrt %123 : vector<8x1xf32>
    %125 = vector.broadcast %124 : vector<8x1xf32> to vector<8x128xf32>
    %126 = arith.mulf %116, %125 : vector<8x128xf32>
    %127 = vector.broadcast %109 : vector<1x128xf32> to vector<8x128xf32>
    %128 = arith.mulf %126, %127 : vector<8x128xf32>
    %129 = vector.broadcast %110 : vector<1x128xf32> to vector<8x128xf32>
    %130 = arith.addf %128, %129 : vector<8x128xf32>
    %131 = arith.truncf %130 : vector<8x128xf32> to vector<8x128xbf16>
    %c0_44 = arith.constant 0 : index
    %c0_45 = arith.constant 0 : index
    %132 = vector.load %arg6[%c0_44, %c0_45] : memref<128x128xbf16, #tpu.memory_space<vmem>>, vector<128x128xbf16>
    %cst_46 = arith.constant dense<0.000000e+00> : vector<8x128xf32>
    %133 = tpu.matmul %131, %132, %cst_46 {dimension_numbers = #tpu.dot_dimension_numbers<[1], [0], [0], [1], [0, 0, 1, 1], [], []>} : vector<8x128xbf16>, vector<128x128xbf16>, vector<8x128xf32> -> vector<8x128xf32>
    %cst_47 = arith.constant 0.176776692 : f32
    %134 = vector.broadcast %cst_47 : f32 to vector<8x128xf32>
    %135 = arith.mulf %133, %134 : vector<8x128xf32>
    %136 = arith.truncf %135 : vector<8x128xf32> to vector<8x128xbf16>
    %c0_48 = arith.constant 0 : index
    %c0_49 = arith.constant 0 : index
    %c0_50 = arith.constant 0 : index
    %137 = vector.load %arg2[%c0_48, %c0_49, %c0_50] : memref<1x8x128xf32, #tpu.memory_space<vmem>>, vector<1x8x128xf32>
    %138 = arith.truncf %137 : vector<1x8x128xf32> to vector<1x8x128xbf16>
    %139 = vector.shape_cast %138 : vector<1x8x128xbf16> to vector<8x128xbf16>
    %c0_51 = arith.constant 0 : index
    %c0_52 = arith.constant 0 : index
    %140 = vector.load %arg7[%c0_51, %c0_52] : memref<128x256xbf16, #tpu.memory_space<vmem>>, vector<128x256xbf16>
    %cst_53 = arith.constant dense<0.000000e+00> : vector<8x256xf32>
    %141 = tpu.matmul %139, %140, %cst_53 {dimension_numbers = #tpu.dot_dimension_numbers<[1], [0], [0], [1], [0, 0, 1, 1], [], []>} : vector<8x128xbf16>, vector<128x256xbf16>, vector<8x256xf32> -> vector<8x256xf32>
    %142 = vector.extract_strided_slice %141 {offsets = [0, 0], sizes = [8, 128], strides = [1, 1]} : vector<8x256xf32> to vector<8x128xf32>
    %143 = arith.truncf %142 : vector<8x128xf32> to vector<8x128xbf16>
    %144 = vector.extract_strided_slice %141 {offsets = [0, 128], sizes = [8, 128], strides = [1, 1]} : vector<8x256xf32> to vector<8x128xf32>
    %145 = arith.truncf %144 : vector<8x128xf32> to vector<8x128xbf16>
    %c0_54 = arith.constant 0 : index
    %c0_55 = arith.constant 0 : index
    %146 = vector.load %arg8[%c0_54, %c0_55] : memref<128x128xbf16, #tpu.memory_space<vmem>>, vector<128x128xbf16>
    %147 = vector.extract_strided_slice %136 {offsets = [0, 0], sizes = [8, 32], strides = [1, 1]} : vector<8x128xbf16> to vector<8x32xbf16>
    %148 = vector.extract_strided_slice %143 {offsets = [0, 0], sizes = [8, 32], strides = [1, 1]} : vector<8x128xbf16> to vector<8x32xbf16>
    %149 = vector.extract_strided_slice %145 {offsets = [0, 0], sizes = [8, 32], strides = [1, 1]} : vector<8x128xbf16> to vector<8x32xbf16>
    %cst_56 = arith.constant dense<0.000000e+00> : vector<8x8xf32>
    %150 = tpu.matmul %147, %148, %cst_56 {dimension_numbers = #tpu.dot_dimension_numbers<[1], [1], [0], [0], [0, 0, 1, 0], [], []>} : vector<8x32xbf16>, vector<8x32xbf16>, vector<8x8xf32> -> vector<8x8xf32>
    %151 = arith.addf %150, %2 : vector<8x8xf32>
    %cst_57 = arith.constant dense<0xFF800000> : vector<8xf32>
    %152 = vector.multi_reduction <maximumf>, %151, %cst_57 [1] : vector<8x8xf32> to vector<8xf32>
    %153 = vector.shape_cast %152 : vector<8xf32> to vector<8x1xf32>
    %154 = vector.broadcast %153 : vector<8x1xf32> to vector<8x8xf32>
    %155 = arith.subf %151, %154 : vector<8x8xf32>
    %156 = math.exp %155 : vector<8x8xf32>
    %cst_58 = arith.constant dense<0.000000e+00> : vector<8xf32>
    %157 = vector.multi_reduction <add>, %156, %cst_58 [1] : vector<8x8xf32> to vector<8xf32>
    %158 = vector.shape_cast %157 : vector<8xf32> to vector<8x1xf32>
    %159 = arith.truncf %156 : vector<8x8xf32> to vector<8x8xbf16>
    %cst_59 = arith.constant dense<0.000000e+00> : vector<8x32xf32>
    %160 = tpu.matmul %159, %149, %cst_59 {dimension_numbers = #tpu.dot_dimension_numbers<[1], [0], [0], [1], [0, 0, 1, 1], [], []>} : vector<8x8xbf16>, vector<8x32xbf16>, vector<8x32xf32> -> vector<8x32xf32>
    %161 = tpu.reciprocal %158 {approx = true} : vector<8x1xf32> -> vector<8x1xf32>
    %162 = vector.broadcast %161 : vector<8x1xf32> to vector<8x32xf32>
    %163 = arith.mulf %160, %162 : vector<8x32xf32>
    %164 = vector.extract_strided_slice %136 {offsets = [0, 32], sizes = [8, 32], strides = [1, 1]} : vector<8x128xbf16> to vector<8x32xbf16>
    %165 = vector.extract_strided_slice %143 {offsets = [0, 32], sizes = [8, 32], strides = [1, 1]} : vector<8x128xbf16> to vector<8x32xbf16>
    %166 = vector.extract_strided_slice %145 {offsets = [0, 32], sizes = [8, 32], strides = [1, 1]} : vector<8x128xbf16> to vector<8x32xbf16>
    %cst_60 = arith.constant dense<0.000000e+00> : vector<8x8xf32>
    %167 = tpu.matmul %164, %165, %cst_60 {dimension_numbers = #tpu.dot_dimension_numbers<[1], [1], [0], [0], [0, 0, 1, 0], [], []>} : vector<8x32xbf16>, vector<8x32xbf16>, vector<8x8xf32> -> vector<8x8xf32>
    %168 = arith.addf %167, %2 : vector<8x8xf32>
    %cst_61 = arith.constant dense<0xFF800000> : vector<8xf32>
    %169 = vector.multi_reduction <maximumf>, %168, %cst_61 [1] : vector<8x8xf32> to vector<8xf32>
    %170 = vector.shape_cast %169 : vector<8xf32> to vector<8x1xf32>
    %171 = vector.broadcast %170 : vector<8x1xf32> to vector<8x8xf32>
    %172 = arith.subf %168, %171 : vector<8x8xf32>
    %173 = math.exp %172 : vector<8x8xf32>
    %cst_62 = arith.constant dense<0.000000e+00> : vector<8xf32>
    %174 = vector.multi_reduction <add>, %173, %cst_62 [1] : vector<8x8xf32> to vector<8xf32>
    %175 = vector.shape_cast %174 : vector<8xf32> to vector<8x1xf32>
    %176 = arith.truncf %173 : vector<8x8xf32> to vector<8x8xbf16>
    %cst_63 = arith.constant dense<0.000000e+00> : vector<8x32xf32>
    %177 = tpu.matmul %176, %166, %cst_63 {dimension_numbers = #tpu.dot_dimension_numbers<[1], [0], [0], [1], [0, 0, 1, 1], [], []>} : vector<8x8xbf16>, vector<8x32xbf16>, vector<8x32xf32> -> vector<8x32xf32>
    %178 = tpu.reciprocal %175 {approx = true} : vector<8x1xf32> -> vector<8x1xf32>
    %179 = vector.broadcast %178 : vector<8x1xf32> to vector<8x32xf32>
    %180 = arith.mulf %177, %179 : vector<8x32xf32>
    %181 = vector.extract_strided_slice %136 {offsets = [0, 64], sizes = [8, 32], strides = [1, 1]} : vector<8x128xbf16> to vector<8x32xbf16>
    %182 = vector.extract_strided_slice %143 {offsets = [0, 64], sizes = [8, 32], strides = [1, 1]} : vector<8x128xbf16> to vector<8x32xbf16>
    %183 = vector.extract_strided_slice %145 {offsets = [0, 64], sizes = [8, 32], strides = [1, 1]} : vector<8x128xbf16> to vector<8x32xbf16>
    %cst_64 = arith.constant dense<0.000000e+00> : vector<8x8xf32>
    %184 = tpu.matmul %181, %182, %cst_64 {dimension_numbers = #tpu.dot_dimension_numbers<[1], [1], [0], [0], [0, 0, 1, 0], [], []>} : vector<8x32xbf16>, vector<8x32xbf16>, vector<8x8xf32> -> vector<8x8xf32>
    %185 = arith.addf %184, %2 : vector<8x8xf32>
    %cst_65 = arith.constant dense<0xFF800000> : vector<8xf32>
    %186 = vector.multi_reduction <maximumf>, %185, %cst_65 [1] : vector<8x8xf32> to vector<8xf32>
    %187 = vector.shape_cast %186 : vector<8xf32> to vector<8x1xf32>
    %188 = vector.broadcast %187 : vector<8x1xf32> to vector<8x8xf32>
    %189 = arith.subf %185, %188 : vector<8x8xf32>
    %190 = math.exp %189 : vector<8x8xf32>
    %cst_66 = arith.constant dense<0.000000e+00> : vector<8xf32>
    %191 = vector.multi_reduction <add>, %190, %cst_66 [1] : vector<8x8xf32> to vector<8xf32>
    %192 = vector.shape_cast %191 : vector<8xf32> to vector<8x1xf32>
    %193 = arith.truncf %190 : vector<8x8xf32> to vector<8x8xbf16>
    %cst_67 = arith.constant dense<0.000000e+00> : vector<8x32xf32>
    %194 = tpu.matmul %193, %183, %cst_67 {dimension_numbers = #tpu.dot_dimension_numbers<[1], [0], [0], [1], [0, 0, 1, 1], [], []>} : vector<8x8xbf16>, vector<8x32xbf16>, vector<8x32xf32> -> vector<8x32xf32>
    %195 = tpu.reciprocal %192 {approx = true} : vector<8x1xf32> -> vector<8x1xf32>
    %196 = vector.broadcast %195 : vector<8x1xf32> to vector<8x32xf32>
    %197 = arith.mulf %194, %196 : vector<8x32xf32>
    %198 = vector.extract_strided_slice %136 {offsets = [0, 96], sizes = [8, 32], strides = [1, 1]} : vector<8x128xbf16> to vector<8x32xbf16>
    %199 = vector.extract_strided_slice %143 {offsets = [0, 96], sizes = [8, 32], strides = [1, 1]} : vector<8x128xbf16> to vector<8x32xbf16>
    %200 = vector.extract_strided_slice %145 {offsets = [0, 96], sizes = [8, 32], strides = [1, 1]} : vector<8x128xbf16> to vector<8x32xbf16>
    %cst_68 = arith.constant dense<0.000000e+00> : vector<8x8xf32>
    %201 = tpu.matmul %198, %199, %cst_68 {dimension_numbers = #tpu.dot_dimension_numbers<[1], [1], [0], [0], [0, 0, 1, 0], [], []>} : vector<8x32xbf16>, vector<8x32xbf16>, vector<8x8xf32> -> vector<8x8xf32>
    %202 = arith.addf %201, %2 : vector<8x8xf32>
    %cst_69 = arith.constant dense<0xFF800000> : vector<8xf32>
    %203 = vector.multi_reduction <maximumf>, %202, %cst_69 [1] : vector<8x8xf32> to vector<8xf32>
    %204 = vector.shape_cast %203 : vector<8xf32> to vector<8x1xf32>
    %205 = vector.broadcast %204 : vector<8x1xf32> to vector<8x8xf32>
    %206 = arith.subf %202, %205 : vector<8x8xf32>
    %207 = math.exp %206 : vector<8x8xf32>
    %cst_70 = arith.constant dense<0.000000e+00> : vector<8xf32>
    %208 = vector.multi_reduction <add>, %207, %cst_70 [1] : vector<8x8xf32> to vector<8xf32>
    %209 = vector.shape_cast %208 : vector<8xf32> to vector<8x1xf32>
    %210 = arith.truncf %207 : vector<8x8xf32> to vector<8x8xbf16>
    %cst_71 = arith.constant dense<0.000000e+00> : vector<8x32xf32>
    %211 = tpu.matmul %210, %200, %cst_71 {dimension_numbers = #tpu.dot_dimension_numbers<[1], [0], [0], [1], [0, 0, 1, 1], [], []>} : vector<8x8xbf16>, vector<8x32xbf16>, vector<8x32xf32> -> vector<8x32xf32>
    %212 = tpu.reciprocal %209 {approx = true} : vector<8x1xf32> -> vector<8x1xf32>
    %213 = vector.broadcast %212 : vector<8x1xf32> to vector<8x32xf32>
    %214 = arith.mulf %211, %213 : vector<8x32xf32>
    %215 = tpu.concatenate %163, %180, %197, %214 in 1 : vector<8x32xf32>, vector<8x32xf32>, vector<8x32xf32>, vector<8x32xf32> -> vector<8x128xf32>
    %216 = arith.truncf %215 : vector<8x128xf32> to vector<8x128xbf16>
    %cst_72 = arith.constant dense<0.000000e+00> : vector<8x128xf32>
    %217 = tpu.matmul %216, %146, %cst_72 {dimension_numbers = #tpu.dot_dimension_numbers<[1], [0], [0], [1], [0, 0, 1, 1], [], []>} : vector<8x128xbf16>, vector<128x128xbf16>, vector<8x128xf32> -> vector<8x128xf32>
    %218 = arith.addf %108, %217 : vector<8x128xf32>
    %c0_73 = arith.constant 0 : index
    %c0_74 = arith.constant 0 : index
    %219 = vector.load %arg13[%c0_73, %c0_74] : memref<1x128xf32, #tpu.memory_space<vmem>>, vector<1x128xf32>
    %c0_75 = arith.constant 0 : index
    %c0_76 = arith.constant 0 : index
    %220 = vector.load %arg14[%c0_75, %c0_76] : memref<1x128xf32, #tpu.memory_space<vmem>>, vector<1x128xf32>
    %cst_77 = arith.constant dense<0.000000e+00> : vector<8xf32>
    %221 = vector.multi_reduction <add>, %218, %cst_77 [1] : vector<8x128xf32> to vector<8xf32>
    %222 = vector.shape_cast %221 : vector<8xf32> to vector<8x1xf32>
    %cst_78 = arith.constant 1.280000e+02 : f32
    %223 = vector.broadcast %cst_78 : f32 to vector<8x1xf32>
    %224 = arith.divf %222, %223 : vector<8x1xf32>
    %225 = vector.broadcast %224 : vector<8x1xf32> to vector<8x128xf32>
    %226 = arith.subf %218, %225 : vector<8x128xf32>
    %227 = arith.mulf %226, %226 : vector<8x128xf32>
    %cst_79 = arith.constant dense<0.000000e+00> : vector<8xf32>
    %228 = vector.multi_reduction <add>, %227, %cst_79 [1] : vector<8x128xf32> to vector<8xf32>
    %229 = vector.shape_cast %228 : vector<8xf32> to vector<8x1xf32>
    %cst_80 = arith.constant 1.280000e+02 : f32
    %230 = vector.broadcast %cst_80 : f32 to vector<8x1xf32>
    %231 = arith.divf %229, %230 : vector<8x1xf32>
    %cst_81 = arith.constant 9.99999974E-6 : f32
    %232 = vector.broadcast %cst_81 : f32 to vector<8x1xf32>
    %233 = arith.addf %231, %232 : vector<8x1xf32>
    %234 = math.rsqrt %233 : vector<8x1xf32>
    %235 = vector.broadcast %234 : vector<8x1xf32> to vector<8x128xf32>
    %236 = arith.mulf %226, %235 : vector<8x128xf32>
    %237 = vector.broadcast %219 : vector<1x128xf32> to vector<8x128xf32>
    %238 = arith.mulf %236, %237 : vector<8x128xf32>
    %239 = vector.broadcast %220 : vector<1x128xf32> to vector<8x128xf32>
    %240 = arith.addf %238, %239 : vector<8x128xf32>
    %241 = arith.truncf %240 : vector<8x128xf32> to vector<8x128xbf16>
    %c0_82 = arith.constant 0 : index
    %c0_83 = arith.constant 0 : index
    %242 = vector.load %arg15[%c0_82, %c0_83] : memref<128x256xbf16, #tpu.memory_space<vmem>>, vector<128x256xbf16>
    %cst_84 = arith.constant dense<0.000000e+00> : vector<8x256xf32>
    %243 = tpu.matmul %241, %242, %cst_84 {dimension_numbers = #tpu.dot_dimension_numbers<[1], [0], [0], [1], [0, 0, 1, 1], [], []>} : vector<8x128xbf16>, vector<128x256xbf16>, vector<8x256xf32> -> vector<8x256xf32>
    %c0_85 = arith.constant 0 : index
    %c0_86 = arith.constant 0 : index
    %244 = vector.load %arg16[%c0_85, %c0_86] : memref<1x256xf32, #tpu.memory_space<vmem>>, vector<1x256xf32>
    %245 = vector.broadcast %244 : vector<1x256xf32> to vector<8x256xf32>
    %246 = arith.addf %243, %245 : vector<8x256xf32>
    %cst_87 = arith.constant 0.000000e+00 : f32
    %247 = vector.broadcast %cst_87 : f32 to vector<8x256xf32>
    %248 = arith.maximumf %246, %247 : vector<8x256xf32>
    %249 = arith.truncf %248 : vector<8x256xf32> to vector<8x256xbf16>
    %c0_88 = arith.constant 0 : index
    %c0_89 = arith.constant 0 : index
    %250 = vector.load %arg17[%c0_88, %c0_89] : memref<256x128xbf16, #tpu.memory_space<vmem>>, vector<256x128xbf16>
    %cst_90 = arith.constant dense<0.000000e+00> : vector<8x128xf32>
    %251 = tpu.matmul %249, %250, %cst_90 {dimension_numbers = #tpu.dot_dimension_numbers<[1], [0], [0], [1], [0, 0, 1, 1], [], []>} : vector<8x256xbf16>, vector<256x128xbf16>, vector<8x128xf32> -> vector<8x128xf32>
    %c0_91 = arith.constant 0 : index
    %c0_92 = arith.constant 0 : index
    %252 = vector.load %arg18[%c0_91, %c0_92] : memref<1x128xf32, #tpu.memory_space<vmem>>, vector<1x128xf32>
    %253 = vector.broadcast %252 : vector<1x128xf32> to vector<8x128xf32>
    %254 = arith.addf %251, %253 : vector<8x128xf32>
    %255 = arith.addf %218, %254 : vector<8x128xf32>
    %256 = vector.shape_cast %255 : vector<8x128xf32> to vector<1x8x128xf32>
    %c0_93 = arith.constant 0 : index
    %c0_94 = arith.constant 0 : index
    %c0_95 = arith.constant 0 : index
    %257 = vector.load %arg19[%c0_93, %c0_94, %c0_95] : memref<1x8x128xf32, #tpu.memory_space<vmem>>, vector<1x8x128xf32>
    tpu.vector_store %arg19[%c0_93, %c0_94, %c0_95], %256 {strides = array<i32>} : memref<1x8x128xf32, #tpu.memory_space<vmem>>, vector<1x8x128xf32>,
    return
  }
  func.func @transform_0(%arg0: i32) -> (i32, i32, i32) {
    %c0_i32 = arith.constant 0 : i32
    %c0_i32_0 = arith.constant 0 : i32
    %c0_i32_1 = arith.constant 0 : i32
    return %arg0, %c0_i32, %c0_i32_0 : i32, i32, i32
  }
  func.func @transform_1(%arg0: i32) -> (i32, i32, i32) {
    %c0_i32 = arith.constant 0 : i32
    %c0_i32_0 = arith.constant 0 : i32
    %c0_i32_1 = arith.constant 0 : i32
    return %arg0, %c0_i32, %c0_i32_0 : i32, i32, i32
  }
  func.func @transform_2(%arg0: i32) -> (i32, i32) {
    %c0_i32 = arith.constant 0 : i32
    %c0_i32_0 = arith.constant 0 : i32
    %c0_i32_1 = arith.constant 0 : i32
    return %c0_i32, %c0_i32_0 : i32, i32
  }
  func.func @transform_3(%arg0: i32) -> (i32, i32) {
    %c0_i32 = arith.constant 0 : i32
    %c0_i32_0 = arith.constant 0 : i32
    %c0_i32_1 = arith.constant 0 : i32
    return %c0_i32, %c0_i32_0 : i32, i32
  }
  func.func @transform_4(%arg0: i32) -> (i32, i32) {
    %c0_i32 = arith.constant 0 : i32
    %c0_i32_0 = arith.constant 0 : i32
    %c0_i32_1 = arith.constant 0 : i32
    return %c0_i32, %c0_i32_0 : i32, i32
  }
  func.func @transform_5(%arg0: i32) -> (i32, i32) {
    %c0_i32 = arith.constant 0 : i32
    %c0_i32_0 = arith.constant 0 : i32
    %c0_i32_1 = arith.constant 0 : i32
    return %c0_i32, %c0_i32_0 : i32, i32
  }
  func.func @transform_6(%arg0: i32) -> (i32, i32) {
    %c0_i32 = arith.constant 0 : i32
    %c0_i32_0 = arith.constant 0 : i32
    %c0_i32_1 = arith.constant 0 : i32
    return %c0_i32, %c0_i32_0 : i32, i32
  }
  func.func @transform_7(%arg0: i32) -> (i32, i32) {
    %c0_i32 = arith.constant 0 : i32
    %c0_i32_0 = arith.constant 0 : i32
    %c0_i32_1 = arith.constant 0 : i32
    return %c0_i32, %c0_i32_0 : i32, i32
  }
  func.func @transform_8(%arg0: i32) -> (i32, i32) {
    %c0_i32 = arith.constant 0 : i32
    %c0_i32_0 = arith.constant 0 : i32
    %c0_i32_1 = arith.constant 0 : i32
    return %c0_i32, %c0_i32_0 : i32, i32
  }
  func.func @transform_9(%arg0: i32) -> (i32, i32) {
    %c0_i32 = arith.constant 0 : i32
    %c0_i32_0 = arith.constant 0 : i32
    %c0_i32_1 = arith.constant 0 : i32
    return %c0_i32, %c0_i32_0 : i32, i32
  }
  func.func @transform_10(%arg0: i32) -> (i32, i32) {
    %c0_i32 = arith.constant 0 : i32
    %c0_i32_0 = arith.constant 0 : i32
    %c0_i32_1 = arith.constant 0 : i32
    return %c0_i32, %c0_i32_0 : i32, i32
  }
  func.func @transform_11(%arg0: i32) -> (i32, i32) {
    %c0_i32 = arith.constant 0 : i32
    %c0_i32_0 = arith.constant 0 : i32
    %c0_i32_1 = arith.constant 0 : i32
    return %c0_i32, %c0_i32_0 : i32, i32
  }
  func.func @transform_12(%arg0: i32) -> (i32, i32) {
    %c0_i32 = arith.constant 0 : i32
    %c0_i32_0 = arith.constant 0 : i32
    %c0_i32_1 = arith.constant 0 : i32
    return %c0_i32, %c0_i32_0 : i32, i32
  }
  func.func @transform_13(%arg0: i32) -> (i32, i32) {
    %c0_i32 = arith.constant 0 : i32
    %c0_i32_0 = arith.constant 0 : i32
    %c0_i32_1 = arith.constant 0 : i32
    return %c0_i32, %c0_i32_0 : i32, i32
  }
  func.func @transform_14(%arg0: i32) -> (i32, i32) {
    %c0_i32 = arith.constant 0 : i32
    %c0_i32_0 = arith.constant 0 : i32
    %c0_i32_1 = arith.constant 0 : i32
    return %c0_i32, %c0_i32_0 : i32, i32
  }
  func.func @transform_15(%arg0: i32) -> (i32, i32) {
    %c0_i32 = arith.constant 0 : i32
    %c0_i32_0 = arith.constant 0 : i32
    %c0_i32_1 = arith.constant 0 : i32
    return %c0_i32, %c0_i32_0 : i32, i32
  }
  func.func @transform_16(%arg0: i32) -> (i32, i32) {
    %c0_i32 = arith.constant 0 : i32
    %c0_i32_0 = arith.constant 0 : i32
    %c0_i32_1 = arith.constant 0 : i32
    return %c0_i32, %c0_i32_0 : i32, i32
  }
  func.func @transform_17(%arg0: i32) -> (i32, i32) {
    %c0_i32 = arith.constant 0 : i32
    %c0_i32_0 = arith.constant 0 : i32
    %c0_i32_1 = arith.constant 0 : i32
    return %c0_i32, %c0_i32_0 : i32, i32
  }
  func.func @transform_18(%arg0: i32) -> (i32, i32, i32) {
    %c0_i32 = arith.constant 0 : i32
    %c0_i32_0 = arith.constant 0 : i32
    %c0_i32_1 = arith.constant 0 : i32
    return %arg0, %c0_i32, %c0_i32_0 : i32, i32, i32
  }
}

</mosaic_0001>

<llo_original>
// kernel: decoder_block.1
$region0: #{decoder_block.1}
  #allocation0 [shape = 'u32[]', space=smem, size = 0x4, offset = 0x4, fixed_abs, tag = 'smem constant byte address 0x4 - core index']
  #allocation1 [shape = 'u32[144,128]{1,0:T(1,128)}', space=vmem, size = 0x12000, scoped, tag = 'internal scratch']
  %s0 = inlined_call_operand.vmem [shape: f32[2,8,128], index: 0, kind: input, shape index: {}]
  %s1 = inlined_call_operand.vmem [shape: f32[2,8,128], index: 1, kind: input, shape index: {}]
  %s2 = inlined_call_operand.vmem [shape: f32[8,8], index: 2, kind: input, shape index: {}]
  %s3 = inlined_call_operand.vmem [shape: bf16[128,384], index: 3, kind: input, shape index: {}]
  %s4 = inlined_call_operand.vmem [shape: bf16[128,128], index: 4, kind: input, shape index: {}]
  %s5 = inlined_call_operand.vmem [shape: bf16[128,128], index: 5, kind: input, shape index: {}]
  %s6 = inlined_call_operand.vmem [shape: bf16[128,256], index: 6, kind: input, shape index: {}]
  %s7 = inlined_call_operand.vmem [shape: bf16[128,128], index: 7, kind: input, shape index: {}]
  %s8 = inlined_call_operand.vmem [shape: f32[1,128], index: 8, kind: input, shape index: {}]
  %s9 = inlined_call_operand.vmem [shape: f32[1,128], index: 9, kind: input, shape index: {}]
  %s10 = inlined_call_operand.vmem [shape: f32[1,128], index: 10, kind: input, shape index: {}]
  %s11 = inlined_call_operand.vmem [shape: f32[1,128], index: 11, kind: input, shape index: {}]
  %s12 = inlined_call_operand.vmem [shape: f32[1,128], index: 12, kind: input, shape index: {}]
  %s13 = inlined_call_operand.vmem [shape: f32[1,128], index: 13, kind: input, shape index: {}]
  %s14 = inlined_call_operand.vmem [shape: bf16[128,256], index: 14, kind: input, shape index: {}]
  %s15 = inlined_call_operand.vmem [shape: f32[1,256], index: 15, kind: input, shape index: {}]
  %s16 = inlined_call_operand.vmem [shape: bf16[256,128], index: 16, kind: input, shape index: {}]
  %s17 = inlined_call_operand.vmem [shape: f32[1,128], index: 17, kind: input, shape index: {}]
  %s18 = inlined_call_operand.hbm [shape: f32[2,8,128], index: 18, kind: output, shape index: {}]
  %s19 = sld [smem:[#allocation0]]
  $region105: #{decoder_block.1} parent=0
    _
  %s21 = ssub.s32 1, %s19
  %s22 = scalar_select 0, %s21, %s19
  $region1: #{decoder_block.1} parent=0
    #allocation2 [shape = 'u8[8192]{0}', space=vmem, size = 0x2000, scoped, tag = 'output window, operand 0']
    #allocation3 [shape = 's32[2]{0}', space=sflag, size = 0x8, scoped, tag = 'scoped memory for decoder_block.1']
    %23 = vsyncpa [#allocation3], 0
    %s24 = scalar_lea.sflag [#allocation3], 1
    %25 = vsyncpa %s24, 0
    loop: start=0, step=1, limit=4
    $region2: #{decoder_block.1} parent=1 // loop_pre_header
      _
    $region3: #{decoder_block.1} parent=1 // loop_header
      %s27 = sphi 0, %s31
      %p28 = scmp.ge.s32.totalorder %s27, 4
      %s37 = sphi 0, %s39
      %s40 = sphi 0, %s37
      %s41 = sphi 0, %s40
      %s57 = sphi 0, %s41
      %s63 = sphi 0, %s65
      %s66 = sphi 0, %s63
      %s67 = sphi 0, %s66
      %s83 = sphi 0, %s67
      %s87 = sphi 0, %s87
      %s89 = sphi 0, %s87
      %s90 = sphi 0, %s89
      %s104 = sphi 0, %s90
      %s108 = sphi 0, %s108
      %s110 = sphi 0, %s108
      %s111 = sphi 0, %s110
      %s125 = sphi 0, %s111
      %s129 = sphi 0, %s129
      %s131 = sphi 0, %s129
      %s132 = sphi 0, %s131
      %s146 = sphi 0, %s132
      %s150 = sphi 0, %s150
      %s152 = sphi 0, %s150
      %s153 = sphi 0, %s152
      %s167 = sphi 0, %s153
      %s171 = sphi 0, %s171
      %s173 = sphi 0, %s171
      %s174 = sphi 0, %s173
      %s188 = sphi 0, %s174
      %s192 = sphi 0, %s192
      %s194 = sphi 0, %s192
      %s195 = sphi 0, %s194
      %s209 = sphi 0, %s195
      %s213 = sphi 0, %s213
      %s215 = sphi 0, %s213
      %s216 = sphi 0, %s215
      %s230 = sphi 0, %s216
      %s234 = sphi 0, %s234
      %s236 = sphi 0, %s234
      %s237 = sphi 0, %s236
      %s251 = sphi 0, %s237
      %s255 = sphi 0, %s255
      %s257 = sphi 0, %s255
      %s258 = sphi 0, %s257
      %s272 = sphi 0, %s258
      %s276 = sphi 0, %s276
      %s278 = sphi 0, %s276
      %s279 = sphi 0, %s278
      %s293 = sphi 0, %s279
      %s297 = sphi 0, %s297
      %s299 = sphi 0, %s297
      %s300 = sphi 0, %s299
      %s314 = sphi 0, %s300
      %s318 = sphi 0, %s318
      %s320 = sphi 0, %s318
      %s321 = sphi 0, %s320
      %s335 = sphi 0, %s321
      %s339 = sphi 0, %s339
      %s341 = sphi 0, %s339
      %s342 = sphi 0, %s341
      %s356 = sphi 0, %s342
      %s360 = sphi 0, %s360
      %s362 = sphi 0, %s360
      %s363 = sphi 0, %s362
      %s377 = sphi 0, %s363
      %s381 = sphi 0, %s381
      %s383 = sphi 0, %s381
      %s384 = sphi 0, %s383
      %s398 = sphi 0, %s384
      %s402 = sphi 0, %s402
      %s404 = sphi 0, %s402
      %s405 = sphi 0, %s404
      %s419 = sphi 0, %s405
      %s425 = sphi 0, %s427
      %s428 = sphi 0, %s425
      %s429 = sphi 0, %s428
      %s445 = sphi 0, %s429
    $region4: #{decoder_block.1} parent=1 // loop_header_branch
      %30 = sbr.rel (%p28) target = $region8
    $region5: #{decoder_block.1} parent=1 // loop_body
      %s32 = ssub.s32 %s27, 1
      %s33 = ssub.s32 %s27, 2
      %s34 = sadd.s32 %s27, 1
      %s35 = ssub.s32 %s27, %s34
      %p36 = scmp.eq.s32.totalorder %s35, 0
      %s38 = sadd.s32 %s37, 1
      %s39 = scalar_select %p36, %s37, %s38
      %p42 = pneg %p36
      %p43 = scmp.eq.s32.totalorder %s27, 1
      %p44 = por %p42, %p43
      %p45 = scmp.ne.s32.totalorder %s37, %s40
      %p46 = scmp.eq.s32.totalorder %s27, 0
      %p47 = por %p45, %p46
      %p48 = scmp.ne.s32.totalorder %s37, %s40
      %p49 = scmp.eq.s32.totalorder %s32, 1
      %p50 = por %p48, %p49
      %p51 = scmp.ne.s32.totalorder %s40, %s41
      %p52 = scmp.eq.s32.totalorder %s32, 0
      %p53 = por %p51, %p52
      %p54 = scmp.ne.s32.totalorder %s40, %s41
      %p55 = scmp.eq.s32.totalorder %s33, 1
      %p56 = por %p54, %p55
      %p58 = scmp.ne.s32.totalorder %s41, %s57
      %p59 = scmp.eq.s32.totalorder %s33, 0
      %p60 = por %p58, %p59
      %s61 = ssub.s32 %s27, %s34
      %p62 = scmp.eq.s32.totalorder %s61, 0
      %s64 = sadd.s32 %s63, 1
      %s65 = scalar_select %p62, %s63, %s64
      %p68 = pneg %p62
      %p69 = scmp.eq.s32.totalorder %s27, 1
      %p70 = por %p68, %p69
      %p71 = scmp.ne.s32.totalorder %s63, %s66
      %p72 = scmp.eq.s32.totalorder %s27, 0
      %p73 = por %p71, %p72
      %p74 = scmp.ne.s32.totalorder %s63, %s66
      %p75 = scmp.eq.s32.totalorder %s32, 1
      %p76 = por %p74, %p75
      %p77 = scmp.ne.s32.totalorder %s66, %s67
      %p78 = scmp.eq.s32.totalorder %s32, 0
      %p79 = por %p77, %p78
      %p80 = scmp.ne.s32.totalorder %s66, %s67
      %p81 = scmp.eq.s32.totalorder %s33, 1
      %p82 = por %p80, %p81
      %p84 = scmp.ne.s32.totalorder %s67, %s83
      %p85 = scmp.eq.s32.totalorder %s33, 0
      %p86 = por %p84, %p85
      %s88 = sadd.s32 %s87, 1
      %p91 = scmp.eq.s32.totalorder %s27, 1
      %p92 = scmp.ne.s32.totalorder %s87, %s89
      %p93 = scmp.eq.s32.totalorder %s27, 0
      %p94 = por %p92, %p93
      %p95 = scmp.ne.s32.totalorder %s87, %s89
      %p96 = scmp.eq.s32.totalorder %s32, 1
      %p97 = por %p95, %p96
      %p98 = scmp.ne.s32.totalorder %s89, %s90
      %p99 = scmp.eq.s32.totalorder %s32, 0
      %p100 = por %p98, %p99
      %p101 = scmp.ne.s32.totalorder %s89, %s90
      %p102 = scmp.eq.s32.totalorder %s33, 1
      %p103 = por %p101, %p102
      %p105 = scmp.ne.s32.totalorder %s90, %s104
      %p106 = scmp.eq.s32.totalorder %s33, 0
      %p107 = por %p105, %p106
      %s109 = sadd.s32 %s108, 1
      %p112 = scmp.eq.s32.totalorder %s27, 1
      %p113 = scmp.ne.s32.totalorder %s108, %s110
      %p114 = scmp.eq.s32.totalorder %s27, 0
      %p115 = por %p113, %p114
      %p116 = scmp.ne.s32.totalorder %s108, %s110
      %p117 = scmp.eq.s32.totalorder %s32, 1
      %p118 = por %p116, %p117
      %p119 = scmp.ne.s32.totalorder %s110, %s111
      %p120 = scmp.eq.s32.totalorder %s32, 0
      %p121 = por %p119, %p120
      %p122 = scmp.ne.s32.totalorder %s110, %s111
      %p123 = scmp.eq.s32.totalorder %s33, 1
      %p124 = por %p122, %p123
      %p126 = scmp.ne.s32.totalorder %s111, %s125
      %p127 = scmp.eq.s32.totalorder %s33, 0
      %p128 = por %p126, %p127
      %s130 = sadd.s32 %s129, 1
      %p133 = scmp.eq.s32.totalorder %s27, 1
      %p134 = scmp.ne.s32.totalorder %s129, %s131
      %p135 = scmp.eq.s32.totalorder %s27, 0
      %p136 = por %p134, %p135
      %p137 = scmp.ne.s32.totalorder %s129, %s131
      %p138 = scmp.eq.s32.totalorder %s32, 1
      %p139 = por %p137, %p138
      %p140 = scmp.ne.s32.totalorder %s131, %s132
      %p141 = scmp.eq.s32.totalorder %s32, 0
      %p142 = por %p140, %p141
      %p143 = scmp.ne.s32.totalorder %s131, %s132
      %p144 = scmp.eq.s32.totalorder %s33, 1
      %p145 = por %p143, %p144
      %p147 = scmp.ne.s32.totalorder %s132, %s146
      %p148 = scmp.eq.s32.totalorder %s33, 0
      %p149 = por %p147, %p148
      %s151 = sadd.s32 %s150, 1
      %p154 = scmp.eq.s32.totalorder %s27, 1
      %p155 = scmp.ne.s32.totalorder %s150, %s152
      %p156 = scmp.eq.s32.totalorder %s27, 0
      %p157 = por %p155, %p156
      %p158 = scmp.ne.s32.totalorder %s150, %s152
      %p159 = scmp.eq.s32.totalorder %s32, 1
      %p160 = por %p158, %p159
      %p161 = scmp.ne.s32.totalorder %s152, %s153
      %p162 = scmp.eq.s32.totalorder %s32, 0
      %p163 = por %p161, %p162
      %p164 = scmp.ne.s32.totalorder %s152, %s153
      %p165 = scmp.eq.s32.totalorder %s33, 1
      %p166 = por %p164, %p165
      %p168 = scmp.ne.s32.totalorder %s153, %s167
      %p169 = scmp.eq.s32.totalorder %s33, 0
      %p170 = por %p168, %p169
      %s172 = sadd.s32 %s171, 1
      %p175 = scmp.eq.s32.totalorder %s27, 1
      %p176 = scmp.ne.s32.totalorder %s171, %s173
      %p177 = scmp.eq.s32.totalorder %s27, 0
      %p178 = por %p176, %p177
      %p179 = scmp.ne.s32.totalorder %s171, %s173
      %p180 = scmp.eq.s32.totalorder %s32, 1
      %p181 = por %p179, %p180
      %p182 = scmp.ne.s32.totalorder %s173, %s174
      %p183 = scmp.eq.s32.totalorder %s32, 0
      %p184 = por %p182, %p183
      %p185 = scmp.ne.s32.totalorder %s173, %s174
      %p186 = scmp.eq.s32.totalorder %s33, 1
      %p187 = por %p185, %p186
      %p189 = scmp.ne.s32.totalorder %s174, %s188
      %p190 = scmp.eq.s32.totalorder %s33, 0
      %p191 = por %p189, %p190
      %s193 = sadd.s32 %s192, 1
      %p196 = scmp.eq.s32.totalorder %s27, 1
      %p197 = scmp.ne.s32.totalorder %s192, %s194
      %p198 = scmp.eq.s32.totalorder %s27, 0
      %p199 = por %p197, %p198
      %p200 = scmp.ne.s32.totalorder %s192, %s194
      %p201 = scmp.eq.s32.totalorder %s32, 1
      %p202 = por %p200, %p201
      %p203 = scmp.ne.s32.totalorder %s194, %s195
      %p204 = scmp.eq.s32.totalorder %s32, 0
      %p205 = por %p203, %p204
      %p206 = scmp.ne.s32.totalorder %s194, %s195
      %p207 = scmp.eq.s32.totalorder %s33, 1
      %p208 = por %p206, %p207
      %p210 = scmp.ne.s32.totalorder %s195, %s209
      %p211 = scmp.eq.s32.totalorder %s33, 0
      %p212 = por %p210, %p211
      %s214 = sadd.s32 %s213, 1
      %p217 = scmp.eq.s32.totalorder %s27, 1
      %p218 = scmp.ne.s32.totalorder %s213, %s215
      %p219 = scmp.eq.s32.totalorder %s27, 0
      %p220 = por %p218, %p219
      %p221 = scmp.ne.s32.totalorder %s213, %s215
      %p222 = scmp.eq.s32.totalorder %s32, 1
      %p223 = por %p221, %p222
      %p224 = scmp.ne.s32.totalorder %s215, %s216
      %p225 = scmp.eq.s32.totalorder %s32, 0
      %p226 = por %p224, %p225
      %p227 = scmp.ne.s32.totalorder %s215, %s216
      %p228 = scmp.eq.s32.totalorder %s33, 1
      %p229 = por %p227, %p228
      %p231 = scmp.ne.s32.totalorder %s216, %s230
      %p232 = scmp.eq.s32.totalorder %s33, 0
      %p233 = por %p231, %p232
      %s235 = sadd.s32 %s234, 1
      %p238 = scmp.eq.s32.totalorder %s27, 1
      %p239 = scmp.ne.s32.totalorder %s234, %s236
      %p240 = scmp.eq.s32.totalorder %s27, 0
      %p241 = por %p239, %p240
      %p242 = scmp.ne.s32.totalorder %s234, %s236
      %p243 = scmp.eq.s32.totalorder %s32, 1
      %p244 = por %p242, %p243
      %p245 = scmp.ne.s32.totalorder %s236, %s237
      %p246 = scmp.eq.s32.totalorder %s32, 0
      %p247 = por %p245, %p246
      %p248 = scmp.ne.s32.totalorder %s236, %s237
      %p249 = scmp.eq.s32.totalorder %s33, 1
      %p250 = por %p248, %p249
      %p252 = scmp.ne.s32.totalorder %s237, %s251
      %p253 = scmp.eq.s32.totalorder %s33, 0
      %p254 = por %p252, %p253
      %s256 = sadd.s32 %s255, 1
      %p259 = scmp.eq.s32.totalorder %s27, 1
      %p260 = scmp.ne.s32.totalorder %s255, %s257
      %p261 = scmp.eq.s32.totalorder %s27, 0
      %p262 = por %p260, %p261
      %p263 = scmp.ne.s32.totalorder %s255, %s257
      %p264 = scmp.eq.s32.totalorder %s32, 1
      %p265 = por %p263, %p264
      %p266 = scmp.ne.s32.totalorder %s257, %s258
      %p267 = scmp.eq.s32.totalorder %s32, 0
      %p268 = por %p266, %p267
      %p269 = scmp.ne.s32.totalorder %s257, %s258
      %p270 = scmp.eq.s32.totalorder %s33, 1
      %p271 = por %p269, %p270
      %p273 = scmp.ne.s32.totalorder %s258, %s272
      %p274 = scmp.eq.s32.totalorder %s33, 0
      %p275 = por %p273, %p274
      %s277 = sadd.s32 %s276, 1
      %p280 = scmp.eq.s32.totalorder %s27, 1
      %p281 = scmp.ne.s32.totalorder %s276, %s278
      %p282 = scmp.eq.s32.totalorder %s27, 0
      %p283 = por %p281, %p282
      %p284 = scmp.ne.s32.totalorder %s276, %s278
      %p285 = scmp.eq.s32.totalorder %s32, 1
      %p286 = por %p284, %p285
      %p287 = scmp.ne.s32.totalorder %s278, %s279
      %p288 = scmp.eq.s32.totalorder %s32, 0
      %p289 = por %p287, %p288
      %p290 = scmp.ne.s32.totalorder %s278, %s279
      %p291 = scmp.eq.s32.totalorder %s33, 1
      %p292 = por %p290, %p291
      %p294 = scmp.ne.s32.totalorder %s279, %s293
      %p295 = scmp.eq.s32.totalorder %s33, 0
      %p296 = por %p294, %p295
      %s298 = sadd.s32 %s297, 1
      %p301 = scmp.eq.s32.totalorder %s27, 1
      %p302 = scmp.ne.s32.totalorder %s297, %s299
      %p303 = scmp.eq.s32.totalorder %s27, 0
      %p304 = por %p302, %p303
      %p305 = scmp.ne.s32.totalorder %s297, %s299
      %p306 = scmp.eq.s32.totalorder %s32, 1
      %p307 = por %p305, %p306
      %p308 = scmp.ne.s32.totalorder %s299, %s300
      %p309 = scmp.eq.s32.totalorder %s32, 0
      %p310 = por %p308, %p309
      %p311 = scmp.ne.s32.totalorder %s299, %s300
      %p312 = scmp.eq.s32.totalorder %s33, 1
      %p313 = por %p311, %p312
      %p315 = scmp.ne.s32.totalorder %s300, %s314
      %p316 = scmp.eq.s32.totalorder %s33, 0
      %p317 = por %p315, %p316
      %s319 = sadd.s32 %s318, 1
      %p322 = scmp.eq.s32.totalorder %s27, 1
      %p323 = scmp.ne.s32.totalorder %s318, %s320
      %p324 = scmp.eq.s32.totalorder %s27, 0
      %p325 = por %p323, %p324
      %p326 = scmp.ne.s32.totalorder %s318, %s320
      %p327 = scmp.eq.s32.totalorder %s32, 1
      %p328 = por %p326, %p327
      %p329 = scmp.ne.s32.totalorder %s320, %s321
      %p330 = scmp.eq.s32.totalorder %s32, 0
      %p331 = por %p329, %p330
      %p332 = scmp.ne.s32.totalorder %s320, %s321
      %p333 = scmp.eq.s32.totalorder %s33, 1
      %p334 = por %p332, %p333
      %p336 = scmp.ne.s32.totalorder %s321, %s335
      %p337 = scmp.eq.s32.totalorder %s33, 0
      %p338 = por %p336, %p337
      %s340 = sadd.s32 %s339, 1
      %p343 = scmp.eq.s32.totalorder %s27, 1
      %p344 = scmp.ne.s32.totalorder %s339, %s341
      %p345 = scmp.eq.s32.totalorder %s27, 0
      %p346 = por %p344, %p345
      %p347 = scmp.ne.s32.totalorder %s339, %s341
      %p348 = scmp.eq.s32.totalorder %s32, 1
      %p349 = por %p347, %p348
      %p350 = scmp.ne.s32.totalorder %s341, %s342
      %p351 = scmp.eq.s32.totalorder %s32, 0
      %p352 = por %p350, %p351
      %p353 = scmp.ne.s32.totalorder %s341, %s342
      %p354 = scmp.eq.s32.totalorder %s33, 1
      %p355 = por %p353, %p354
      %p357 = scmp.ne.s32.totalorder %s342, %s356
      %p358 = scmp.eq.s32.totalorder %s33, 0
      %p359 = por %p357, %p358
      %s361 = sadd.s32 %s360, 1
      %p364 = scmp.eq.s32.totalorder %s27, 1
      %p365 = scmp.ne.s32.totalorder %s360, %s362
      %p366 = scmp.eq.s32.totalorder %s27, 0
      %p367 = por %p365, %p366
      %p368 = scmp.ne.s32.totalorder %s360, %s362
      %p369 = scmp.eq.s32.totalorder %s32, 1
      %p370 = por %p368, %p369
      %p371 = scmp.ne.s32.totalorder %s362, %s363
      %p372 = scmp.eq.s32.totalorder %s32, 0
      %p373 = por %p371, %p372
      %p374 = scmp.ne.s32.totalorder %s362, %s363
      %p375 = scmp.eq.s32.totalorder %s33, 1
      %p376 = por %p374, %p375
      %p378 = scmp.ne.s32.totalorder %s363, %s377
      %p379 = scmp.eq.s32.totalorder %s33, 0
      %p380 = por %p378, %p379
      %s382 = sadd.s32 %s381, 1
      %p385 = scmp.eq.s32.totalorder %s27, 1
      %p386 = scmp.ne.s32.totalorder %s381, %s383
      %p387 = scmp.eq.s32.totalorder %s27, 0
      %p388 = por %p386, %p387
      %p389 = scmp.ne.s32.totalorder %s381, %s383
      %p390 = scmp.eq.s32.totalorder %s32, 1
      %p391 = por %p389, %p390
      %p392 = scmp.ne.s32.totalorder %s383, %s384
      %p393 = scmp.eq.s32.totalorder %s32, 0
      %p394 = por %p392, %p393
      %p395 = scmp.ne.s32.totalorder %s383, %s384
      %p396 = scmp.eq.s32.totalorder %s33, 1
      %p397 = por %p395, %p396
      %p399 = scmp.ne.s32.totalorder %s384, %s398
      %p400 = scmp.eq.s32.totalorder %s33, 0
      %p401 = por %p399, %p400
      %s403 = sadd.s32 %s402, 1
      %p406 = scmp.eq.s32.totalorder %s27, 1
      %p407 = scmp.ne.s32.totalorder %s402, %s404
      %p408 = scmp.eq.s32.totalorder %s27, 0
      %p409 = por %p407, %p408
      %p410 = scmp.ne.s32.totalorder %s402, %s404
      %p411 = scmp.eq.s32.totalorder %s32, 1
      %p412 = por %p410, %p411
      %p413 = scmp.ne.s32.totalorder %s404, %s405
      %p414 = scmp.eq.s32.totalorder %s32, 0
      %p415 = por %p413, %p414
      %p416 = scmp.ne.s32.totalorder %s404, %s405
      %p417 = scmp.eq.s32.totalorder %s33, 1
      %p418 = por %p416, %p417
      %p420 = scmp.ne.s32.totalorder %s405, %s419
      %p421 = scmp.eq.s32.totalorder %s33, 0
      %p422 = por %p420, %p421
      %s423 = ssub.s32 %s27, %s34
      %p424 = scmp.eq.s32.totalorder %s423, 0
      %s426 = sadd.s32 %s425, 1
      %s427 = scalar_select %p424, %s425, %s426
      %p430 = pneg %p424
      %p431 = scmp.eq.s32.totalorder %s27, 1
      %p432 = por %p430, %p431
      %p433 = scmp.ne.s32.totalorder %s425, %s428
      %p434 = scmp.eq.s32.totalorder %s27, 0
      %p435 = por %p433, %p434
      %p436 = scmp.ne.s32.totalorder %s425, %s428
      %p437 = scmp.eq.s32.totalorder %s32, 1
      %p438 = por %p436, %p437
      %p439 = scmp.ne.s32.totalorder %s428, %s429
      %p440 = scmp.eq.s32.totalorder %s32, 0
      %p441 = por %p439, %p440
      %p442 = scmp.ne.s32.totalorder %s428, %s429
      %p443 = scmp.eq.s32.totalorder %s33, 1
      %p444 = por %p442, %p443
      %p446 = scmp.ne.s32.totalorder %s429, %s445
      %p447 = scmp.eq.s32.totalorder %s33, 0
      %p448 = por %p446, %p447
      %p449 = scmp.le.s32.totalorder 1, %s27
      %p450 = scmp.lt.s32.totalorder %s27, 3
      %p451 = pnand %p449, %p450
      %p452 = pneg %p451
      // Predicated region
      $region9: #{decoder_block.1} parent=5 // pred_check
        _
      $region10: #{decoder_block.1} parent=5 // pred_check_branch
        %454 = sbr.rel (%p451) target = $region12
      $region11: #{decoder_block.1} parent=5 // pred_region
        %s455 = ssub.s32 %s27, 1
        // Predicated region
        $region13: #{decoder_block.1} parent=11 // pred_check
          %p456 = pneg %p100
        $region14: #{decoder_block.1} parent=11 // pred_check_branch
          %458 = sbr.rel (%p456) target = $region16
        $region15: #{decoder_block.1} parent=11 // pred_region
          _
        $region16: #{decoder_block.1} parent=11 // pred_fallthru
          _
        // Predicated region
        $region17: #{decoder_block.1} parent=11 // pred_check
          %p459 = pneg %p121
        $region18: #{decoder_block.1} parent=11 // pred_check_branch
          %461 = sbr.rel (%p459) target = $region20
        $region19: #{decoder_block.1} parent=11 // pred_region
          _
        $region20: #{decoder_block.1} parent=11 // pred_fallthru
          _
        // Predicated region
        $region21: #{decoder_block.1} parent=11 // pred_check
          %p462 = pneg %p142
        $region22: #{decoder_block.1} parent=11 // pred_check_branch
          %464 = sbr.rel (%p462) target = $region24
        $region23: #{decoder_block.1} parent=11 // pred_region
          _
        $region24: #{decoder_block.1} parent=11 // pred_fallthru
          _
        // Predicated region
        $region25: #{decoder_block.1} parent=11 // pred_check
          %p465 = pneg %p163
        $region26: #{decoder_block.1} parent=11 // pred_check_branch
          %467 = sbr.rel (%p465) target = $region28
        $region27: #{decoder_block.1} parent=11 // pred_region
          _
        $region28: #{decoder_block.1} parent=11 // pred_fallthru
          _
        // Predicated region
        $region29: #{decoder_block.1} parent=11 // pred_check
          %p468 = pneg %p184
        $region30: #{decoder_block.1} parent=11 // pred_check_branch
          %470 = sbr.rel (%p468) target = $region32
        $region31: #{decoder_block.1} parent=11 // pred_region
          _
        $region32: #{decoder_block.1} parent=11 // pred_fallthru
          _
        // Predicated region
        $region33: #{decoder_block.1} parent=11 // pred_check
          %p471 = pneg %p205
        $region34: #{decoder_block.1} parent=11 // pred_check_branch
          %473 = sbr.rel (%p471) target = $region36
        $region35: #{decoder_block.1} parent=11 // pred_region
          _
        $region36: #{decoder_block.1} parent=11 // pred_fallthru
          _
        // Predicated region
        $region37: #{decoder_block.1} parent=11 // pred_check
          %p474 = pneg %p226
        $region38: #{decoder_block.1} parent=11 // pred_check_branch
          %476 = sbr.rel (%p474) target = $region40
        $region39: #{decoder_block.1} parent=11 // pred_region
          _
        $region40: #{decoder_block.1} parent=11 // pred_fallthru
          _
        // Predicated region
        $region41: #{decoder_block.1} parent=11 // pred_check
          %p477 = pneg %p247
        $region42: #{decoder_block.1} parent=11 // pred_check_branch
          %479 = sbr.rel (%p477) target = $region44
        $region43: #{decoder_block.1} parent=11 // pred_region
          _
        $region44: #{decoder_block.1} parent=11 // pred_fallthru
          _
        // Predicated region
        $region45: #{decoder_block.1} parent=11 // pred_check
          %p480 = pneg %p268
        $region46: #{decoder_block.1} parent=11 // pred_check_branch
          %482 = sbr.rel (%p480) target = $region48
        $region47: #{decoder_block.1} parent=11 // pred_region
          _
        $region48: #{decoder_block.1} parent=11 // pred_fallthru
          _
        // Predicated region
        $region49: #{decoder_block.1} parent=11 // pred_check
          %p483 = pneg %p289
        $region50: #{decoder_block.1} parent=11 // pred_check_branch
          %485 = sbr.rel (%p483) target = $region52
        $region51: #{decoder_block.1} parent=11 // pred_region
          _
        $region52: #{decoder_block.1} parent=11 // pred_fallthru
          _
        // Predicated region
        $region53: #{decoder_block.1} parent=11 // pred_check
          %p486 = pneg %p310
        $region54: #{decoder_block.1} parent=11 // pred_check_branch
          %488 = sbr.rel (%p486) target = $region56
        $region55: #{decoder_block.1} parent=11 // pred_region
          _
        $region56: #{decoder_block.1} parent=11 // pred_fallthru
          _
        // Predicated region
        $region57: #{decoder_block.1} parent=11 // pred_check
          %p489 = pneg %p331
        $region58: #{decoder_block.1} parent=11 // pred_check_branch
          %491 = sbr.rel (%p489) target = $region60
        $region59: #{decoder_block.1} parent=11 // pred_region
          _
        $region60: #{decoder_block.1} parent=11 // pred_fallthru
          _
        // Predicated region
        $region61: #{decoder_block.1} parent=11 // pred_check
          %p492 = pneg %p352
        $region62: #{decoder_block.1} parent=11 // pred_check_branch
          %494 = sbr.rel (%p492) target = $region64
        $region63: #{decoder_block.1} parent=11 // pred_region
          _
        $region64: #{decoder_block.1} parent=11 // pred_fallthru
          _
        // Predicated region
        $region65: #{decoder_block.1} parent=11 // pred_check
          %p495 = pneg %p373
        $region66: #{decoder_block.1} parent=11 // pred_check_branch
          %497 = sbr.rel (%p495) target = $region68
        $region67: #{decoder_block.1} parent=11 // pred_region
          _
        $region68: #{decoder_block.1} parent=11 // pred_fallthru
          _
        // Predicated region
        $region69: #{decoder_block.1} parent=11 // pred_check
          %p498 = pneg %p394
        $region70: #{decoder_block.1} parent=11 // pred_check_branch
          %500 = sbr.rel (%p498) target = $region72
        $region71: #{decoder_block.1} parent=11 // pred_region
          _
        $region72: #{decoder_block.1} parent=11 // pred_fallthru
          _
        // Predicated region
        $region73: #{decoder_block.1} parent=11 // pred_check
          %p501 = pneg %p415
        $region74: #{decoder_block.1} parent=11 // pred_check_branch
          %503 = sbr.rel (%p501) target = $region76
        $region75: #{decoder_block.1} parent=11 // pred_region
          _
        $region76: #{decoder_block.1} parent=11 // pred_fallthru
          _
      $region12: #{decoder_block.1} parent=5 // pred_fallthru
        _
      %p504 = scmp.lt.s32.totalorder %s27, 2
      // Predicated region
      $region77: #{decoder_block.1} parent=5 // pred_check
        %p505 = pneg %p504
      $region78: #{decoder_block.1} parent=5 // pred_check_branch
        %507 = sbr.rel (%p505) target = $region80
      $region79: #{decoder_block.1} parent=5 // pred_region
        // Predicated region
        $region81: #{decoder_block.1} parent=79 // pred_check
          %p508 = pneg %p47
        $region82: #{decoder_block.1} parent=79 // pred_check_branch
          %510 = sbr.rel (%p508) target = $region84
        $region83: #{decoder_block.1} parent=79 // pred_region
          %p511 = scmp.lt.s32.totalorder %s27, 1
          %s512 = scalar_select %p511, %s27, 1
          %s513 = smul.addr %s512, 8
          %s514 = scalar_lea.vmem %s0, %s513
        $region84: #{decoder_block.1} parent=79 // pred_fallthru
          _
        // Predicated region
        $region85: #{decoder_block.1} parent=79 // pred_check
          %p515 = pneg %p73
        $region86: #{decoder_block.1} parent=79 // pred_check_branch
          %517 = sbr.rel (%p515) target = $region88
        $region87: #{decoder_block.1} parent=79 // pred_region
          %p518 = scmp.lt.s32.totalorder %s27, 1
          %s519 = scalar_select %p518, %s27, 1
          %s520 = smul.addr %s519, 8
          %s521 = scalar_lea.vmem %s1, %s520
        $region88: #{decoder_block.1} parent=79 // pred_fallthru
          _
      $region80: #{decoder_block.1} parent=5 // pred_fallthru
        _
      %p522 = scmp.le.s32.totalorder 1, %s27
      %p523 = scmp.lt.s32.totalorder %s27, 3
      %p524 = pnand %p522, %p523
      %p525 = pneg %p524
      // Predicated region
      $region89: #{decoder_block.1} parent=5 // pred_check
        _
      $region90: #{decoder_block.1} parent=5 // pred_check_branch
        %527 = sbr.rel (%p524) target = $region92
      $region91: #{decoder_block.1} parent=5 // pred_region
        %s528 = ssub.s32 %s27, 1
        %p529 = scmp.lt.s32.totalorder %s32, 1
        %s530 = scalar_select %p529, %s32, 1
        %s531 = smul.addr %s530, 8
        %s532 = scalar_lea.vmem %s0, %s531
        %p533 = pneg %p53
        %p534 = pneg %p50
        %p535 = scmp.lt.s32.totalorder %s32, 1
        %s536 = scalar_select %p535, %s32, 1
        %s537 = smul.addr %s536, 8
        %s538 = scalar_lea.vmem %s1, %s537
        %p539 = pneg %p79
        %p540 = pneg %p76
        %p541 = pneg %p100
        %p542 = pneg %p97
        %p543 = pneg %p121
        %p544 = pneg %p118
        %p545 = pneg %p142
        %p546 = pneg %p139
        %p547 = pneg %p163
        %p548 = pneg %p160
        %p549 = pneg %p184
        %p550 = pneg %p181
        %p551 = pneg %p205
        %p552 = pneg %p202
        %p553 = pneg %p226
        %p554 = pneg %p223
        %p555 = pneg %p247
        %p556 = pneg %p244
        %p557 = pneg %p268
        %p558 = pneg %p265
        %p559 = pneg %p289
        %p560 = pneg %p286
        %p561 = pneg %p310
        %p562 = pneg %p307
        %p563 = pneg %p331
        %p564 = pneg %p328
        %p565 = pneg %p352
        %p566 = pneg %p349
        %p567 = pneg %p373
        %p568 = pneg %p370
        %p569 = pneg %p394
        %p570 = pneg %p391
        %p571 = pneg %p415
        %p572 = pneg %p412
        %p573 = pneg %p441
        %p574 = pneg %p438
        %s575 = sand.u32 %s428, 1
        %s576 = scalar_lea.sflag [#allocation3], %s575
        %s577 = sand.u32 %s428, 1
        %s578 = smul.addr %s577, 8
        %s579 = scalar_lea.vmem [#allocation2], %s578
        %p580 = scmp.lt.s32.totalorder %s32, 1
        %s581 = scalar_select %p580, %s32, 1
        %s582 = smul.addr %s581, 8
        %s583 = scalar_lea.vmem %s0, %s582
        %p584 = scmp.lt.s32.totalorder %s32, 1
        %s585 = scalar_select %p584, %s32, 1
        %s586 = smul.addr %s585, 8
        %s587 = scalar_lea.vmem %s1, %s586
        %v589 = vld [vmem:[%s583] sm:$0xff]
        %v590 = vld [vmem:[%s2] sm:$0xff]
        %v591 = vld [vmem:[%s8] sm:$0x1]
        %v592 = vld [vmem:[%s9] sm:$0x1]
        %593 = vadd.xlane.f32.xlu0 %v589
        %v594 = vpop.xlane.xlu0 %593
        %v595 = vrcp.pop 128.0
        %v596 = vmul.f32 %v594, %v595
        %v597 = vsub.f32 %v589, %v596
        %v598 = vmul.f32 %v597, %v597
        %599 = vadd.xlane.f32.xlu0 %v598
        %v600 = vpop.xlane.xlu0 %599
        %v601 = vmul.f32 %v600, %v595
        %v602 = vadd.f32 %v601, 1e-05
        %v603 = vrsqrt.pop %v602
        %v604 = vmul.f32 %v597, %v603
        %v606 = vlaneseq
        %v607 = vshrl.u32 %v606, 7
        %v608 = vsub.s32 0, %v607
        %v609 = vrot.slane %v591, %v608
        %v611 = vmul.f32 %v604, %v609
        %v613 = vlaneseq
        %v614 = vshrl.u32 %v613, 7
        %v615 = vsub.s32 0, %v614
        %v616 = vrot.slane %v592, %v615
        %v618 = vadd.f32 %v611, %v616
        %v619 = vpack.c.bf16 %v618, %v618
        %v620 = vld [vmem:[%s3] sm:$0xff]
        %v621 = vld [vmem:[%s3 + $0x8] sm:$0xf]
        %v622 = vld [vmem:[%s3 + $0xc] sm:$0xff]
        %v623 = vld [vmem:[%s3 + $0x14] sm:$0xf]
        %v624 = vld [vmem:[%s3 + $0x18] sm:$0xff]
        %v625 = vld [vmem:[%s3 + $0x20] sm:$0xf]
        %v626 = vld [vmem:[%s3 + $0x24] sm:$0xff]
        %v627 = vld [vmem:[%s3 + $0x2c] sm:$0xf]
        %v628 = vld [vmem:[%s3 + $0x30] sm:$0xff]
        %v629 = vld [vmem:[%s3 + $0x38] sm:$0xf]
        %v630 = vld [vmem:[%s3 + $0x3c] sm:$0xff]
        %v631 = vld [vmem:[%s3 + $0x44] sm:$0xf]
        %v632 = vld [vmem:[%s3 + $0x48] sm:$0xff]
        %v633 = vld [vmem:[%s3 + $0x50] sm:$0xf]
        %v634 = vld [vmem:[%s3 + $0x54] sm:$0xff]
        %v635 = vld [vmem:[%s3 + $0x5c] sm:$0xf]
        %v636 = vld [vmem:[%s3 + $0x60] sm:$0xff]
        %v637 = vld [vmem:[%s3 + $0x68] sm:$0xf]
        %v638 = vld [vmem:[%s3 + $0x6c] sm:$0xff]
        %v639 = vld [vmem:[%s3 + $0x74] sm:$0xf]
        %v640 = vld [vmem:[%s3 + $0x78] sm:$0xff]
        %v641 = vld [vmem:[%s3 + $0x80] sm:$0xf]
        %v642 = vld [vmem:[%s3 + $0x84] sm:$0xff]
        %v643 = vld [vmem:[%s3 + $0x8c] sm:$0xf]
        %v644 = vld [vmem:[%s3 + $0x90] sm:$0xff]
        %v645 = vld [vmem:[%s3 + $0x98] sm:$0xf]
        %v646 = vld [vmem:[%s3 + $0x9c] sm:$0xff]
        %v647 = vld [vmem:[%s3 + $0xa4] sm:$0xf]
        %v648 = vld [vmem:[%s3 + $0xa8] sm:$0xff]
        %v649 = vld [vmem:[%s3 + $0xb0] sm:$0xf]
        %v650 = vld [vmem:[%s3 + $0xb4] sm:$0xff]
        %v651 = vld [vmem:[%s3 + $0xbc] sm:$0xf]
        %v684 = vunpack.c.l.b16 %v620
        %v685 = vunpack.c.h.b16 %v620
        %v686 = vunpack.c.l.b16 %v621
        %v687 = vunpack.c.l.b16 %v622
        %v688 = vunpack.c.h.b16 %v622
        %v689 = vunpack.c.l.b16 %v623
        %v690 = vunpack.c.l.b16 %v624
        %v691 = vunpack.c.h.b16 %v624
        %v692 = vunpack.c.l.b16 %v625
        %v693 = vunpack.c.l.b16 %v626
        %v694 = vunpack.c.h.b16 %v626
        %v695 = vunpack.c.l.b16 %v627
        %v696 = vunpack.c.l.b16 %v628
        %v697 = vunpack.c.h.b16 %v628
        %v698 = vunpack.c.l.b16 %v629
        %v699 = vunpack.c.l.b16 %v630
        %v700 = vunpack.c.h.b16 %v630
        %v701 = vunpack.c.l.b16 %v631
        %v702 = vunpack.c.l.b16 %v632
        %v703 = vunpack.c.h.b16 %v632
        %v704 = vunpack.c.l.b16 %v633
        %v705 = vunpack.c.l.b16 %v634
        %v706 = vunpack.c.h.b16 %v634
        %v707 = vunpack.c.l.b16 %v635
        %v708 = vunpack.c.l.b16 %v636
        %v709 = vunpack.c.h.b16 %v636
        %v710 = vunpack.c.l.b16 %v637
        %v711 = vunpack.c.l.b16 %v638
        %v712 = vunpack.c.h.b16 %v638
        %v713 = vunpack.c.l.b16 %v639
        %v714 = vunpack.c.l.b16 %v640
        %v715 = vunpack.c.h.b16 %v640
        %v716 = vunpack.c.l.b16 %v641
        %v717 = vunpack.c.l.b16 %v642
        %v718 = vunpack.c.h.b16 %v642
        %v719 = vunpack.c.l.b16 %v643
        %v720 = vunpack.c.l.b16 %v644
        %v721 = vunpack.c.h.b16 %v644
        %v722 = vunpack.c.l.b16 %v645
        %v723 = vunpack.c.l.b16 %v646
        %v724 = vunpack.c.h.b16 %v646
        %v725 = vunpack.c.l.b16 %v647
        %v726 = vunpack.c.l.b16 %v648
        %v727 = vunpack.c.h.b16 %v648
        %v728 = vunpack.c.l.b16 %v649
        %v729 = vunpack.c.l.b16 %v650
        %v730 = vunpack.c.h.b16 %v650
        %v731 = vunpack.c.l.b16 %v651
        %v732 = vpack.c.b16 %v687, %v684
        %v733 = vpack.c.b16 %v688, %v685
        %v734 = vpack.c.b16 %v689, %v686
        %v735 = vpack.c.b16 %v693, %v690
        %v736 = vpack.c.b16 %v694, %v691
        %v737 = vpack.c.b16 %v695, %v692
        %v738 = vpack.c.b16 %v699, %v696
        %v739 = vpack.c.b16 %v700, %v697
        %v740 = vpack.c.b16 %v701, %v698
        %v741 = vpack.c.b16 %v705, %v702
        %v742 = vpack.c.b16 %v706, %v703
        %v743 = vpack.c.b16 %v707, %v704
        %v744 = vpack.c.b16 %v711, %v708
        %v745 = vpack.c.b16 %v712, %v709
        %v746 = vpack.c.b16 %v713, %v710
        %v747 = vpack.c.b16 %v717, %v714
        %v748 = vpack.c.b16 %v718, %v715
        %v749 = vpack.c.b16 %v719, %v716
        %v750 = vpack.c.b16 %v723, %v720
        %v751 = vpack.c.b16 %v724, %v721
        %v752 = vpack.c.b16 %v725, %v722
        %v753 = vpack.c.b16 %v729, %v726
        %v754 = vpack.c.b16 %v730, %v727
        %v755 = vpack.c.b16 %v731, %v728
        %780 = vmatprep.subr.bf16.mxu0 %v754
        %781 = vmatpush1.bf16.msra.mxu0 %v753
        %782 = vmatprep.subr.bf16.mxu0 %v751
        %783 = vmatpush1.bf16.msra.mxu0 %v750
        %784 = vmatprep.subr.bf16.mxu0 %v748
        %785 = vmatpush1.bf16.msra.mxu0 %v747
        %786 = vmatprep.subr.bf16.mxu0 %v745
        %787 = vmatpush1.bf16.msra.mxu0 %v744
        %788 = vmatprep.subr.bf16.mxu0 %v742
        %789 = vmatpush1.bf16.msra.mxu0 %v741
        %790 = vmatprep.subr.bf16.mxu0 %v739
        %791 = vmatpush1.bf16.msra.mxu0 %v738
        %792 = vmatprep.subr.bf16.mxu0 %v736
        %793 = vmatpush1.bf16.msra.mxu0 %v735
        %794 = vmatprep.subr.bf16.mxu0 %v733
        %795 = vmatpush1.bf16.msra.mxu0 %v732
        %796 = vmatprep.subr.bf16.mxu0 0
        %797 = vmatpush2.bf16.msra.mxu0 0
        %798 = vmatprep.subr.bf16.mxu0 0
        %799 = vmatpush2.bf16.msra.mxu0 0
        %800 = vmatprep.subr.bf16.mxu0 0
        %801 = vmatpush2.bf16.msra.mxu0 0
        %802 = vmatprep.subr.bf16.mxu0 0
        %803 = vmatpush2.bf16.msra.mxu0 0
        %804 = vmatprep.subr.bf16.mxu0 0
        %805 = vmatpush2.bf16.msra.mxu0 0
        %806 = vmatprep.subr.bf16.mxu0 0
        %807 = vmatpush2.bf16.msra.mxu0 0
        %808 = vmatprep.subr.bf16.mxu0 0
        %809 = vmatpush2.bf16.msra.mxu0 0
        %810 = vmatprep.subr.bf16.mxu0 0
        %811 = vmatpush2.bf16.msra.mxu0 0
        %812 = vmatprep.mubr.bf16.mxu0 0
        %813 = vmatmul.mubr.bf16.gmra.mxu0 %v619
        %v814 = vpop.f32.mrf.mxu0
        %v815 = vadd.f32 0.0, %v814
        %v816 = vpop.f32.mrf.mxu0
        %v817 = vadd.f32 0.0, %v816
        %v818 = vpop.f32.mrf.mxu0
        %v819 = vpop.f32.mrf.mxu0
        %820 = vdwg.mxu0
        %821 = vmatprep.subr.bf16.mxu0 0
        %822 = vmatpush1.bf16.msra.mxu0 %v755
        %823 = vmatprep.subr.bf16.mxu0 0
        %824 = vmatpush1.bf16.msra.mxu0 %v752
        %825 = vmatprep.subr.bf16.mxu0 0
        %826 = vmatpush1.bf16.msra.mxu0 %v749
        %827 = vmatprep.subr.bf16.mxu0 0
        %828 = vmatpush1.bf16.msra.mxu0 %v746
        %829 = vmatprep.subr.bf16.mxu0 0
        %830 = vmatpush1.bf16.msra.mxu0 %v743
        %831 = vmatprep.subr.bf16.mxu0 0
        %832 = vmatpush1.bf16.msra.mxu0 %v740
        %833 = vmatprep.subr.bf16.mxu0 0
        %834 = vmatpush1.bf16.msra.mxu0 %v737
        %835 = vmatprep.subr.bf16.mxu0 0
        %836 = vmatpush1.bf16.msra.mxu0 %v734
        %837 = vmatprep.subr.bf16.mxu0 0
        %838 = vmatpush2.bf16.msra.mxu0 0
        %839 = vmatprep.subr.bf16.mxu0 0
        %840 = vmatpush2.bf16.msra.mxu0 0
        %841 = vmatprep.subr.bf16.mxu0 0
        %842 = vmatpush2.bf16.msra.mxu0 0
        %843 = vmatprep.subr.bf16.mxu0 0
        %844 = vmatpush2.bf16.msra.mxu0 0
        %845 = vmatprep.subr.bf16.mxu0 0
        %846 = vmatpush2.bf16.msra.mxu0 0
        %847 = vmatprep.subr.bf16.mxu0 0
        %848 = vmatpush2.bf16.msra.mxu0 0
        %849 = vmatprep.subr.bf16.mxu0 0
        %850 = vmatpush2.bf16.msra.mxu0 0
        %851 = vmatprep.subr.bf16.mxu0 0
        %852 = vmatpush2.bf16.msra.mxu0 0
        %853 = vmatprep.mubr.bf16.mxu0 0
        %854 = vmatmul.mubr.bf16.gmra.mxu0 %v619
        %v855 = vpop.f32.mrf.mxu0
        %v856 = vadd.f32 0.0, %v855
        %v857 = vpop.f32.mrf.mxu0
        %v858 = vpop.f32.mrf.mxu0
        %v859 = vpop.f32.mrf.mxu0
        %860 = vdwg.mxu0
        %v861 = vmul.f32 %v815, 0.17677669
        %v862 = vpack.c.bf16 %v861, %v861
        %v863 = vpack.c.bf16 %v817, %v817
        %v864 = vpack.c.bf16 %v856, %v856
        %v865 = vld [vmem:[%s4] sm:$0xf]
        %v866 = vld [vmem:[%s4 + $0x4] sm:$0xf]
        %v867 = vld [vmem:[%s4 + $0x8] sm:$0xf]
        %v868 = vld [vmem:[%s4 + $0xc] sm:$0xf]
        %v869 = vld [vmem:[%s4 + $0x10] sm:$0xf]
        %v870 = vld [vmem:[%s4 + $0x14] sm:$0xf]
        %v871 = vld [vmem:[%s4 + $0x18] sm:$0xf]
        %v872 = vld [vmem:[%s4 + $0x1c] sm:$0xf]
        %v873 = vld [vmem:[%s4 + $0x20] sm:$0xf]
        %v874 = vld [vmem:[%s4 + $0x24] sm:$0xf]
        %v875 = vld [vmem:[%s4 + $0x28] sm:$0xf]
        %v876 = vld [vmem:[%s4 + $0x2c] sm:$0xf]
        %v877 = vld [vmem:[%s4 + $0x30] sm:$0xf]
        %v878 = vld [vmem:[%s4 + $0x34] sm:$0xf]
        %v879 = vld [vmem:[%s4 + $0x38] sm:$0xf]
        %v880 = vld [vmem:[%s4 + $0x3c] sm:$0xf]
        %vm881 = vcmask 261120
        %v883 = vsel %vm881, %v862, 0
        %v886 = vsel %vm881, %v863, 0
        %888 = vmatprep.subr.bf16.mxu0 0
        %889 = vmatpush1.bf16.xpose.msra.mxu0 0
        %890 = vmatprep.subr.bf16.mxu0 0
        %891 = vmatpush1.bf16.xpose.msra.mxu0 0
        %892 = vmatprep.subr.bf16.mxu0 0
        %893 = vmatpush1.bf16.xpose.msra.mxu0 0
        %894 = vmatprep.subr.bf16.mxu0 0
        %895 = vmatpush1.bf16.xpose.msra.mxu0 0
        %896 = vmatprep.subr.bf16.mxu0 0
        %897 = vmatpush1.bf16.xpose.msra.mxu0 0
        %898 = vmatprep.subr.bf16.mxu0 0
        %899 = vmatpush1.bf16.xpose.msra.mxu0 0
        %900 = vmatprep.subr.bf16.mxu0 0
        %901 = vmatpush1.bf16.xpose.msra.mxu0 0
        %902 = vmatprep.subr.bf16.mxu0 0
        %903 = vmatpush1.bf16.xpose.msra.mxu0 %v886
        %904 = vmatprep.subr.bf16.mxu0 0
        %905 = vmatpush2.bf16.xpose.msra.mxu0 0
        %906 = vmatprep.subr.bf16.mxu0 0
        %907 = vmatpush2.bf16.xpose.msra.mxu0 0
        %908 = vmatprep.subr.bf16.mxu0 0
        %909 = vmatpush2.bf16.xpose.msra.mxu0 0
        %910 = vmatprep.subr.bf16.mxu0 0
        %911 = vmatpush2.bf16.xpose.msra.mxu0 0
        %912 = vmatprep.subr.bf16.mxu0 0
        %913 = vmatpush2.bf16.xpose.msra.mxu0 0
        %914 = vmatprep.subr.bf16.mxu0 0
        %915 = vmatpush2.bf16.xpose.msra.mxu0 0
        %916 = vmatprep.subr.bf16.mxu0 0
        %917 = vmatpush2.bf16.xpose.msra.mxu0 0
        %918 = vmatprep.subr.bf16.mxu0 0
        %919 = vmatpush2.bf16.xpose.msra.mxu0 0
        %920 = vmatprep.mubr.bf16.mxu0 0
        %921 = vmatmul.mubr.bf16.gmra.mxu0 %v883
        %v922 = vpop.f32.mrf.mxu0
        %v923 = vadd.f32 %v590, %v922
        %v924 = vpop.f32.mrf.mxu0
        %v925 = vpop.f32.mrf.mxu0
        %v926 = vpop.f32.mrf.mxu0
        %927 = vdwg.mxu0
        %vm928 = vcmask 64512
        %v929 = vsel %vm928, %v923, -inf
        %930 = vmax.xlane.f32.xlu0 %v929
        %v931 = vpop.xlane.xlu0 %930
        %v932 = vsub.f32 %v923, %v931
        %v933 = vmul.f32 %v932, 1.442695
        %v934 = vpow.pop %v933
        %v935 = vsel %vm928, %v934, 0.0
        %936 = vadd.xlane.f32.xlu0 %v935
        %v937 = vpop.xlane.xlu0 %936
        %v938 = vpack.c.bf16 %v934, %v934
        %v940 = vsel %vm928, %v938, 0
        %vm942 = vcmask 1043456
        %v944 = vsel %vm942, %v864, 0
        %946 = vmatprep.subr.bf16.mxu0 0
        %947 = vmatpush1.bf16.msra.mxu0 0
        %948 = vmatprep.subr.bf16.mxu0 0
        %949 = vmatpush1.bf16.msra.mxu0 0
        %950 = vmatprep.subr.bf16.mxu0 0
        %951 = vmatpush1.bf16.msra.mxu0 0
        %952 = vmatprep.subr.bf16.mxu0 0
        %953 = vmatpush1.bf16.msra.mxu0 0
        %954 = vmatprep.subr.bf16.mxu0 0
        %955 = vmatpush1.bf16.msra.mxu0 0
        %956 = vmatprep.subr.bf16.mxu0 0
        %957 = vmatpush1.bf16.msra.mxu0 0
        %958 = vmatprep.subr.bf16.mxu0 0
        %959 = vmatpush1.bf16.msra.mxu0 0
        %960 = vmatprep.subr.bf16.mxu0 0
        %961 = vmatpush1.bf16.msra.mxu0 %v944
        %962 = vmatprep.subr.bf16.mxu0 0
        %963 = vmatpush2.bf16.msra.mxu0 0
        %964 = vmatprep.subr.bf16.mxu0 0
        %965 = vmatpush2.bf16.msra.mxu0 0
        %966 = vmatprep.subr.bf16.mxu0 0
        %967 = vmatpush2.bf16.msra.mxu0 0
        %968 = vmatprep.subr.bf16.mxu0 0
        %969 = vmatpush2.bf16.msra.mxu0 0
        %970 = vmatprep.subr.bf16.mxu0 0
        %971 = vmatpush2.bf16.msra.mxu0 0
        %972 = vmatprep.subr.bf16.mxu0 0
        %973 = vmatpush2.bf16.msra.mxu0 0
        %974 = vmatprep.subr.bf16.mxu0 0
        %975 = vmatpush2.bf16.msra.mxu0 0
        %976 = vmatprep.subr.bf16.mxu0 0
        %977 = vmatpush2.bf16.msra.mxu0 0
        %978 = vmatprep.mubr.bf16.mxu0 0
        %979 = vmatmul.mubr.bf16.gmra.mxu0 %v940
        %v980 = vpop.f32.mrf.mxu0
        %v981 = vadd.f32 0.0, %v980
        %v982 = vpop.f32.mrf.mxu0
        %v983 = vpop.f32.mrf.mxu0
        %v984 = vpop.f32.mrf.mxu0
        %985 = vdwg.mxu0
        %v986 = vrcp.pop %v937
        %v987 = vmul.f32 %v981, %v986
        %989 = vrot.lane.b32.xlu0 %v862, 96
        %v990 = vpop.permute.xlu0 %989
        %992 = vrot.lane.b32.xlu0 %v863, 96
        %v993 = vpop.permute.xlu0 %992
        %v995 = vsel %vm881, %v990, 0
        %v998 = vsel %vm881, %v993, 0
        %1000 = vmatprep.subr.bf16.mxu0 0
        %1001 = vmatpush1.bf16.xpose.msra.mxu0 0
        %1002 = vmatprep.subr.bf16.mxu0 0
        %1003 = vmatpush1.bf16.xpose.msra.mxu0 0
        %1004 = vmatprep.subr.bf16.mxu0 0
        %1005 = vmatpush1.bf16.xpose.msra.mxu0 0
        %1006 = vmatprep.subr.bf16.mxu0 0
        %1007 = vmatpush1.bf16.xpose.msra.mxu0 0
        %1008 = vmatprep.subr.bf16.mxu0 0
        %1009 = vmatpush1.bf16.xpose.msra.mxu0 0
        %1010 = vmatprep.subr.bf16.mxu0 0
        %1011 = vmatpush1.bf16.xpose.msra.mxu0 0
        %1012 = vmatprep.subr.bf16.mxu0 0
        %1013 = vmatpush1.bf16.xpose.msra.mxu0 0
        %1014 = vmatprep.subr.bf16.mxu0 0
        %1015 = vmatpush1.bf16.xpose.msra.mxu0 %v998
        %1016 = vmatprep.subr.bf16.mxu0 0
        %1017 = vmatpush2.bf16.xpose.msra.mxu0 0
        %1018 = vmatprep.subr.bf16.mxu0 0
        %1019 = vmatpush2.bf16.xpose.msra.mxu0 0
        %1020 = vmatprep.subr.bf16.mxu0 0
        %1021 = vmatpush2.bf16.xpose.msra.mxu0 0
        %1022 = vmatprep.subr.bf16.mxu0 0
        %1023 = vmatpush2.bf16.xpose.msra.mxu0 0
        %1024 = vmatprep.subr.bf16.mxu0 0
        %1025 = vmatpush2.bf16.xpose.msra.mxu0 0
        %1026 = vmatprep.subr.bf16.mxu0 0
        %1027 = vmatpush2.bf16.xpose.msra.mxu0 0
        %1028 = vmatprep.subr.bf16.mxu0 0
        %1029 = vmatpush2.bf16.xpose.msra.mxu0 0
        %1030 = vmatprep.subr.bf16.mxu0 0
        %1031 = vmatpush2.bf16.xpose.msra.mxu0 0
        %1032 = vmatprep.mubr.bf16.mxu0 0
        %1033 = vmatmul.mubr.bf16.gmra.mxu0 %v995
        %v1034 = vpop.f32.mrf.mxu0
        %v1035 = vadd.f32 %v590, %v1034
        %v1036 = vpop.f32.mrf.mxu0
        %v1037 = vpop.f32.mrf.mxu0
        %v1038 = vpop.f32.mrf.mxu0
        %1039 = vdwg.mxu0
        %v1040 = vsel %vm928, %v1035, -inf
        %1041 = vmax.xlane.f32.xlu0 %v1040
        %v1042 = vpop.xlane.xlu0 %1041
        %v1043 = vsub.f32 %v1035, %v1042
        %v1044 = vmul.f32 %v1043, 1.442695
        %v1045 = vpow.pop %v1044
        %v1046 = vsel %vm928, %v1045, 0.0
        %1047 = vadd.xlane.f32.xlu0 %v1046
        %v1048 = vpop.xlane.xlu0 %1047
        %v1049 = vpack.c.bf16 %v1045, %v1045
        %1051 = vrot.lane.b32.xlu0 %v864, 96
        %v1052 = vpop.permute.xlu0 %1051
        %v1054 = vsel %vm928, %v1049, 0
        %v1057 = vsel %vm942, %v1052, 0
        %1059 = vmatprep.subr.bf16.mxu0 0
        %1060 = vmatpush1.bf16.msra.mxu0 0
        %1061 = vmatprep.subr.bf16.mxu0 0
        %1062 = vmatpush1.bf16.msra.mxu0 0
        %1063 = vmatprep.subr.bf16.mxu0 0
        %1064 = vmatpush1.bf16.msra.mxu0 0
        %1065 = vmatprep.subr.bf16.mxu0 0
        %1066 = vmatpush1.bf16.msra.mxu0 0
        %1067 = vmatprep.subr.bf16.mxu0 0
        %1068 = vmatpush1.bf16.msra.mxu0 0
        %1069 = vmatprep.subr.bf16.mxu0 0
        %1070 = vmatpush1.bf16.msra.mxu0 0
        %1071 = vmatprep.subr.bf16.mxu0 0
        %1072 = vmatpush1.bf16.msra.mxu0 0
        %1073 = vmatprep.subr.bf16.mxu0 0
        %1074 = vmatpush1.bf16.msra.mxu0 %v1057
        %1075 = vmatprep.subr.bf16.mxu0 0
        %1076 = vmatpush2.bf16.msra.mxu0 0
        %1077 = vmatprep.subr.bf16.mxu0 0
        %1078 = vmatpush2.bf16.msra.mxu0 0
        %1079 = vmatprep.subr.bf16.mxu0 0
        %1080 = vmatpush2.bf16.msra.mxu0 0
        %1081 = vmatprep.subr.bf16.mxu0 0
        %1082 = vmatpush2.bf16.msra.mxu0 0
        %1083 = vmatprep.subr.bf16.mxu0 0
        %1084 = vmatpush2.bf16.msra.mxu0 0
        %1085 = vmatprep.subr.bf16.mxu0 0
        %1086 = vmatpush2.bf16.msra.mxu0 0
        %1087 = vmatprep.subr.bf16.mxu0 0
        %1088 = vmatpush2.bf16.msra.mxu0 0
        %1089 = vmatprep.subr.bf16.mxu0 0
        %1090 = vmatpush2.bf16.msra.mxu0 0
        %1091 = vmatprep.mubr.bf16.mxu0 0
        %1092 = vmatmul.mubr.bf16.gmra.mxu0 %v1054
        %v1093 = vpop.f32.mrf.mxu0
        %v1094 = vadd.f32 0.0, %v1093
        %v1095 = vpop.f32.mrf.mxu0
        %v1096 = vpop.f32.mrf.mxu0
        %v1097 = vpop.f32.mrf.mxu0
        %1098 = vdwg.mxu0
        %v1099 = vrcp.pop %v1048
        %v1100 = vmul.f32 %v1094, %v1099
        %1101 = vrot.lane.b32.xlu0 %v862, 64
        %v1102 = vpop.permute.xlu0 %1101
        %1103 = vrot.lane.b32.xlu0 %v863, 64
        %v1104 = vpop.permute.xlu0 %1103
        %v1106 = vsel %vm881, %v1102, 0
        %v1109 = vsel %vm881, %v1104, 0
        %1111 = vmatprep.subr.bf16.mxu0 0
        %1112 = vmatpush1.bf16.xpose.msra.mxu0 0
        %1113 = vmatprep.subr.bf16.mxu0 0
        %1114 = vmatpush1.bf16.xpose.msra.mxu0 0
        %1115 = vmatprep.subr.bf16.mxu0 0
        %1116 = vmatpush1.bf16.xpose.msra.mxu0 0
        %1117 = vmatprep.subr.bf16.mxu0 0
        %1118 = vmatpush1.bf16.xpose.msra.mxu0 0
        %1119 = vmatprep.subr.bf16.mxu0 0
        %1120 = vmatpush1.bf16.xpose.msra.mxu0 0
        %1121 = vmatprep.subr.bf16.mxu0 0
        %1122 = vmatpush1.bf16.xpose.msra.mxu0 0
        %1123 = vmatprep.subr.bf16.mxu0 0
        %1124 = vmatpush1.bf16.xpose.msra.mxu0 0
        %1125 = vmatprep.subr.bf16.mxu0 0
        %1126 = vmatpush1.bf16.xpose.msra.mxu0 %v1109
        %1127 = vmatprep.subr.bf16.mxu0 0
        %1128 = vmatpush2.bf16.xpose.msra.mxu0 0
        %1129 = vmatprep.subr.bf16.mxu0 0
        %1130 = vmatpush2.bf16.xpose.msra.mxu0 0
        %1131 = vmatprep.subr.bf16.mxu0 0
        %1132 = vmatpush2.bf16.xpose.msra.mxu0 0
        %1133 = vmatprep.subr.bf16.mxu0 0
        %1134 = vmatpush2.bf16.xpose.msra.mxu0 0
        %1135 = vmatprep.subr.bf16.mxu0 0
        %1136 = vmatpush2.bf16.xpose.msra.mxu0 0
        %1137 = vmatprep.subr.bf16.mxu0 0
        %1138 = vmatpush2.bf16.xpose.msra.mxu0 0
        %1139 = vmatprep.subr.bf16.mxu0 0
        %1140 = vmatpush2.bf16.xpose.msra.mxu0 0
        %1141 = vmatprep.subr.bf16.mxu0 0
        %1142 = vmatpush2.bf16.xpose.msra.mxu0 0
        %1143 = vmatprep.mubr.bf16.mxu0 0
        %1144 = vmatmul.mubr.bf16.gmra.mxu0 %v1106
        %v1145 = vpop.f32.mrf.mxu0
        %v1146 = vadd.f32 %v590, %v1145
        %v1147 = vpop.f32.mrf.mxu0
        %v1148 = vpop.f32.mrf.mxu0
        %v1149 = vpop.f32.mrf.mxu0
        %1150 = vdwg.mxu0
        %v1151 = vsel %vm928, %v1146, -inf
        %1152 = vmax.xlane.f32.xlu0 %v1151
        %v1153 = vpop.xlane.xlu0 %1152
        %v1154 = vsub.f32 %v1146, %v1153
        %v1155 = vmul.f32 %v1154, 1.442695
        %v1156 = vpow.pop %v1155
        %v1157 = vsel %vm928, %v1156, 0.0
        %1158 = vadd.xlane.f32.xlu0 %v1157
        %v1159 = vpop.xlane.xlu0 %1158
        %v1160 = vpack.c.bf16 %v1156, %v1156
        %1161 = vrot.lane.b32.xlu0 %v864, 64
        %v1162 = vpop.permute.xlu0 %1161
        %v1164 = vsel %vm928, %v1160, 0
        %v1167 = vsel %vm942, %v1162, 0
        %1169 = vmatprep.subr.bf16.mxu0 0
        %1170 = vmatpush1.bf16.msra.mxu0 0
        %1171 = vmatprep.subr.bf16.mxu0 0
        %1172 = vmatpush1.bf16.msra.mxu0 0
        %1173 = vmatprep.subr.bf16.mxu0 0
        %1174 = vmatpush1.bf16.msra.mxu0 0
        %1175 = vmatprep.subr.bf16.mxu0 0
        %1176 = vmatpush1.bf16.msra.mxu0 0
        %1177 = vmatprep.subr.bf16.mxu0 0
        %1178 = vmatpush1.bf16.msra.mxu0 0
        %1179 = vmatprep.subr.bf16.mxu0 0
        %1180 = vmatpush1.bf16.msra.mxu0 0
        %1181 = vmatprep.subr.bf16.mxu0 0
        %1182 = vmatpush1.bf16.msra.mxu0 0
        %1183 = vmatprep.subr.bf16.mxu0 0
        %1184 = vmatpush1.bf16.msra.mxu0 %v1167
        %1185 = vmatprep.subr.bf16.mxu0 0
        %1186 = vmatpush2.bf16.msra.mxu0 0
        %1187 = vmatprep.subr.bf16.mxu0 0
        %1188 = vmatpush2.bf16.msra.mxu0 0
        %1189 = vmatprep.subr.bf16.mxu0 0
        %1190 = vmatpush2.bf16.msra.mxu0 0
        %1191 = vmatprep.subr.bf16.mxu0 0
        %1192 = vmatpush2.bf16.msra.mxu0 0
        %1193 = vmatprep.subr.bf16.mxu0 0
        %1194 = vmatpush2.bf16.msra.mxu0 0
        %1195 = vmatprep.subr.bf16.mxu0 0
        %1196 = vmatpush2.bf16.msra.mxu0 0
        %1197 = vmatprep.subr.bf16.mxu0 0
        %1198 = vmatpush2.bf16.msra.mxu0 0
        %1199 = vmatprep.subr.bf16.mxu0 0
        %1200 = vmatpush2.bf16.msra.mxu0 0
        %1201 = vmatprep.mubr.bf16.mxu0 0
        %1202 = vmatmul.mubr.bf16.gmra.mxu0 %v1164
        %v1203 = vpop.f32.mrf.mxu0
        %v1204 = vadd.f32 0.0, %v1203
        %v1205 = vpop.f32.mrf.mxu0
        %v1206 = vpop.f32.mrf.mxu0
        %v1207 = vpop.f32.mrf.mxu0
        %1208 = vdwg.mxu0
        %v1209 = vrcp.pop %v1159
        %v1210 = vmul.f32 %v1204, %v1209
        %1211 = vrot.lane.b32.xlu0 %v862, 32
        %v1212 = vpop.permute.xlu0 %1211
        %1213 = vrot.lane.b32.xlu0 %v863, 32
        %v1214 = vpop.permute.xlu0 %1213
        %v1216 = vsel %vm881, %v1212, 0
        %v1219 = vsel %vm881, %v1214, 0
        %1221 = vmatprep.subr.bf16.mxu0 0
        %1222 = vmatpush1.bf16.xpose.msra.mxu0 0
        %1223 = vmatprep.subr.bf16.mxu0 0
        %1224 = vmatpush1.bf16.xpose.msra.mxu0 0
        %1225 = vmatprep.subr.bf16.mxu0 0
        %1226 = vmatpush1.bf16.xpose.msra.mxu0 0
        %1227 = vmatprep.subr.bf16.mxu0 0
        %1228 = vmatpush1.bf16.xpose.msra.mxu0 0
        %1229 = vmatprep.subr.bf16.mxu0 0
        %1230 = vmatpush1.bf16.xpose.msra.mxu0 0
        %1231 = vmatprep.subr.bf16.mxu0 0
        %1232 = vmatpush1.bf16.xpose.msra.mxu0 0
        %1233 = vmatprep.subr.bf16.mxu0 0
        %1234 = vmatpush1.bf16.xpose.msra.mxu0 0
        %1235 = vmatprep.subr.bf16.mxu0 0
        %1236 = vmatpush1.bf16.xpose.msra.mxu0 %v1219
        %1237 = vmatprep.subr.bf16.mxu0 0
        %1238 = vmatpush2.bf16.xpose.msra.mxu0 0
        %1239 = vmatprep.subr.bf16.mxu0 0
        %1240 = vmatpush2.bf16.xpose.msra.mxu0 0
        %1241 = vmatprep.subr.bf16.mxu0 0
        %1242 = vmatpush2.bf16.xpose.msra.mxu0 0
        %1243 = vmatprep.subr.bf16.mxu0 0
        %1244 = vmatpush2.bf16.xpose.msra.mxu0 0
        %1245 = vmatprep.subr.bf16.mxu0 0
        %1246 = vmatpush2.bf16.xpose.msra.mxu0 0
        %1247 = vmatprep.subr.bf16.mxu0 0
        %1248 = vmatpush2.bf16.xpose.msra.mxu0 0
        %1249 = vmatprep.subr.bf16.mxu0 0
        %1250 = vmatpush2.bf16.xpose.msra.mxu0 0
        %1251 = vmatprep.subr.bf16.mxu0 0
        %1252 = vmatpush2.bf16.xpose.msra.mxu0 0
        %1253 = vmatprep.mubr.bf16.mxu0 0
        %1254 = vmatmul.mubr.bf16.gmra.mxu0 %v1216
        %v1255 = vpop.f32.mrf.mxu0
        %v1256 = vadd.f32 %v590, %v1255
        %v1257 = vpop.f32.mrf.mxu0
        %v1258 = vpop.f32.mrf.mxu0
        %v1259 = vpop.f32.mrf.mxu0
        %1260 = vdwg.mxu0
        %v1261 = vsel %vm928, %v1256, -inf
        %1262 = vmax.xlane.f32.xlu0 %v1261
        %v1263 = vpop.xlane.xlu0 %1262
        %v1264 = vsub.f32 %v1256, %v1263
        %v1265 = vmul.f32 %v1264, 1.442695
        %v1266 = vpow.pop %v1265
        %v1267 = vsel %vm928, %v1266, 0.0
        %1268 = vadd.xlane.f32.xlu0 %v1267
        %v1269 = vpop.xlane.xlu0 %1268
        %v1270 = vpack.c.bf16 %v1266, %v1266
        %1271 = vrot.lane.b32.xlu0 %v864, 32
        %v1272 = vpop.permute.xlu0 %1271
        %v1274 = vsel %vm928, %v1270, 0
        %v1277 = vsel %vm942, %v1272, 0
        %1279 = vmatprep.subr.bf16.mxu0 0
        %1280 = vmatpush1.bf16.msra.mxu0 0
        %1281 = vmatprep.subr.bf16.mxu0 0
        %1282 = vmatpush1.bf16.msra.mxu0 0
        %1283 = vmatprep.subr.bf16.mxu0 0
        %1284 = vmatpush1.bf16.msra.mxu0 0
        %1285 = vmatprep.subr.bf16.mxu0 0
        %1286 = vmatpush1.bf16.msra.mxu0 0
        %1287 = vmatprep.subr.bf16.mxu0 0
        %1288 = vmatpush1.bf16.msra.mxu0 0
        %1289 = vmatprep.subr.bf16.mxu0 0
        %1290 = vmatpush1.bf16.msra.mxu0 0
        %1291 = vmatprep.subr.bf16.mxu0 0
        %1292 = vmatpush1.bf16.msra.mxu0 0
        %1293 = vmatprep.subr.bf16.mxu0 0
        %1294 = vmatpush1.bf16.msra.mxu0 %v1277
        %1295 = vmatprep.subr.bf16.mxu0 0
        %1296 = vmatpush2.bf16.msra.mxu0 0
        %1297 = vmatprep.subr.bf16.mxu0 0
        %1298 = vmatpush2.bf16.msra.mxu0 0
        %1299 = vmatprep.subr.bf16.mxu0 0
        %1300 = vmatpush2.bf16.msra.mxu0 0
        %1301 = vmatprep.subr.bf16.mxu0 0
        %1302 = vmatpush2.bf16.msra.mxu0 0
        %1303 = vmatprep.subr.bf16.mxu0 0
        %1304 = vmatpush2.bf16.msra.mxu0 0
        %1305 = vmatprep.subr.bf16.mxu0 0
        %1306 = vmatpush2.bf16.msra.mxu0 0
        %1307 = vmatprep.subr.bf16.mxu0 0
        %1308 = vmatpush2.bf16.msra.mxu0 0
        %1309 = vmatprep.subr.bf16.mxu0 0
        %1310 = vmatpush2.bf16.msra.mxu0 0
        %1311 = vmatprep.mubr.bf16.mxu0 0
        %1312 = vmatmul.mubr.bf16.gmra.mxu0 %v1274
        %v1313 = vpop.f32.mrf.mxu0
        %v1314 = vadd.f32 0.0, %v1313
        %v1315 = vpop.f32.mrf.mxu0
        %v1316 = vpop.f32.mrf.mxu0
        %v1317 = vpop.f32.mrf.mxu0
        %1318 = vdwg.mxu0
        %v1319 = vrcp.pop %v1269
        %v1320 = vmul.f32 %v1314, %v1319
        %1322 = vrot.lane.b32.xlu0 %v1100, 32
        %v1323 = vpop.permute.xlu0 %1322
        %1326 = vrot.lane.b32.xlu0 %v1210, 64
        %v1327 = vpop.permute.xlu0 %1326
        %1330 = vrot.lane.b32.xlu0 %v1320, 96
        %v1331 = vpop.permute.xlu0 %1330
        %v1333 = vsel %vm881, %v987, %v1323
        %vm1334 = vcmask 523264
        %v1335 = vsel %vm1334, %v1333, %v1327
        %vm1336 = vcmask 785408
        %v1337 = vsel %vm1336, %v1335, %v1331
        %v1338 = vpack.c.bf16 %v1337, %v1337
        %v1355 = vunpack.c.l.b16 %v865
        %v1356 = vunpack.c.l.b16 %v866
        %v1357 = vunpack.c.l.b16 %v867
        %v1358 = vunpack.c.l.b16 %v868
        %v1359 = vunpack.c.l.b16 %v869
        %v1360 = vunpack.c.l.b16 %v870
        %v1361 = vunpack.c.l.b16 %v871
        %v1362 = vunpack.c.l.b16 %v872
        %v1363 = vunpack.c.l.b16 %v873
        %v1364 = vunpack.c.l.b16 %v874
        %v1365 = vunpack.c.l.b16 %v875
        %v1366 = vunpack.c.l.b16 %v876
        %v1367 = vunpack.c.l.b16 %v877
        %v1368 = vunpack.c.l.b16 %v878
        %v1369 = vunpack.c.l.b16 %v879
        %v1370 = vunpack.c.l.b16 %v880
        %v1371 = vpack.c.b16 %v1356, %v1355
        %v1372 = vpack.c.b16 %v1358, %v1357
        %v1373 = vpack.c.b16 %v1360, %v1359
        %v1374 = vpack.c.b16 %v1362, %v1361
        %v1375 = vpack.c.b16 %v1364, %v1363
        %v1376 = vpack.c.b16 %v1366, %v1365
        %v1377 = vpack.c.b16 %v1368, %v1367
        %v1378 = vpack.c.b16 %v1370, %v1369
        %1387 = vmatprep.subr.bf16.mxu0 0
        %1388 = vmatpush1.bf16.msra.mxu0 %v1378
        %1389 = vmatprep.subr.bf16.mxu0 0
        %1390 = vmatpush1.bf16.msra.mxu0 %v1377
        %1391 = vmatprep.subr.bf16.mxu0 0
        %1392 = vmatpush1.bf16.msra.mxu0 %v1376
        %1393 = vmatprep.subr.bf16.mxu0 0
        %1394 = vmatpush1.bf16.msra.mxu0 %v1375
        %1395 = vmatprep.subr.bf16.mxu0 0
        %1396 = vmatpush1.bf16.msra.mxu0 %v1374
        %1397 = vmatprep.subr.bf16.mxu0 0
        %1398 = vmatpush1.bf16.msra.mxu0 %v1373
        %1399 = vmatprep.subr.bf16.mxu0 0
        %1400 = vmatpush1.bf16.msra.mxu0 %v1372
        %1401 = vmatprep.subr.bf16.mxu0 0
        %1402 = vmatpush1.bf16.msra.mxu0 %v1371
        %1403 = vmatprep.subr.bf16.mxu0 0
        %1404 = vmatpush2.bf16.msra.mxu0 0
        %1405 = vmatprep.subr.bf16.mxu0 0
        %1406 = vmatpush2.bf16.msra.mxu0 0
        %1407 = vmatprep.subr.bf16.mxu0 0
        %1408 = vmatpush2.bf16.msra.mxu0 0
        %1409 = vmatprep.subr.bf16.mxu0 0
        %1410 = vmatpush2.bf16.msra.mxu0 0
        %1411 = vmatprep.subr.bf16.mxu0 0
        %1412 = vmatpush2.bf16.msra.mxu0 0
        %1413 = vmatprep.subr.bf16.mxu0 0
        %1414 = vmatpush2.bf16.msra.mxu0 0
        %1415 = vmatprep.subr.bf16.mxu0 0
        %1416 = vmatpush2.bf16.msra.mxu0 0
        %1417 = vmatprep.subr.bf16.mxu0 0
        %1418 = vmatpush2.bf16.msra.mxu0 0
        %1419 = vmatprep.mubr.bf16.mxu0 0
        %1420 = vmatmul.mubr.bf16.gmra.mxu0 %v1338
        %v1421 = vpop.f32.mrf.mxu0
        %v1422 = vadd.f32 0.0, %v1421
        %v1423 = vpop.f32.mrf.mxu0
        %v1424 = vpop.f32.mrf.mxu0
        %v1425 = vpop.f32.mrf.mxu0
        %1426 = vdwg.mxu0
        %v1427 = vadd.f32 %v589, %v1422
        %v1428 = vld [vmem:[%s10] sm:$0x1]
        %v1429 = vld [vmem:[%s11] sm:$0x1]
        %1430 = vadd.xlane.f32.xlu0 %v1427
        %v1431 = vpop.xlane.xlu0 %1430
        %v1432 = vmul.f32 %v1431, %v595
        %v1433 = vsub.f32 %v1427, %v1432
        %v1434 = vmul.f32 %v1433, %v1433
        %1435 = vadd.xlane.f32.xlu0 %v1434
        %v1436 = vpop.xlane.xlu0 %1435
        %v1437 = vmul.f32 %v1436, %v595
        %v1438 = vadd.f32 %v1437, 1e-05
        %v1439 = vrsqrt.pop %v1438
        %v1440 = vmul.f32 %v1433, %v1439
        %v1442 = vlaneseq
        %v1443 = vshrl.u32 %v1442, 7
        %v1444 = vsub.s32 0, %v1443
        %v1445 = vrot.slane %v1428, %v1444
        %v1447 = vmul.f32 %v1440, %v1445
        %v1449 = vlaneseq
        %v1450 = vshrl.u32 %v1449, 7
        %v1451 = vsub.s32 0, %v1450
        %v1452 = vrot.slane %v1429, %v1451
        %v1454 = vadd.f32 %v1447, %v1452
        %v1455 = vpack.c.bf16 %v1454, %v1454
        %v1456 = vld [vmem:[%s5] sm:$0xf]
        %v1457 = vld [vmem:[%s5 + $0x4] sm:$0xf]
        %v1458 = vld [vmem:[%s5 + $0x8] sm:$0xf]
        %v1459 = vld [vmem:[%s5 + $0xc] sm:$0xf]
        %v1460 = vld [vmem:[%s5 + $0x10] sm:$0xf]
        %v1461 = vld [vmem:[%s5 + $0x14] sm:$0xf]
        %v1462 = vld [vmem:[%s5 + $0x18] sm:$0xf]
        %v1463 = vld [vmem:[%s5 + $0x1c] sm:$0xf]
        %v1464 = vld [vmem:[%s5 + $0x20] sm:$0xf]
        %v1465 = vld [vmem:[%s5 + $0x24] sm:$0xf]
        %v1466 = vld [vmem:[%s5 + $0x28] sm:$0xf]
        %v1467 = vld [vmem:[%s5 + $0x2c] sm:$0xf]
        %v1468 = vld [vmem:[%s5 + $0x30] sm:$0xf]
        %v1469 = vld [vmem:[%s5 + $0x34] sm:$0xf]
        %v1470 = vld [vmem:[%s5 + $0x38] sm:$0xf]
        %v1471 = vld [vmem:[%s5 + $0x3c] sm:$0xf]
        %v1488 = vunpack.c.l.b16 %v1456
        %v1489 = vunpack.c.l.b16 %v1457
        %v1490 = vunpack.c.l.b16 %v1458
        %v1491 = vunpack.c.l.b16 %v1459
        %v1492 = vunpack.c.l.b16 %v1460
        %v1493 = vunpack.c.l.b16 %v1461
        %v1494 = vunpack.c.l.b16 %v1462
        %v1495 = vunpack.c.l.b16 %v1463
        %v1496 = vunpack.c.l.b16 %v1464
        %v1497 = vunpack.c.l.b16 %v1465
        %v1498 = vunpack.c.l.b16 %v1466
        %v1499 = vunpack.c.l.b16 %v1467
        %v1500 = vunpack.c.l.b16 %v1468
        %v1501 = vunpack.c.l.b16 %v1469
        %v1502 = vunpack.c.l.b16 %v1470
        %v1503 = vunpack.c.l.b16 %v1471
        %v1504 = vpack.c.b16 %v1489, %v1488
        %v1505 = vpack.c.b16 %v1491, %v1490
        %v1506 = vpack.c.b16 %v1493, %v1492
        %v1507 = vpack.c.b16 %v1495, %v1494
        %v1508 = vpack.c.b16 %v1497, %v1496
        %v1509 = vpack.c.b16 %v1499, %v1498
        %v1510 = vpack.c.b16 %v1501, %v1500
        %v1511 = vpack.c.b16 %v1503, %v1502
        %1520 = vmatprep.subr.bf16.mxu0 0
        %1521 = vmatpush1.bf16.msra.mxu0 %v1511
        %1522 = vmatprep.subr.bf16.mxu0 0
        %1523 = vmatpush1.bf16.msra.mxu0 %v1510
        %1524 = vmatprep.subr.bf16.mxu0 0
        %1525 = vmatpush1.bf16.msra.mxu0 %v1509
        %1526 = vmatprep.subr.bf16.mxu0 0
        %1527 = vmatpush1.bf16.msra.mxu0 %v1508
        %1528 = vmatprep.subr.bf16.mxu0 0
        %1529 = vmatpush1.bf16.msra.mxu0 %v1507
        %1530 = vmatprep.subr.bf16.mxu0 0
        %1531 = vmatpush1.bf16.msra.mxu0 %v1506
        %1532 = vmatprep.subr.bf16.mxu0 0
        %1533 = vmatpush1.bf16.msra.mxu0 %v1505
        %1534 = vmatprep.subr.bf16.mxu0 0
        %1535 = vmatpush1.bf16.msra.mxu0 %v1504
        %1536 = vmatprep.subr.bf16.mxu0 0
        %1537 = vmatpush2.bf16.msra.mxu0 0
        %1538 = vmatprep.subr.bf16.mxu0 0
        %1539 = vmatpush2.bf16.msra.mxu0 0
        %1540 = vmatprep.subr.bf16.mxu0 0
        %1541 = vmatpush2.bf16.msra.mxu0 0
        %1542 = vmatprep.subr.bf16.mxu0 0
        %1543 = vmatpush2.bf16.msra.mxu0 0
        %1544 = vmatprep.subr.bf16.mxu0 0
        %1545 = vmatpush2.bf16.msra.mxu0 0
        %1546 = vmatprep.subr.bf16.mxu0 0
        %1547 = vmatpush2.bf16.msra.mxu0 0
        %1548 = vmatprep.subr.bf16.mxu0 0
        %1549 = vmatpush2.bf16.msra.mxu0 0
        %1550 = vmatprep.subr.bf16.mxu0 0
        %1551 = vmatpush2.bf16.msra.mxu0 0
        %1552 = vmatprep.mubr.bf16.mxu0 0
        %1553 = vmatmul.mubr.bf16.gmra.mxu0 %v1455
        %v1554 = vpop.f32.mrf.mxu0
        %v1555 = vadd.f32 0.0, %v1554
        %v1556 = vpop.f32.mrf.mxu0
        %v1557 = vpop.f32.mrf.mxu0
        %v1558 = vpop.f32.mrf.mxu0
        %1559 = vdwg.mxu0
        %v1560 = vmul.f32 %v1555, 0.17677669
        %v1561 = vpack.c.bf16 %v1560, %v1560
        %v1562 = vld [vmem:[%s587] sm:$0xff]
        %v1563 = vpack.c.bf16 %v1562, %v1562
        %v1564 = vld [vmem:[%s6] sm:$0xff]
        %v1565 = vld [vmem:[%s6 + $0x8] sm:$0xff]
        %v1566 = vld [vmem:[%s6 + $0x10] sm:$0xff]
        %v1567 = vld [vmem:[%s6 + $0x18] sm:$0xff]
        %v1568 = vld [vmem:[%s6 + $0x20] sm:$0xff]
        %v1569 = vld [vmem:[%s6 + $0x28] sm:$0xff]
        %v1570 = vld [vmem:[%s6 + $0x30] sm:$0xff]
        %v1571 = vld [vmem:[%s6 + $0x38] sm:$0xff]
        %v1572 = vld [vmem:[%s6 + $0x40] sm:$0xff]
        %v1573 = vld [vmem:[%s6 + $0x48] sm:$0xff]
        %v1574 = vld [vmem:[%s6 + $0x50] sm:$0xff]
        %v1575 = vld [vmem:[%s6 + $0x58] sm:$0xff]
        %v1576 = vld [vmem:[%s6 + $0x60] sm:$0xff]
        %v1577 = vld [vmem:[%s6 + $0x68] sm:$0xff]
        %v1578 = vld [vmem:[%s6 + $0x70] sm:$0xff]
        %v1579 = vld [vmem:[%s6 + $0x78] sm:$0xff]
        %v1596 = vunpack.c.l.b16 %v1564
        %v1597 = vunpack.c.h.b16 %v1564
        %v1598 = vunpack.c.l.b16 %v1565
        %v1599 = vunpack.c.h.b16 %v1565
        %v1600 = vunpack.c.l.b16 %v1566
        %v1601 = vunpack.c.h.b16 %v1566
        %v1602 = vunpack.c.l.b16 %v1567
        %v1603 = vunpack.c.h.b16 %v1567
        %v1604 = vunpack.c.l.b16 %v1568
        %v1605 = vunpack.c.h.b16 %v1568
        %v1606 = vunpack.c.l.b16 %v1569
        %v1607 = vunpack.c.h.b16 %v1569
        %v1608 = vunpack.c.l.b16 %v1570
        %v1609 = vunpack.c.h.b16 %v1570
        %v1610 = vunpack.c.l.b16 %v1571
        %v1611 = vunpack.c.h.b16 %v1571
        %v1612 = vunpack.c.l.b16 %v1572
        %v1613 = vunpack.c.h.b16 %v1572
        %v1614 = vunpack.c.l.b16 %v1573
        %v1615 = vunpack.c.h.b16 %v1573
        %v1616 = vunpack.c.l.b16 %v1574
        %v1617 = vunpack.c.h.b16 %v1574
        %v1618 = vunpack.c.l.b16 %v1575
        %v1619 = vunpack.c.h.b16 %v1575
        %v1620 = vunpack.c.l.b16 %v1576
        %v1621 = vunpack.c.h.b16 %v1576
        %v1622 = vunpack.c.l.b16 %v1577
        %v1623 = vunpack.c.h.b16 %v1577
        %v1624 = vunpack.c.l.b16 %v1578
        %v1625 = vunpack.c.h.b16 %v1578
        %v1626 = vunpack.c.l.b16 %v1579
        %v1627 = vunpack.c.h.b16 %v1579
        %v1628 = vpack.c.b16 %v1598, %v1596
        %v1629 = vpack.c.b16 %v1599, %v1597
        %v1630 = vpack.c.b16 %v1602, %v1600
        %v1631 = vpack.c.b16 %v1603, %v1601
        %v1632 = vpack.c.b16 %v1606, %v1604
        %v1633 = vpack.c.b16 %v1607, %v1605
        %v1634 = vpack.c.b16 %v1610, %v1608
        %v1635 = vpack.c.b16 %v1611, %v1609
        %v1636 = vpack.c.b16 %v1614, %v1612
        %v1637 = vpack.c.b16 %v1615, %v1613
        %v1638 = vpack.c.b16 %v1618, %v1616
        %v1639 = vpack.c.b16 %v1619, %v1617
        %v1640 = vpack.c.b16 %v1622, %v1620
        %v1641 = vpack.c.b16 %v1623, %v1621
        %v1642 = vpack.c.b16 %v1626, %v1624
        %v1643 = vpack.c.b16 %v1627, %v1625
        %1660 = vmatprep.subr.bf16.mxu0 %v1643
        %1661 = vmatpush1.bf16.msra.mxu0 %v1642
        %1662 = vmatprep.subr.bf16.mxu0 %v1641
        %1663 = vmatpush1.bf16.msra.mxu0 %v1640
        %1664 = vmatprep.subr.bf16.mxu0 %v1639
        %1665 = vmatpush1.bf16.msra.mxu0 %v1638
        %1666 = vmatprep.subr.bf16.mxu0 %v1637
        %1667 = vmatpush1.bf16.msra.mxu0 %v1636
        %1668 = vmatprep.subr.bf16.mxu0 %v1635
        %1669 = vmatpush1.bf16.msra.mxu0 %v1634
        %1670 = vmatprep.subr.bf16.mxu0 %v1633
        %1671 = vmatpush1.bf16.msra.mxu0 %v1632
        %1672 = vmatprep.subr.bf16.mxu0 %v1631
        %1673 = vmatpush1.bf16.msra.mxu0 %v1630
        %1674 = vmatprep.subr.bf16.mxu0 %v1629
        %1675 = vmatpush1.bf16.msra.mxu0 %v1628
        %1676 = vmatprep.subr.bf16.mxu0 0
        %1677 = vmatpush2.bf16.msra.mxu0 0
        %1678 = vmatprep.subr.bf16.mxu0 0
        %1679 = vmatpush2.bf16.msra.mxu0 0
        %1680 = vmatprep.subr.bf16.mxu0 0
        %1681 = vmatpush2.bf16.msra.mxu0 0
        %1682 = vmatprep.subr.bf16.mxu0 0
        %1683 = vmatpush2.bf16.msra.mxu0 0
        %1684 = vmatprep.subr.bf16.mxu0 0
        %1685 = vmatpush2.bf16.msra.mxu0 0
        %1686 = vmatprep.subr.bf16.mxu0 0
        %1687 = vmatpush2.bf16.msra.mxu0 0
        %1688 = vmatprep.subr.bf16.mxu0 0
        %1689 = vmatpush2.bf16.msra.mxu0 0
        %1690 = vmatprep.subr.bf16.mxu0 0
        %1691 = vmatpush2.bf16.msra.mxu0 0
        %1692 = vmatprep.mubr.bf16.mxu0 0
        %1693 = vmatmul.mubr.bf16.gmra.mxu0 %v1563
        %v1694 = vpop.f32.mrf.mxu0
        %v1695 = vadd.f32 0.0, %v1694
        %v1696 = vpop.f32.mrf.mxu0
        %v1697 = vadd.f32 0.0, %v1696
        %v1698 = vpop.f32.mrf.mxu0
        %v1699 = vpop.f32.mrf.mxu0
        %1700 = vdwg.mxu0
        %v1701 = vpack.c.bf16 %v1695, %v1695
        %v1702 = vpack.c.bf16 %v1697, %v1697
        %v1703 = vld [vmem:[%s7] sm:$0xf]
        %v1704 = vld [vmem:[%s7 + $0x4] sm:$0xf]
        %v1705 = vld [vmem:[%s7 + $0x8] sm:$0xf]
        %v1706 = vld [vmem:[%s7 + $0xc] sm:$0xf]
        %v1707 = vld [vmem:[%s7 + $0x10] sm:$0xf]
        %v1708 = vld [vmem:[%s7 + $0x14] sm:$0xf]
        %v1709 = vld [vmem:[%s7 + $0x18] sm:$0xf]
        %v1710 = vld [vmem:[%s7 + $0x1c] sm:$0xf]
        %v1711 = vld [vmem:[%s7 + $0x20] sm:$0xf]
        %v1712 = vld [vmem:[%s7 + $0x24] sm:$0xf]
        %v1713 = vld [vmem:[%s7 + $0x28] sm:$0xf]
        %v1714 = vld [vmem:[%s7 + $0x2c] sm:$0xf]
        %v1715 = vld [vmem:[%s7 + $0x30] sm:$0xf]
        %v1716 = vld [vmem:[%s7 + $0x34] sm:$0xf]
        %v1717 = vld [vmem:[%s7 + $0x38] sm:$0xf]
        %v1718 = vld [vmem:[%s7 + $0x3c] sm:$0xf]
        %v1720 = vsel %vm881, %v1561, 0
        %v1723 = vsel %vm881, %v1701, 0
        %1725 = vmatprep.subr.bf16.mxu0 0
        %1726 = vmatpush1.bf16.xpose.msra.mxu0 0
        %1727 = vmatprep.subr.bf16.mxu0 0
        %1728 = vmatpush1.bf16.xpose.msra.mxu0 0
        %1729 = vmatprep.subr.bf16.mxu0 0
        %1730 = vmatpush1.bf16.xpose.msra.mxu0 0
        %1731 = vmatprep.subr.bf16.mxu0 0
        %1732 = vmatpush1.bf16.xpose.msra.mxu0 0
        %1733 = vmatprep.subr.bf16.mxu0 0
        %1734 = vmatpush1.bf16.xpose.msra.mxu0 0
        %1735 = vmatprep.subr.bf16.mxu0 0
        %1736 = vmatpush1.bf16.xpose.msra.mxu0 0
        %1737 = vmatprep.subr.bf16.mxu0 0
        %1738 = vmatpush1.bf16.xpose.msra.mxu0 0
        %1739 = vmatprep.subr.bf16.mxu0 0
        %1740 = vmatpush1.bf16.xpose.msra.mxu0 %v1723
        %1741 = vmatprep.subr.bf16.mxu0 0
        %1742 = vmatpush2.bf16.xpose.msra.mxu0 0
        %1743 = vmatprep.subr.bf16.mxu0 0
        %1744 = vmatpush2.bf16.xpose.msra.mxu0 0
        %1745 = vmatprep.subr.bf16.mxu0 0
        %1746 = vmatpush2.bf16.xpose.msra.mxu0 0
        %1747 = vmatprep.subr.bf16.mxu0 0
        %1748 = vmatpush2.bf16.xpose.msra.mxu0 0
        %1749 = vmatprep.subr.bf16.mxu0 0
        %1750 = vmatpush2.bf16.xpose.msra.mxu0 0
        %1751 = vmatprep.subr.bf16.mxu0 0
        %1752 = vmatpush2.bf16.xpose.msra.mxu0 0
        %1753 = vmatprep.subr.bf16.mxu0 0
        %1754 = vmatpush2.bf16.xpose.msra.mxu0 0
        %1755 = vmatprep.subr.bf16.mxu0 0
        %1756 = vmatpush2.bf16.xpose.msra.mxu0 0
        %1757 = vmatprep.mubr.bf16.mxu0 0
        %1758 = vmatmul.mubr.bf16.gmra.mxu0 %v1720
        %v1759 = vpop.f32.mrf.mxu0
        %v1760 = vadd.f32 %v590, %v1759
        %v1761 = vpop.f32.mrf.mxu0
        %v1762 = vpop.f32.mrf.mxu0
        %v1763 = vpop.f32.mrf.mxu0
        %1764 = vdwg.mxu0
        %v1765 = vsel %vm928, %v1760, -inf
        %1766 = vmax.xlane.f32.xlu0 %v1765
        %v1767 = vpop.xlane.xlu0 %1766
        %v1768 = vsub.f32 %v1760, %v1767
        %v1769 = vmul.f32 %v1768, 1.442695
        %v1770 = vpow.pop %v1769
        %v1771 = vsel %vm928, %v1770, 0.0
        %1772 = vadd.xlane.f32.xlu0 %v1771
        %v1773 = vpop.xlane.xlu0 %1772
        %v1774 = vpack.c.bf16 %v1770, %v1770
        %v1776 = vsel %vm928, %v1774, 0
        %v1779 = vsel %vm942, %v1702, 0
        %1781 = vmatprep.subr.bf16.mxu0 0
        %1782 = vmatpush1.bf16.msra.mxu0 0
        %1783 = vmatprep.subr.bf16.mxu0 0
        %1784 = vmatpush1.bf16.msra.mxu0 0
        %1785 = vmatprep.subr.bf16.mxu0 0
        %1786 = vmatpush1.bf16.msra.mxu0 0
        %1787 = vmatprep.subr.bf16.mxu0 0
        %1788 = vmatpush1.bf16.msra.mxu0 0
        %1789 = vmatprep.subr.bf16.mxu0 0
        %1790 = vmatpush1.bf16.msra.mxu0 0
        %1791 = vmatprep.subr.bf16.mxu0 0
        %1792 = vmatpush1.bf16.msra.mxu0 0
        %1793 = vmatprep.subr.bf16.mxu0 0
        %1794 = vmatpush1.bf16.msra.mxu0 0
        %1795 = vmatprep.subr.bf16.mxu0 0
        %1796 = vmatpush1.bf16.msra.mxu0 %v1779
        %1797 = vmatprep.subr.bf16.mxu0 0
        %1798 = vmatpush2.bf16.msra.mxu0 0
        %1799 = vmatprep.subr.bf16.mxu0 0
        %1800 = vmatpush2.bf16.msra.mxu0 0
        %1801 = vmatprep.subr.bf16.mxu0 0
        %1802 = vmatpush2.bf16.msra.mxu0 0
        %1803 = vmatprep.subr.bf16.mxu0 0
        %1804 = vmatpush2.bf16.msra.mxu0 0
        %1805 = vmatprep.subr.bf16.mxu0 0
        %1806 = vmatpush2.bf16.msra.mxu0 0
        %1807 = vmatprep.subr.bf16.mxu0 0
        %1808 = vmatpush2.bf16.msra.mxu0 0
        %1809 = vmatprep.subr.bf16.mxu0 0
        %1810 = vmatpush2.bf16.msra.mxu0 0
        %1811 = vmatprep.subr.bf16.mxu0 0
        %1812 = vmatpush2.bf16.msra.mxu0 0
        %1813 = vmatprep.mubr.bf16.mxu0 0
        %1814 = vmatmul.mubr.bf16.gmra.mxu0 %v1776
        %v1815 = vpop.f32.mrf.mxu0
        %v1816 = vadd.f32 0.0, %v1815
        %v1817 = vpop.f32.mrf.mxu0
        %v1818 = vpop.f32.mrf.mxu0
        %v1819 = vpop.f32.mrf.mxu0
        %1820 = vdwg.mxu0
        %v1821 = vrcp.pop %v1773
        %v1822 = vmul.f32 %v1816, %v1821
        %1824 = vrot.lane.b32.xlu0 %v1561, 96
        %v1825 = vpop.permute.xlu0 %1824
        %1827 = vrot.lane.b32.xlu0 %v1701, 96
        %v1828 = vpop.permute.xlu0 %1827
        %v1830 = vsel %vm881, %v1825, 0
        %v1833 = vsel %vm881, %v1828, 0
        %1835 = vmatprep.subr.bf16.mxu0 0
        %1836 = vmatpush1.bf16.xpose.msra.mxu0 0
        %1837 = vmatprep.subr.bf16.mxu0 0
        %1838 = vmatpush1.bf16.xpose.msra.mxu0 0
        %1839 = vmatprep.subr.bf16.mxu0 0
        %1840 = vmatpush1.bf16.xpose.msra.mxu0 0
        %1841 = vmatprep.subr.bf16.mxu0 0
        %1842 = vmatpush1.bf16.xpose.msra.mxu0 0
        %1843 = vmatprep.subr.bf16.mxu0 0
        %1844 = vmatpush1.bf16.xpose.msra.mxu0 0
        %1845 = vmatprep.subr.bf16.mxu0 0
        %1846 = vmatpush1.bf16.xpose.msra.mxu0 0
        %1847 = vmatprep.subr.bf16.mxu0 0
        %1848 = vmatpush1.bf16.xpose.msra.mxu0 0
        %1849 = vmatprep.subr.bf16.mxu0 0
        %1850 = vmatpush1.bf16.xpose.msra.mxu0 %v1833
        %1851 = vmatprep.subr.bf16.mxu0 0
        %1852 = vmatpush2.bf16.xpose.msra.mxu0 0
        %1853 = vmatprep.subr.bf16.mxu0 0
        %1854 = vmatpush2.bf16.xpose.msra.mxu0 0
        %1855 = vmatprep.subr.bf16.mxu0 0
        %1856 = vmatpush2.bf16.xpose.msra.mxu0 0
        %1857 = vmatprep.subr.bf16.mxu0 0
        %1858 = vmatpush2.bf16.xpose.msra.mxu0 0
        %1859 = vmatprep.subr.bf16.mxu0 0
        %1860 = vmatpush2.bf16.xpose.msra.mxu0 0
        %1861 = vmatprep.subr.bf16.mxu0 0
        %1862 = vmatpush2.bf16.xpose.msra.mxu0 0
        %1863 = vmatprep.subr.bf16.mxu0 0
        %1864 = vmatpush2.bf16.xpose.msra.mxu0 0
        %1865 = vmatprep.subr.bf16.mxu0 0
        %1866 = vmatpush2.bf16.xpose.msra.mxu0 0
        %1867 = vmatprep.mubr.bf16.mxu0 0
        %1868 = vmatmul.mubr.bf16.gmra.mxu0 %v1830
        %v1869 = vpop.f32.mrf.mxu0
        %v1870 = vadd.f32 %v590, %v1869
        %v1871 = vpop.f32.mrf.mxu0
        %v1872 = vpop.f32.mrf.mxu0
        %v1873 = vpop.f32.mrf.mxu0
        %1874 = vdwg.mxu0
        %v1875 = vsel %vm928, %v1870, -inf
        %1876 = vmax.xlane.f32.xlu0 %v1875
        %v1877 = vpop.xlane.xlu0 %1876
        %v1878 = vsub.f32 %v1870, %v1877
        %v1879 = vmul.f32 %v1878, 1.442695
        %v1880 = vpow.pop %v1879
        %v1881 = vsel %vm928, %v1880, 0.0
        %1882 = vadd.xlane.f32.xlu0 %v1881
        %v1883 = vpop.xlane.xlu0 %1882
        %v1884 = vpack.c.bf16 %v1880, %v1880
        %1886 = vrot.lane.b32.xlu0 %v1702, 96
        %v1887 = vpop.permute.xlu0 %1886
        %v1889 = vsel %vm928, %v1884, 0
        %v1892 = vsel %vm942, %v1887, 0
        %1894 = vmatprep.subr.bf16.mxu0 0
        %1895 = vmatpush1.bf16.msra.mxu0 0
        %1896 = vmatprep.subr.bf16.mxu0 0
        %1897 = vmatpush1.bf16.msra.mxu0 0
        %1898 = vmatprep.subr.bf16.mxu0 0
        %1899 = vmatpush1.bf16.msra.mxu0 0
        %1900 = vmatprep.subr.bf16.mxu0 0
        %1901 = vmatpush1.bf16.msra.mxu0 0
        %1902 = vmatprep.subr.bf16.mxu0 0
        %1903 = vmatpush1.bf16.msra.mxu0 0
        %1904 = vmatprep.subr.bf16.mxu0 0
        %1905 = vmatpush1.bf16.msra.mxu0 0
        %1906 = vmatprep.subr.bf16.mxu0 0
        %1907 = vmatpush1.bf16.msra.mxu0 0
        %1908 = vmatprep.subr.bf16.mxu0 0
        %1909 = vmatpush1.bf16.msra.mxu0 %v1892
        %1910 = vmatprep.subr.bf16.mxu0 0
        %1911 = vmatpush2.bf16.msra.mxu0 0
        %1912 = vmatprep.subr.bf16.mxu0 0
        %1913 = vmatpush2.bf16.msra.mxu0 0
        %1914 = vmatprep.subr.bf16.mxu0 0
        %1915 = vmatpush2.bf16.msra.mxu0 0
        %1916 = vmatprep.subr.bf16.mxu0 0
        %1917 = vmatpush2.bf16.msra.mxu0 0
        %1918 = vmatprep.subr.bf16.mxu0 0
        %1919 = vmatpush2.bf16.msra.mxu0 0
        %1920 = vmatprep.subr.bf16.mxu0 0
        %1921 = vmatpush2.bf16.msra.mxu0 0
        %1922 = vmatprep.subr.bf16.mxu0 0
        %1923 = vmatpush2.bf16.msra.mxu0 0
        %1924 = vmatprep.subr.bf16.mxu0 0
        %1925 = vmatpush2.bf16.msra.mxu0 0
        %1926 = vmatprep.mubr.bf16.mxu0 0
        %1927 = vmatmul.mubr.bf16.gmra.mxu0 %v1889
        %v1928 = vpop.f32.mrf.mxu0
        %v1929 = vadd.f32 0.0, %v1928
        %v1930 = vpop.f32.mrf.mxu0
        %v1931 = vpop.f32.mrf.mxu0
        %v1932 = vpop.f32.mrf.mxu0
        %1933 = vdwg.mxu0
        %v1934 = vrcp.pop %v1883
        %v1935 = vmul.f32 %v1929, %v1934
        %1936 = vrot.lane.b32.xlu0 %v1561, 64
        %v1937 = vpop.permute.xlu0 %1936
        %1938 = vrot.lane.b32.xlu0 %v1701, 64
        %v1939 = vpop.permute.xlu0 %1938
        %v1941 = vsel %vm881, %v1937, 0
        %v1944 = vsel %vm881, %v1939, 0
        %1946 = vmatprep.subr.bf16.mxu0 0
        %1947 = vmatpush1.bf16.xpose.msra.mxu0 0
        %1948 = vmatprep.subr.bf16.mxu0 0
        %1949 = vmatpush1.bf16.xpose.msra.mxu0 0
        %1950 = vmatprep.subr.bf16.mxu0 0
        %1951 = vmatpush1.bf16.xpose.msra.mxu0 0
        %1952 = vmatprep.subr.bf16.mxu0 0
        %1953 = vmatpush1.bf16.xpose.msra.mxu0 0
        %1954 = vmatprep.subr.bf16.mxu0 0
        %1955 = vmatpush1.bf16.xpose.msra.mxu0 0
        %1956 = vmatprep.subr.bf16.mxu0 0
        %1957 = vmatpush1.bf16.xpose.msra.mxu0 0
        %1958 = vmatprep.subr.bf16.mxu0 0
        %1959 = vmatpush1.bf16.xpose.msra.mxu0 0
        %1960 = vmatprep.subr.bf16.mxu0 0
        %1961 = vmatpush1.bf16.xpose.msra.mxu0 %v1944
        %1962 = vmatprep.subr.bf16.mxu0 0
        %1963 = vmatpush2.bf16.xpose.msra.mxu0 0
        %1964 = vmatprep.subr.bf16.mxu0 0
        %1965 = vmatpush2.bf16.xpose.msra.mxu0 0
        %1966 = vmatprep.subr.bf16.mxu0 0
        %1967 = vmatpush2.bf16.xpose.msra.mxu0 0
        %1968 = vmatprep.subr.bf16.mxu0 0
        %1969 = vmatpush2.bf16.xpose.msra.mxu0 0
        %1970 = vmatprep.subr.bf16.mxu0 0
        %1971 = vmatpush2.bf16.xpose.msra.mxu0 0
        %1972 = vmatprep.subr.bf16.mxu0 0
        %1973 = vmatpush2.bf16.xpose.msra.mxu0 0
        %1974 = vmatprep.subr.bf16.mxu0 0
        %1975 = vmatpush2.bf16.xpose.msra.mxu0 0
        %1976 = vmatprep.subr.bf16.mxu0 0
        %1977 = vmatpush2.bf16.xpose.msra.mxu0 0
        %1978 = vmatprep.mubr.bf16.mxu0 0
        %1979 = vmatmul.mubr.bf16.gmra.mxu0 %v1941
        %v1980 = vpop.f32.mrf.mxu0
        %v1981 = vadd.f32 %v590, %v1980
        %v1982 = vpop.f32.mrf.mxu0
        %v1983 = vpop.f32.mrf.mxu0
        %v1984 = vpop.f32.mrf.mxu0
        %1985 = vdwg.mxu0
        %v1986 = vsel %vm928, %v1981, -inf
        %1987 = vmax.xlane.f32.xlu0 %v1986
        %v1988 = vpop.xlane.xlu0 %1987
        %v1989 = vsub.f32 %v1981, %v1988
        %v1990 = vmul.f32 %v1989, 1.442695
        %v1991 = vpow.pop %v1990
        %v1992 = vsel %vm928, %v1991, 0.0
        %1993 = vadd.xlane.f32.xlu0 %v1992
        %v1994 = vpop.xlane.xlu0 %1993
        %v1995 = vpack.c.bf16 %v1991, %v1991
        %1996 = vrot.lane.b32.xlu0 %v1702, 64
        %v1997 = vpop.permute.xlu0 %1996
        %v1999 = vsel %vm928, %v1995, 0
        %v2002 = vsel %vm942, %v1997, 0
        %2004 = vmatprep.subr.bf16.mxu0 0
        %2005 = vmatpush1.bf16.msra.mxu0 0
        %2006 = vmatprep.subr.bf16.mxu0 0
        %2007 = vmatpush1.bf16.msra.mxu0 0
        %2008 = vmatprep.subr.bf16.mxu0 0
        %2009 = vmatpush1.bf16.msra.mxu0 0
        %2010 = vmatprep.subr.bf16.mxu0 0
        %2011 = vmatpush1.bf16.msra.mxu0 0
        %2012 = vmatprep.subr.bf16.mxu0 0
        %2013 = vmatpush1.bf16.msra.mxu0 0
        %2014 = vmatprep.subr.bf16.mxu0 0
        %2015 = vmatpush1.bf16.msra.mxu0 0
        %2016 = vmatprep.subr.bf16.mxu0 0
        %2017 = vmatpush1.bf16.msra.mxu0 0
        %2018 = vmatprep.subr.bf16.mxu0 0
        %2019 = vmatpush1.bf16.msra.mxu0 %v2002
        %2020 = vmatprep.subr.bf16.mxu0 0
        %2021 = vmatpush2.bf16.msra.mxu0 0
        %2022 = vmatprep.subr.bf16.mxu0 0
        %2023 = vmatpush2.bf16.msra.mxu0 0
        %2024 = vmatprep.subr.bf16.mxu0 0
        %2025 = vmatpush2.bf16.msra.mxu0 0
        %2026 = vmatprep.subr.bf16.mxu0 0
        %2027 = vmatpush2.bf16.msra.mxu0 0
        %2028 = vmatprep.subr.bf16.mxu0 0
        %2029 = vmatpush2.bf16.msra.mxu0 0
        %2030 = vmatprep.subr.bf16.mxu0 0
        %2031 = vmatpush2.bf16.msra.mxu0 0
        %2032 = vmatprep.subr.bf16.mxu0 0
        %2033 = vmatpush2.bf16.msra.mxu0 0
        %2034 = vmatprep.subr.bf16.mxu0 0
        %2035 = vmatpush2.bf16.msra.mxu0 0
        %2036 = vmatprep.mubr.bf16.mxu0 0
        %2037 = vmatmul.mubr.bf16.gmra.mxu0 %v1999
        %v2038 = vpop.f32.mrf.mxu0
        %v2039 = vadd.f32 0.0, %v2038
        %v2040 = vpop.f32.mrf.mxu0
        %v2041 = vpop.f32.mrf.mxu0
        %v2042 = vpop.f32.mrf.mxu0
        %2043 = vdwg.mxu0
        %v2044 = vrcp.pop %v1994
        %v2045 = vmul.f32 %v2039, %v2044
        %2046 = vrot.lane.b32.xlu0 %v1561, 32
        %v2047 = vpop.permute.xlu0 %2046
        %2048 = vrot.lane.b32.xlu0 %v1701, 32
        %v2049 = vpop.permute.xlu0 %2048
        %v2051 = vsel %vm881, %v2047, 0
        %v2054 = vsel %vm881, %v2049, 0
        %2056 = vmatprep.subr.bf16.mxu0 0
        %2057 = vmatpush1.bf16.xpose.msra.mxu0 0
        %2058 = vmatprep.subr.bf16.mxu0 0
        %2059 = vmatpush1.bf16.xpose.msra.mxu0 0
        %2060 = vmatprep.subr.bf16.mxu0 0
        %2061 = vmatpush1.bf16.xpose.msra.mxu0 0
        %2062 = vmatprep.subr.bf16.mxu0 0
        %2063 = vmatpush1.bf16.xpose.msra.mxu0 0
        %2064 = vmatprep.subr.bf16.mxu0 0
        %2065 = vmatpush1.bf16.xpose.msra.mxu0 0
        %2066 = vmatprep.subr.bf16.mxu0 0
        %2067 = vmatpush1.bf16.xpose.msra.mxu0 0
        %2068 = vmatprep.subr.bf16.mxu0 0
        %2069 = vmatpush1.bf16.xpose.msra.mxu0 0
        %2070 = vmatprep.subr.bf16.mxu0 0
        %2071 = vmatpush1.bf16.xpose.msra.mxu0 %v2054
        %2072 = vmatprep.subr.bf16.mxu0 0
        %2073 = vmatpush2.bf16.xpose.msra.mxu0 0
        %2074 = vmatprep.subr.bf16.mxu0 0
        %2075 = vmatpush2.bf16.xpose.msra.mxu0 0
        %2076 = vmatprep.subr.bf16.mxu0 0
        %2077 = vmatpush2.bf16.xpose.msra.mxu0 0
        %2078 = vmatprep.subr.bf16.mxu0 0
        %2079 = vmatpush2.bf16.xpose.msra.mxu0 0
        %2080 = vmatprep.subr.bf16.mxu0 0
        %2081 = vmatpush2.bf16.xpose.msra.mxu0 0
        %2082 = vmatprep.subr.bf16.mxu0 0
        %2083 = vmatpush2.bf16.xpose.msra.mxu0 0
        %2084 = vmatprep.subr.bf16.mxu0 0
        %2085 = vmatpush2.bf16.xpose.msra.mxu0 0
        %2086 = vmatprep.subr.bf16.mxu0 0
        %2087 = vmatpush2.bf16.xpose.msra.mxu0 0
        %2088 = vmatprep.mubr.bf16.mxu0 0
        %2089 = vmatmul.mubr.bf16.gmra.mxu0 %v2051
        %v2090 = vpop.f32.mrf.mxu0
        %v2091 = vadd.f32 %v590, %v2090
        %v2092 = vpop.f32.mrf.mxu0
        %v2093 = vpop.f32.mrf.mxu0
        %v2094 = vpop.f32.mrf.mxu0
        %2095 = vdwg.mxu0
        %v2096 = vsel %vm928, %v2091, -inf
        %2097 = vmax.xlane.f32.xlu0 %v2096
        %v2098 = vpop.xlane.xlu0 %2097
        %v2099 = vsub.f32 %v2091, %v2098
        %v2100 = vmul.f32 %v2099, 1.442695
        %v2101 = vpow.pop %v2100
        %v2102 = vsel %vm928, %v2101, 0.0
        %2103 = vadd.xlane.f32.xlu0 %v2102
        %v2104 = vpop.xlane.xlu0 %2103
        %v2105 = vpack.c.bf16 %v2101, %v2101
        %2106 = vrot.lane.b32.xlu0 %v1702, 32
        %v2107 = vpop.permute.xlu0 %2106
        %v2109 = vsel %vm928, %v2105, 0
        %v2112 = vsel %vm942, %v2107, 0
        %2114 = vmatprep.subr.bf16.mxu0 0
        %2115 = vmatpush1.bf16.msra.mxu0 0
        %2116 = vmatprep.subr.bf16.mxu0 0
        %2117 = vmatpush1.bf16.msra.mxu0 0
        %2118 = vmatprep.subr.bf16.mxu0 0
        %2119 = vmatpush1.bf16.msra.mxu0 0
        %2120 = vmatprep.subr.bf16.mxu0 0
        %2121 = vmatpush1.bf16.msra.mxu0 0
        %2122 = vmatprep.subr.bf16.mxu0 0
        %2123 = vmatpush1.bf16.msra.mxu0 0
        %2124 = vmatprep.subr.bf16.mxu0 0
        %2125 = vmatpush1.bf16.msra.mxu0 0
        %2126 = vmatprep.subr.bf16.mxu0 0
        %2127 = vmatpush1.bf16.msra.mxu0 0
        %2128 = vmatprep.subr.bf16.mxu0 0
        %2129 = vmatpush1.bf16.msra.mxu0 %v2112
        %2130 = vmatprep.subr.bf16.mxu0 0
        %2131 = vmatpush2.bf16.msra.mxu0 0
        %2132 = vmatprep.subr.bf16.mxu0 0
        %2133 = vmatpush2.bf16.msra.mxu0 0
        %2134 = vmatprep.subr.bf16.mxu0 0
        %2135 = vmatpush2.bf16.msra.mxu0 0
        %2136 = vmatprep.subr.bf16.mxu0 0
        %2137 = vmatpush2.bf16.msra.mxu0 0
        %2138 = vmatprep.subr.bf16.mxu0 0
        %2139 = vmatpush2.bf16.msra.mxu0 0
        %2140 = vmatprep.subr.bf16.mxu0 0
        %2141 = vmatpush2.bf16.msra.mxu0 0
        %2142 = vmatprep.subr.bf16.mxu0 0
        %2143 = vmatpush2.bf16.msra.mxu0 0
        %2144 = vmatprep.subr.bf16.mxu0 0
        %2145 = vmatpush2.bf16.msra.mxu0 0
        %2146 = vmatprep.mubr.bf16.mxu0 0
        %2147 = vmatmul.mubr.bf16.gmra.mxu0 %v2109
        %v2148 = vpop.f32.mrf.mxu0
        %v2149 = vadd.f32 0.0, %v2148
        %v2150 = vpop.f32.mrf.mxu0
        %v2151 = vpop.f32.mrf.mxu0
        %v2152 = vpop.f32.mrf.mxu0
        %2153 = vdwg.mxu0
        %v2154 = vrcp.pop %v2104
        %v2155 = vmul.f32 %v2149, %v2154
        %2157 = vrot.lane.b32.xlu0 %v1935, 32
        %v2158 = vpop.permute.xlu0 %2157
        %2161 = vrot.lane.b32.xlu0 %v2045, 64
        %v2162 = vpop.permute.xlu0 %2161
        %2165 = vrot.lane.b32.xlu0 %v2155, 96
        %v2166 = vpop.permute.xlu0 %2165
        %v2168 = vsel %vm881, %v1822, %v2158
        %v2169 = vsel %vm1334, %v2168, %v2162
        %v2170 = vsel %vm1336, %v2169, %v2166
        %v2171 = vpack.c.bf16 %v2170, %v2170
        %v2188 = vunpack.c.l.b16 %v1703
        %v2189 = vunpack.c.l.b16 %v1704
        %v2190 = vunpack.c.l.b16 %v1705
        %v2191 = vunpack.c.l.b16 %v1706
        %v2192 = vunpack.c.l.b16 %v1707
        %v2193 = vunpack.c.l.b16 %v1708
        %v2194 = vunpack.c.l.b16 %v1709
        %v2195 = vunpack.c.l.b16 %v1710
        %v2196 = vunpack.c.l.b16 %v1711
        %v2197 = vunpack.c.l.b16 %v1712
        %v2198 = vunpack.c.l.b16 %v1713
        %v2199 = vunpack.c.l.b16 %v1714
        %v2200 = vunpack.c.l.b16 %v1715
        %v2201 = vunpack.c.l.b16 %v1716
        %v2202 = vunpack.c.l.b16 %v1717
        %v2203 = vunpack.c.l.b16 %v1718
        %v2204 = vpack.c.b16 %v2189, %v2188
        %v2205 = vpack.c.b16 %v2191, %v2190
        %v2206 = vpack.c.b16 %v2193, %v2192
        %v2207 = vpack.c.b16 %v2195, %v2194
        %v2208 = vpack.c.b16 %v2197, %v2196
        %v2209 = vpack.c.b16 %v2199, %v2198
        %v2210 = vpack.c.b16 %v2201, %v2200
        %v2211 = vpack.c.b16 %v2203, %v2202
        %2220 = vmatprep.subr.bf16.mxu0 0
        %2221 = vmatpush1.bf16.msra.mxu0 %v2211
        %2222 = vmatprep.subr.bf16.mxu0 0
        %2223 = vmatpush1.bf16.msra.mxu0 %v2210
        %2224 = vmatprep.subr.bf16.mxu0 0
        %2225 = vmatpush1.bf16.msra.mxu0 %v2209
        %2226 = vmatprep.subr.bf16.mxu0 0
        %2227 = vmatpush1.bf16.msra.mxu0 %v2208
        %2228 = vmatprep.subr.bf16.mxu0 0
        %2229 = vmatpush1.bf16.msra.mxu0 %v2207
        %2230 = vmatprep.subr.bf16.mxu0 0
        %2231 = vmatpush1.bf16.msra.mxu0 %v2206
        %2232 = vmatprep.subr.bf16.mxu0 0
        %2233 = vmatpush1.bf16.msra.mxu0 %v2205
        %2234 = vmatprep.subr.bf16.mxu0 0
        %2235 = vmatpush1.bf16.msra.mxu0 %v2204
        %2236 = vmatprep.subr.bf16.mxu0 0
        %2237 = vmatpush2.bf16.msra.mxu0 0
        %2238 = vmatprep.subr.bf16.mxu0 0
        %2239 = vmatpush2.bf16.msra.mxu0 0
        %2240 = vmatprep.subr.bf16.mxu0 0
        %2241 = vmatpush2.bf16.msra.mxu0 0
        %2242 = vmatprep.subr.bf16.mxu0 0
        %2243 = vmatpush2.bf16.msra.mxu0 0
        %2244 = vmatprep.subr.bf16.mxu0 0
        %2245 = vmatpush2.bf16.msra.mxu0 0
        %2246 = vmatprep.subr.bf16.mxu0 0
        %2247 = vmatpush2.bf16.msra.mxu0 0
        %2248 = vmatprep.subr.bf16.mxu0 0
        %2249 = vmatpush2.bf16.msra.mxu0 0
        %2250 = vmatprep.subr.bf16.mxu0 0
        %2251 = vmatpush2.bf16.msra.mxu0 0
        %2252 = vmatprep.mubr.bf16.mxu0 0
        %2253 = vmatmul.mubr.bf16.gmra.mxu0 %v2171
        %v2254 = vpop.f32.mrf.mxu0
        %v2255 = vadd.f32 0.0, %v2254
        %v2256 = vpop.f32.mrf.mxu0
        %v2257 = vpop.f32.mrf.mxu0
        %v2258 = vpop.f32.mrf.mxu0
        %2259 = vdwg.mxu0
        %v2260 = vadd.f32 %v1427, %v2255
        %v2261 = vld [vmem:[%s12] sm:$0x1]
        %v2262 = vld [vmem:[%s13] sm:$0x1]
        %2263 = vadd.xlane.f32.xlu0 %v2260
        %v2264 = vpop.xlane.xlu0 %2263
        %v2265 = vmul.f32 %v2264, %v595
        %v2266 = vsub.f32 %v2260, %v2265
        %v2267 = vmul.f32 %v2266, %v2266
        %2268 = vadd.xlane.f32.xlu0 %v2267
        %v2269 = vpop.xlane.xlu0 %2268
        %v2270 = vmul.f32 %v2269, %v595
        %v2271 = vadd.f32 %v2270, 1e-05
        %v2272 = vrsqrt.pop %v2271
        %v2273 = vmul.f32 %v2266, %v2272
        %v2275 = vlaneseq
        %v2276 = vshrl.u32 %v2275, 7
        %v2277 = vsub.s32 0, %v2276
        %v2278 = vrot.slane %v2261, %v2277
        %v2280 = vmul.f32 %v2273, %v2278
        %v2282 = vlaneseq
        %v2283 = vshrl.u32 %v2282, 7
        %v2284 = vsub.s32 0, %v2283
        %v2285 = vrot.slane %v2262, %v2284
        %v2287 = vadd.f32 %v2280, %v2285
        %v2288 = vpack.c.bf16 %v2287, %v2287
        %v2289 = vld [vmem:[%s14] sm:$0xff]
        %v2290 = vld [vmem:[%s14 + $0x8] sm:$0xff]
        %v2291 = vld [vmem:[%s14 + $0x10] sm:$0xff]
        %v2292 = vld [vmem:[%s14 + $0x18] sm:$0xff]
        %v2293 = vld [vmem:[%s14 + $0x20] sm:$0xff]
        %v2294 = vld [vmem:[%s14 + $0x28] sm:$0xff]
        %v2295 = vld [vmem:[%s14 + $0x30] sm:$0xff]
        %v2296 = vld [vmem:[%s14 + $0x38] sm:$0xff]
        %v2297 = vld [vmem:[%s14 + $0x40] sm:$0xff]
        %v2298 = vld [vmem:[%s14 + $0x48] sm:$0xff]
        %v2299 = vld [vmem:[%s14 + $0x50] sm:$0xff]
        %v2300 = vld [vmem:[%s14 + $0x58] sm:$0xff]
        %v2301 = vld [vmem:[%s14 + $0x60] sm:$0xff]
        %v2302 = vld [vmem:[%s14 + $0x68] sm:$0xff]
        %v2303 = vld [vmem:[%s14 + $0x70] sm:$0xff]
        %v2304 = vld [vmem:[%s14 + $0x78] sm:$0xff]
        %v2305 = vld [vmem:[%s15] sm:$0x3]
        %v2307 = vlaneseq
        %v2308 = vshrl.u32 %v2307, 7
        %v2309 = vsub.s32 0, %v2308
        %v2310 = vrot.slane %v2305, %v2309
        %v2311 = vlaneseq
        %v2312 = vshrl.u32 %v2311, 7
        %v2313 = vsub.s32 1, %v2312
        %v2314 = vrot.slane %v2305, %v2313
        %v2333 = vunpack.c.l.b16 %v2289
        %v2334 = vunpack.c.h.b16 %v2289
        %v2335 = vunpack.c.l.b16 %v2290
        %v2336 = vunpack.c.h.b16 %v2290
        %v2337 = vunpack.c.l.b16 %v2291
        %v2338 = vunpack.c.h.b16 %v2291
        %v2339 = vunpack.c.l.b16 %v2292
        %v2340 = vunpack.c.h.b16 %v2292
        %v2341 = vunpack.c.l.b16 %v2293
        %v2342 = vunpack.c.h.b16 %v2293
        %v2343 = vunpack.c.l.b16 %v2294
        %v2344 = vunpack.c.h.b16 %v2294
        %v2345 = vunpack.c.l.b16 %v2295
        %v2346 = vunpack.c.h.b16 %v2295
        %v2347 = vunpack.c.l.b16 %v2296
        %v2348 = vunpack.c.h.b16 %v2296
        %v2349 = vunpack.c.l.b16 %v2297
        %v2350 = vunpack.c.h.b16 %v2297
        %v2351 = vunpack.c.l.b16 %v2298
        %v2352 = vunpack.c.h.b16 %v2298
        %v2353 = vunpack.c.l.b16 %v2299
        %v2354 = vunpack.c.h.b16 %v2299
        %v2355 = vunpack.c.l.b16 %v2300
        %v2356 = vunpack.c.h.b16 %v2300
        %v2357 = vunpack.c.l.b16 %v2301
        %v2358 = vunpack.c.h.b16 %v2301
        %v2359 = vunpack.c.l.b16 %v2302
        %v2360 = vunpack.c.h.b16 %v2302
        %v2361 = vunpack.c.l.b16 %v2303
        %v2362 = vunpack.c.h.b16 %v2303
        %v2363 = vunpack.c.l.b16 %v2304
        %v2364 = vunpack.c.h.b16 %v2304
        %v2365 = vpack.c.b16 %v2335, %v2333
        %v2366 = vpack.c.b16 %v2336, %v2334
        %v2367 = vpack.c.b16 %v2339, %v2337
        %v2368 = vpack.c.b16 %v2340, %v2338
        %v2369 = vpack.c.b16 %v2343, %v2341
        %v2370 = vpack.c.b16 %v2344, %v2342
        %v2371 = vpack.c.b16 %v2347, %v2345
        %v2372 = vpack.c.b16 %v2348, %v2346
        %v2373 = vpack.c.b16 %v2351, %v2349
        %v2374 = vpack.c.b16 %v2352, %v2350
        %v2375 = vpack.c.b16 %v2355, %v2353
        %v2376 = vpack.c.b16 %v2356, %v2354
        %v2377 = vpack.c.b16 %v2359, %v2357
        %v2378 = vpack.c.b16 %v2360, %v2358
        %v2379 = vpack.c.b16 %v2363, %v2361
        %v2380 = vpack.c.b16 %v2364, %v2362
        %2397 = vmatprep.subr.bf16.mxu0 %v2380
        %2398 = vmatpush1.bf16.msra.mxu0 %v2379
        %2399 = vmatprep.subr.bf16.mxu0 %v2378
        %2400 = vmatpush1.bf16.msra.mxu0 %v2377
        %2401 = vmatprep.subr.bf16.mxu0 %v2376
        %2402 = vmatpush1.bf16.msra.mxu0 %v2375
        %2403 = vmatprep.subr.bf16.mxu0 %v2374
        %2404 = vmatpush1.bf16.msra.mxu0 %v2373
        %2405 = vmatprep.subr.bf16.mxu0 %v2372
        %2406 = vmatpush1.bf16.msra.mxu0 %v2371
        %2407 = vmatprep.subr.bf16.mxu0 %v2370
        %2408 = vmatpush1.bf16.msra.mxu0 %v2369
        %2409 = vmatprep.subr.bf16.mxu0 %v2368
        %2410 = vmatpush1.bf16.msra.mxu0 %v2367
        %2411 = vmatprep.subr.bf16.mxu0 %v2366
        %2412 = vmatpush1.bf16.msra.mxu0 %v2365
        %2413 = vmatprep.subr.bf16.mxu0 0
        %2414 = vmatpush2.bf16.msra.mxu0 0
        %2415 = vmatprep.subr.bf16.mxu0 0
        %2416 = vmatpush2.bf16.msra.mxu0 0
        %2417 = vmatprep.subr.bf16.mxu0 0
        %2418 = vmatpush2.bf16.msra.mxu0 0
        %2419 = vmatprep.subr.bf16.mxu0 0
        %2420 = vmatpush2.bf16.msra.mxu0 0
        %2421 = vmatprep.subr.bf16.mxu0 0
        %2422 = vmatpush2.bf16.msra.mxu0 0
        %2423 = vmatprep.subr.bf16.mxu0 0
        %2424 = vmatpush2.bf16.msra.mxu0 0
        %2425 = vmatprep.subr.bf16.mxu0 0
        %2426 = vmatpush2.bf16.msra.mxu0 0
        %2427 = vmatprep.subr.bf16.mxu0 0
        %2428 = vmatpush2.bf16.msra.mxu0 0
        %2429 = vmatprep.mubr.bf16.mxu0 0
        %2430 = vmatmul.mubr.bf16.gmra.mxu0 %v2288
        %v2431 = vpop.f32.mrf.mxu0
        %v2432 = vadd.f32 %v2310, %v2431
        %v2433 = vpop.f32.mrf.mxu0
        %v2434 = vadd.f32 %v2314, %v2433
        %v2435 = vpop.f32.mrf.mxu0
        %v2436 = vpop.f32.mrf.mxu0
        %2437 = vdwg.mxu0
        %v2438 = vmax.f32 %v2432, 0.0
        %v2439 = vmax.f32 %v2434, 0.0
        %v2440 = vpack.c.bf16 %v2438, %v2438
        %v2441 = vpack.c.bf16 %v2439, %v2439
        %v2442 = vld [vmem:[%s16] sm:$0xf]
        %v2443 = vld [vmem:[%s16 + $0x4] sm:$0xf]
        %v2444 = vld [vmem:[%s16 + $0x8] sm:$0xf]
        %v2445 = vld [vmem:[%s16 + $0xc] sm:$0xf]
        %v2446 = vld [vmem:[%s16 + $0x10] sm:$0xf]
        %v2447 = vld [vmem:[%s16 + $0x14] sm:$0xf]
        %v2448 = vld [vmem:[%s16 + $0x18] sm:$0xf]
        %v2449 = vld [vmem:[%s16 + $0x1c] sm:$0xf]
        %v2450 = vld [vmem:[%s16 + $0x20] sm:$0xf]
        %v2451 = vld [vmem:[%s16 + $0x24] sm:$0xf]
        %v2452 = vld [vmem:[%s16 + $0x28] sm:$0xf]
        %v2453 = vld [vmem:[%s16 + $0x2c] sm:$0xf]
        %v2454 = vld [vmem:[%s16 + $0x30] sm:$0xf]
        %v2455 = vld [vmem:[%s16 + $0x34] sm:$0xf]
        %v2456 = vld [vmem:[%s16 + $0x38] sm:$0xf]
        %v2457 = vld [vmem:[%s16 + $0x3c] sm:$0xf]
        %v2458 = vld [vmem:[%s16 + $0x40] sm:$0xf]
        %v2459 = vld [vmem:[%s16 + $0x44] sm:$0xf]
        %v2460 = vld [vmem:[%s16 + $0x48] sm:$0xf]
        %v2461 = vld [vmem:[%s16 + $0x4c] sm:$0xf]
        %v2462 = vld [vmem:[%s16 + $0x50] sm:$0xf]
        %v2463 = vld [vmem:[%s16 + $0x54] sm:$0xf]
        %v2464 = vld [vmem:[%s16 + $0x58] sm:$0xf]
        %v2465 = vld [vmem:[%s16 + $0x5c] sm:$0xf]
        %v2466 = vld [vmem:[%s16 + $0x60] sm:$0xf]
        %v2467 = vld [vmem:[%s16 + $0x64] sm:$0xf]
        %v2468 = vld [vmem:[%s16 + $0x68] sm:$0xf]
        %v2469 = vld [vmem:[%s16 + $0x6c] sm:$0xf]
        %v2470 = vld [vmem:[%s16 + $0x70] sm:$0xf]
        %v2471 = vld [vmem:[%s16 + $0x74] sm:$0xf]
        %v2472 = vld [vmem:[%s16 + $0x78] sm:$0xf]
        %v2473 = vld [vmem:[%s16 + $0x7c] sm:$0xf]
        %v2474 = vld [vmem:[%s17] sm:$0x1]
        %v2476 = vlaneseq
        %v2477 = vshrl.u32 %v2476, 7
        %v2478 = vsub.s32 0, %v2477
        %v2479 = vrot.slane %v2474, %v2478
        %v2513 = vunpack.c.l.b16 %v2442
        %v2514 = vunpack.c.l.b16 %v2443
        %v2515 = vunpack.c.l.b16 %v2444
        %v2516 = vunpack.c.l.b16 %v2445
        %v2517 = vunpack.c.l.b16 %v2446
        %v2518 = vunpack.c.l.b16 %v2447
        %v2519 = vunpack.c.l.b16 %v2448
        %v2520 = vunpack.c.l.b16 %v2449
        %v2521 = vunpack.c.l.b16 %v2450
        %v2522 = vunpack.c.l.b16 %v2451
        %v2523 = vunpack.c.l.b16 %v2452
        %v2524 = vunpack.c.l.b16 %v2453
        %v2525 = vunpack.c.l.b16 %v2454
        %v2526 = vunpack.c.l.b16 %v2455
        %v2527 = vunpack.c.l.b16 %v2456
        %v2528 = vunpack.c.l.b16 %v2457
        %v2529 = vunpack.c.l.b16 %v2458
        %v2530 = vunpack.c.l.b16 %v2459
        %v2531 = vunpack.c.l.b16 %v2460
        %v2532 = vunpack.c.l.b16 %v2461
        %v2533 = vunpack.c.l.b16 %v2462
        %v2534 = vunpack.c.l.b16 %v2463
        %v2535 = vunpack.c.l.b16 %v2464
        %v2536 = vunpack.c.l.b16 %v2465
        %v2537 = vunpack.c.l.b16 %v2466
        %v2538 = vunpack.c.l.b16 %v2467
        %v2539 = vunpack.c.l.b16 %v2468
        %v2540 = vunpack.c.l.b16 %v2469
        %v2541 = vunpack.c.l.b16 %v2470
        %v2542 = vunpack.c.l.b16 %v2471
        %v2543 = vunpack.c.l.b16 %v2472
        %v2544 = vunpack.c.l.b16 %v2473
        %v2545 = vpack.c.b16 %v2514, %v2513
        %v2546 = vpack.c.b16 %v2516, %v2515
        %v2547 = vpack.c.b16 %v2518, %v2517
        %v2548 = vpack.c.b16 %v2520, %v2519
        %v2549 = vpack.c.b16 %v2522, %v2521
        %v2550 = vpack.c.b16 %v2524, %v2523
        %v2551 = vpack.c.b16 %v2526, %v2525
        %v2552 = vpack.c.b16 %v2528, %v2527
        %v2553 = vpack.c.b16 %v2530, %v2529
        %v2554 = vpack.c.b16 %v2532, %v2531
        %v2555 = vpack.c.b16 %v2534, %v2533
        %v2556 = vpack.c.b16 %v2536, %v2535
        %v2557 = vpack.c.b16 %v2538, %v2537
        %v2558 = vpack.c.b16 %v2540, %v2539
        %v2559 = vpack.c.b16 %v2542, %v2541
        %v2560 = vpack.c.b16 %v2544, %v2543
        %2577 = vmatprep.subr.bf16.mxu0 0
        %2578 = vmatpush1.bf16.msra.mxu0 %v2552
        %2579 = vmatprep.subr.bf16.mxu0 0
        %2580 = vmatpush1.bf16.msra.mxu0 %v2551
        %2581 = vmatprep.subr.bf16.mxu0 0
        %2582 = vmatpush1.bf16.msra.mxu0 %v2550
        %2583 = vmatprep.subr.bf16.mxu0 0
        %2584 = vmatpush1.bf16.msra.mxu0 %v2549
        %2585 = vmatprep.subr.bf16.mxu0 0
        %2586 = vmatpush1.bf16.msra.mxu0 %v2548
        %2587 = vmatprep.subr.bf16.mxu0 0
        %2588 = vmatpush1.bf16.msra.mxu0 %v2547
        %2589 = vmatprep.subr.bf16.mxu0 0
        %2590 = vmatpush1.bf16.msra.mxu0 %v2546
        %2591 = vmatprep.subr.bf16.mxu0 0
        %2592 = vmatpush1.bf16.msra.mxu0 %v2545
        %2593 = vmatprep.subr.bf16.mxu0 0
        %2594 = vmatpush2.bf16.msra.mxu0 %v2560
        %2595 = vmatprep.subr.bf16.mxu0 0
        %2596 = vmatpush2.bf16.msra.mxu0 %v2559
        %2597 = vmatprep.subr.bf16.mxu0 0
        %2598 = vmatpush2.bf16.msra.mxu0 %v2558
        %2599 = vmatprep.subr.bf16.mxu0 0
        %2600 = vmatpush2.bf16.msra.mxu0 %v2557
        %2601 = vmatprep.subr.bf16.mxu0 0
        %2602 = vmatpush2.bf16.msra.mxu0 %v2556
        %2603 = vmatprep.subr.bf16.mxu0 0
        %2604 = vmatpush2.bf16.msra.mxu0 %v2555
        %2605 = vmatprep.subr.bf16.mxu0 0
        %2606 = vmatpush2.bf16.msra.mxu0 %v2554
        %2607 = vmatprep.subr.bf16.mxu0 0
        %2608 = vmatpush2.bf16.msra.mxu0 %v2553
        %2609 = vmatprep.mubr.bf16.mxu0 %v2441
        %2610 = vmatmul.mubr.bf16.gmra.mxu0 %v2440
        %v2611 = vpop.f32.mrf.mxu0
        %v2612 = vadd.f32 %v2479, %v2611
        %v2613 = vpop.f32.mrf.mxu0
        %v2614 = vpop.f32.mrf.mxu0
        %v2615 = vpop.f32.mrf.mxu0
        %2616 = vdwg.mxu0
        %v2617 = vadd.f32 %v2260, %v2612
        %2618 = vst [vmem:[%s579] sm:$0xff] %v2617
        %s2619 = sand.u32 %s428, 1
        %s2620 = scalar_lea.sflag [#allocation3], %s2619
        %s2621 = sand.u32 %s428, 1
        %s2622 = smul.addr %s2621, 8
        %s2623 = scalar_lea.vmem [#allocation2], %s2622
        // Predicated region
        $region93: #{decoder_block.1} parent=91 // pred_check
          %p2624 = pneg %p438
        $region94: #{decoder_block.1} parent=91 // pred_check_branch
          %2626 = sbr.rel (%p2624) target = $region96
        $region95: #{decoder_block.1} parent=91 // pred_region
          %s2628 = ssub.s32 128, 128
          %2629 = vsyncadd %s2620, %s2628
          %s2630 = smul.addr %s32, 128
          %s2631 = scalar_lea.hbm %s18, %s2630
          %s2633 = sshll.u32 %s2623, 4
          %s2634 = int_to_ptr.vmem [resolvable:$true] %s2633
          %2636 = dma.vmem_to_hbm [thread:$0]  %s2634, 128, %s2631, %s2620
        $region96: #{decoder_block.1} parent=91 // pred_fallthru
          _
      $region92: #{decoder_block.1} parent=5 // pred_fallthru
        _
      %p2637 = scmp.le.s32.totalorder 2, %s27
      // Predicated region
      $region97: #{decoder_block.1} parent=5 // pred_check
        %p2638 = pneg %p2637
      $region98: #{decoder_block.1} parent=5 // pred_check_branch
        %2640 = sbr.rel (%p2638) target = $region100
      $region99: #{decoder_block.1} parent=5 // pred_region
        %s2641 = ssub.s32 %s27, 2
        // Predicated region
        $region101: #{decoder_block.1} parent=99 // pred_check
          %p2642 = pneg %p444
        $region102: #{decoder_block.1} parent=99 // pred_check_branch
          %2644 = sbr.rel (%p2642) target = $region104
        $region103: #{decoder_block.1} parent=99 // pred_region
          %s2645 = sand.u32 %s429, 1
          %s2646 = scalar_lea.sflag [#allocation3], %s2645
          %s2647 = sand.u32 %s429, 1
          %s2648 = smul.addr %s2647, 8
          %s2649 = scalar_lea.vmem [#allocation2], %s2648
          %2650 = dma.done %s2646, 128
        $region104: #{decoder_block.1} parent=99 // pred_fallthru
          _
      $region100: #{decoder_block.1} parent=5 // pred_fallthru
        _
    $region6: #{decoder_block.1} parent=1 // loop_footer
      %s31 = sadd.s32 1, %s27
    $region7: #{decoder_block.1} parent=1 // loop_footer_branch
      %26 = sbr.rel target = $region3
    $region8: #{decoder_block.1} parent=1 // loop_exit
      _
    %2651 = vsyncpa [#allocation3], 1
    %s2652 = scalar_lea.sflag [#allocation3], 1
    %2653 = vsyncpa %s2652, 1

</llo_original>
